<compile_context>
chip_gen: v7x
topology: tpu7x:2x2x1
jax: 0.10.0
libtpu: 0.0.40
codegen_flags: <defaults>
</compile_context>

<pallas_src>
import functools

import jax
import jax.numpy as jnp
from jax import lax
from jax.experimental import pallas as pl
from jax.experimental.pallas import tpu as pltpu


_INV_SQRT2 = 0.7071067811865476


def _gelu_exact(x):
    # PyTorch nn.GELU() default = exact erf formulation.
    return 0.5 * x * (1.0 + lax.erf(x * _INV_SQRT2))


# ----------------------------- fused kernel ----------------------------------

def _fused_forward_kernel(ids_ref, emb_ref,
                          w1_ref, b1_ref, w2_ref, b2_ref,
                          wih_ref, whh_ref, bg_ref,
                          h0_ref, c0_ref,
                          dw1_ref, db1_ref, dw2_ref, db2_ref,
                          logits_ref, hn_ref, cn_ref,
                          out_seq_sc,
                          *, batch, seq_len, hidden_dim):
    bt = batch * seq_len
    vocab = emb_ref.shape[0]
    hdim = hidden_dim
    bf16 = jnp.bfloat16

    # ---- embedding gather via one-hot MXU matmul (exact row selection) ------
    ids = ids_ref[...]                                               # (BT, 1) int32
    onehot = (lax.broadcasted_iota(jnp.int32, (bt, vocab), 1) == ids)
    x = jnp.dot(onehot.astype(bf16), emb_ref[...],
                preferred_element_type=jnp.float32)                  # (BT, E)

    # ---- input_layers MLP fused with LSTM input projection ------------------
    # pregates = (GELU(x @ W1 + b1) @ W2 + b2) @ W_ih + (b_ih + b_hh)
    h1 = _gelu_exact(jnp.dot(x.astype(bf16), w1_ref[...],
                             preferred_element_type=jnp.float32) + b1_ref[...])
    feat = jnp.dot(h1.astype(bf16), w2_ref[...],
                   preferred_element_type=jnp.float32) + b2_ref[...]
    pregates = jnp.dot(feat.astype(bf16), wih_ref[...],
                       preferred_element_type=jnp.float32) + bg_ref[...]
    pre_btg = pregates.reshape(batch, seq_len, 4 * hdim)             # batch-major

    # ---- serial LSTM recurrence (gate order permuted to [i, f, o, g]) -------
    h = h0_ref[...]                                                  # (B, H) f32
    c = c0_ref[...]
    for t in range(seq_len):                                         # fully unrolled
        gates = pre_btg[:, t, :] + jnp.dot(h.astype(bf16), whh_ref[...],
                                           preferred_element_type=jnp.float32)
        sig = jax.nn.sigmoid(gates[:, :3 * hdim])                    # i | f | o
        g_g = jnp.tanh(gates[:, 3 * hdim:])
        i_g = sig[:, :hdim]
        f_g = sig[:, hdim:2 * hdim]
        o_g = sig[:, 2 * hdim:3 * hdim]
        c = f_g * c + i_g * g_g
        h = o_g * jnp.tanh(c)
        out_seq_sc[:, t, :] = h
    hn_ref[...] = h
    cn_ref[...] = c

    # ---- decoder MLP on all B*T rows -----------------------------------------
    out_flat = out_seq_sc[...].reshape(bt, hdim)                     # batch-major
    dh = _gelu_exact(jnp.dot(out_flat.astype(bf16), dw1_ref[...],
                             preferred_element_type=jnp.float32) + db1_ref[...])
    logits = jnp.dot(dh.astype(bf16), dw2_ref[...],
                     preferred_element_type=jnp.float32) + db2_ref[...]
    logits_ref[...] = logits.astype(logits_ref.dtype)


# ----------------------------- parameters ------------------------------------

def init_params(key, vocab_size, embedding_dim, hidden_dim):
    ks = jax.random.split(key, 16)

    def uni(k, shape, fan_in):
        bound = 1.0 / jnp.sqrt(float(fan_in))
        return jax.random.uniform(k, shape, jnp.float32, -bound, bound)

    params = {}
    # nn.Embedding default: N(0, 1)
    params["embedding"] = jax.random.normal(
        ks[0], (vocab_size, embedding_dim), jnp.float32)

    # input_layers = Linear(E, H) -> GELU -> Linear(H, H); stored transposed.
    params["in_w1"] = uni(ks[1], (embedding_dim, hidden_dim), embedding_dim)
    params["in_b1"] = uni(ks[2], (hidden_dim,), embedding_dim)
    params["in_w2"] = uni(ks[3], (hidden_dim, hidden_dim), hidden_dim)
    params["in_b2"] = uni(ks[4], (hidden_dim,), hidden_dim)

    # LSTM(hidden_dim -> hidden_dim), 1 layer. Forget-gate slice of BOTH biases
    # is filled with 2.0 (combined forget bias 4.0), matching the module with
    # input_bias=False.
    h4 = 4 * hidden_dim
    w_ih = uni(ks[5], (h4, hidden_dim), hidden_dim)       # (4H, H) like PyTorch
    w_hh = uni(ks[6], (h4, hidden_dim), hidden_dim)
    b_ih = uni(ks[7], (h4,), hidden_dim)
    b_hh = uni(ks[8], (h4,), hidden_dim)
    b_ih = b_ih.at[hidden_dim:2 * hidden_dim].set(2.0)
    b_hh = b_hh.at[hidden_dim:2 * hidden_dim].set(2.0)
    params["lstm_wih"] = w_ih.T                           # (H, 4H), gate order i,f,g,o
    params["lstm_whh"] = w_hh.T                           # (H, 4H)
    params["lstm_b"] = b_ih + b_hh                        # (4H,)

    # decoder = Linear(H, H) -> GELU -> Linear(H, V); stored transposed.
    params["dec_w1"] = uni(ks[9], (hidden_dim, hidden_dim), hidden_dim)
    params["dec_b1"] = uni(ks[10], (hidden_dim,), hidden_dim)
    params["dec_w2"] = uni(ks[11], (hidden_dim, vocab_size), hidden_dim)
    params["dec_b2"] = uni(ks[12], (vocab_size,), hidden_dim)
    return params


# ----------------------------- forward ---------------------------------------

@jax.jit
def lstm_model_beefy_forward(params, x_ids, hidden):
    # TODO(synk): only the default n_layers=1 LSTM stack is implemented.
    h0, c0 = hidden                                       # each (1, B, H)
    B, T = x_ids.shape
    H = params["lstm_whh"].shape[0]
    V = params["dec_w2"].shape[1]
    bf16 = jnp.bfloat16

    def permute_gates(w):
        # PyTorch gate order [i, f, g, o] -> kernel order [i, f, o, g] so the
        # in-kernel sigmoid covers one contiguous 3H slab.
        return jnp.concatenate(
            [w[..., :2 * H], w[..., 3 * H:], w[..., 2 * H:3 * H]], axis=-1)

    ids = x_ids.reshape(B * T, 1).astype(jnp.int32)       # batch-major rows b*T+t

    vmem = pl.BlockSpec(memory_space=pltpu.MemorySpace.VMEM)
    kernel = functools.partial(_fused_forward_kernel,
                               batch=B, seq_len=T, hidden_dim=H)

    logits, h_n, c_n = pl.pallas_call(
        kernel,
        out_shape=(jax.ShapeDtypeStruct((B * T, V), jnp.float32),
                   jax.ShapeDtypeStruct((B, H), jnp.float32),
                   jax.ShapeDtypeStruct((B, H), jnp.float32)),
        in_specs=[vmem] * 15,
        out_specs=(vmem, vmem, vmem),
        scratch_shapes=[pltpu.VMEM((B, T, H), jnp.float32)],
    )(
        ids,
        params["embedding"].astype(bf16),
        params["in_w1"].astype(bf16), params["in_b1"].reshape(1, -1),
        params["in_w2"].astype(bf16), params["in_b2"].reshape(1, -1),
        permute_gates(params["lstm_wih"]).astype(bf16),
        permute_gates(params["lstm_whh"]).astype(bf16),
        permute_gates(params["lstm_b"]).reshape(1, -1),
        h0[0], c0[0],
        params["dec_w1"].astype(bf16), params["dec_b1"].reshape(1, -1),
        params["dec_w2"].astype(bf16), params["dec_b2"].reshape(1, -1),
    )

    decoded = logits.reshape(B, T, V)      # free: rows are already batch-major
    return decoded, (h_n[None], c_n[None])


# ----------------------------- pure-JAX reference -----------------------------

def _ref_forward(params, x_ids, hidden):
    h = hidden[0][0]
    c = hidden[1][0]
    emb = jnp.take(params["embedding"], x_ids, axis=0)
    z = jax.nn.gelu(emb @ params["in_w1"] + params["in_b1"], approximate=False)
    feat = z @ params["in_w2"] + params["in_b2"]
    H = params["lstm_whh"].shape[0]
    outs = []
    for t in range(feat.shape[1]):
        g = feat[:, t] @ params["lstm_wih"] + h @ params["lstm_whh"] + params["lstm_b"]
        i = jax.nn.sigmoid(g[:, :H])
        f = jax.nn.sigmoid(g[:, H:2 * H])
        gg = jnp.tanh(g[:, 2 * H:3 * H])
        o = jax.nn.sigmoid(g[:, 3 * H:])
        c = f * c + i * gg
        h = o * jnp.tanh(c)
        outs.append(h)
    out = jnp.stack(outs, axis=1)
    z = jax.nn.gelu(out @ params["dec_w1"] + params["dec_b1"], approximate=False)
    dec = z @ params["dec_w2"] + params["dec_b2"]
    return dec, (h[None], c[None])


# ----------------------------- main -------------------------------------------

if __name__ == "__main__":
    VOCAB, EMB, HID, LAYERS = 256, 128, 128, 1
    B, T = 2, 8

    key = jax.random.PRNGKey(0)
    pkey, xkey = jax.random.split(key)
    params = init_params(pkey, VOCAB, EMB, HID)

    x_ids = jax.random.randint(xkey, (B, T), 0, VOCAB, dtype=jnp.int32)
    hidden = (jnp.zeros((LAYERS, B, HID), jnp.float32),
              jnp.zeros((LAYERS, B, HID), jnp.float32))

    decoded, (h_n, c_n) = lstm_model_beefy_forward(params, x_ids, hidden)
    jax.block_until_ready((decoded, h_n, c_n))

    ref_dec, (ref_h, ref_c) = _ref_forward(params, x_ids, hidden)
    assert decoded.shape == (B, T, VOCAB)
    assert h_n.shape == (LAYERS, B, HID) and c_n.shape == (LAYERS, B, HID)
    # bf16 MXU inputs with f32 accumulation -> slightly looser tolerance.
    assert jnp.allclose(decoded, ref_dec, rtol=2e-2, atol=2e-2)
    assert jnp.allclose(h_n, ref_h, rtol=2e-2, atol=2e-2)
    assert jnp.allclose(c_n, ref_c, rtol=2e-2, atol=2e-2)

    print("KERNEL_OK")
</pallas_src>

<mosaic_0001>
module attributes {stable_mosaic.version = 11 : i64} {
  func.func @_fused_forward_kernel(%arg0: memref<16x1xi32, #tpu.memory_space<vmem>>, %arg1: memref<256x128xbf16, #tpu.memory_space<vmem>>, %arg2: memref<128x128xbf16, #tpu.memory_space<vmem>>, %arg3: memref<1x128xf32, #tpu.memory_space<vmem>>, %arg4: memref<128x128xbf16, #tpu.memory_space<vmem>>, %arg5: memref<1x128xf32, #tpu.memory_space<vmem>>, %arg6: memref<128x512xbf16, #tpu.memory_space<vmem>>, %arg7: memref<128x512xbf16, #tpu.memory_space<vmem>>, %arg8: memref<1x512xf32, #tpu.memory_space<vmem>>, %arg9: memref<2x128xf32, #tpu.memory_space<vmem>>, %arg10: memref<2x128xf32, #tpu.memory_space<vmem>>, %arg11: memref<128x128xbf16, #tpu.memory_space<vmem>>, %arg12: memref<1x128xf32, #tpu.memory_space<vmem>>, %arg13: memref<128x256xbf16, #tpu.memory_space<vmem>>, %arg14: memref<1x256xf32, #tpu.memory_space<vmem>>, %arg15: memref<16x256xf32, #tpu.memory_space<vmem>>, %arg16: memref<2x128xf32, #tpu.memory_space<vmem>>, %arg17: memref<2x128xf32, #tpu.memory_space<vmem>>, %arg18: memref<2x8x128xf32, #tpu.memory_space<vmem>>) attributes {dimension_semantics = [], scalar_prefetch = 0 : i64, scratch_operands = 1 : i64, tpu.core_type = #tpu.core_type<tc>} {
    %c0 = arith.constant 0 : index
    %c0_0 = arith.constant 0 : index
    %0 = vector.load %arg0[%c0, %c0_0] : memref<16x1xi32, #tpu.memory_space<vmem>>, vector<16x1xi32>
    %1 = tpu.iota {dimensions = array<i32: 1>} : vector<16x256xi32>
    %2 = vector.broadcast %0 : vector<16x1xi32> to vector<16x256xi32>
    %3 = arith.cmpi eq, %1, %2 : vector<16x256xi32>
    %4 = arith.extui %3 : vector<16x256xi1> to vector<16x256xi32>
    %5 = arith.sitofp %4 : vector<16x256xi32> to vector<16x256xf32>
    %6 = arith.truncf %5 : vector<16x256xf32> to vector<16x256xbf16>
    %c0_1 = arith.constant 0 : index
    %c0_2 = arith.constant 0 : index
    %7 = vector.load %arg1[%c0_1, %c0_2] : memref<256x128xbf16, #tpu.memory_space<vmem>>, vector<256x128xbf16>
    %cst = arith.constant dense<0.000000e+00> : vector<16x128xf32>
    %8 = tpu.matmul %6, %7, %cst {dimension_numbers = #tpu.dot_dimension_numbers<[1], [0], [0], [1], [0, 0, 1, 1], [], []>} : vector<16x256xbf16>, vector<256x128xbf16>, vector<16x128xf32> -> vector<16x128xf32>
    %9 = arith.truncf %8 : vector<16x128xf32> to vector<16x128xbf16>
    %c0_3 = arith.constant 0 : index
    %c0_4 = arith.constant 0 : index
    %10 = vector.load %arg2[%c0_3, %c0_4] : memref<128x128xbf16, #tpu.memory_space<vmem>>, vector<128x128xbf16>
    %cst_5 = arith.constant dense<0.000000e+00> : vector<16x128xf32>
    %11 = tpu.matmul %9, %10, %cst_5 {dimension_numbers = #tpu.dot_dimension_numbers<[1], [0], [0], [1], [0, 0, 1, 1], [], []>} : vector<16x128xbf16>, vector<128x128xbf16>, vector<16x128xf32> -> vector<16x128xf32>
    %c0_6 = arith.constant 0 : index
    %c0_7 = arith.constant 0 : index
    %12 = vector.load %arg3[%c0_6, %c0_7] : memref<1x128xf32, #tpu.memory_space<vmem>>, vector<1x128xf32>
    %13 = vector.broadcast %12 : vector<1x128xf32> to vector<16x128xf32>
    %14 = arith.addf %11, %13 : vector<16x128xf32>
    %cst_8 = arith.constant 5.000000e-01 : f32
    %15 = vector.broadcast %cst_8 : f32 to vector<16x128xf32>
    %16 = arith.mulf %15, %14 : vector<16x128xf32>
    %cst_9 = arith.constant 0.707106769 : f32
    %17 = vector.broadcast %cst_9 : f32 to vector<16x128xf32>
    %18 = arith.mulf %14, %17 : vector<16x128xf32>
    %19 = math.erf %18 : vector<16x128xf32>
    %cst_10 = arith.constant 1.000000e+00 : f32
    %20 = vector.broadcast %cst_10 : f32 to vector<16x128xf32>
    %21 = arith.addf %20, %19 : vector<16x128xf32>
    %22 = arith.mulf %16, %21 : vector<16x128xf32>
    %23 = arith.truncf %22 : vector<16x128xf32> to vector<16x128xbf16>
    %c0_11 = arith.constant 0 : index
    %c0_12 = arith.constant 0 : index
    %24 = vector.load %arg4[%c0_11, %c0_12] : memref<128x128xbf16, #tpu.memory_space<vmem>>, vector<128x128xbf16>
    %cst_13 = arith.constant dense<0.000000e+00> : vector<16x128xf32>
    %25 = tpu.matmul %23, %24, %cst_13 {dimension_numbers = #tpu.dot_dimension_numbers<[1], [0], [0], [1], [0, 0, 1, 1], [], []>} : vector<16x128xbf16>, vector<128x128xbf16>, vector<16x128xf32> -> vector<16x128xf32>
    %c0_14 = arith.constant 0 : index
    %c0_15 = arith.constant 0 : index
    %26 = vector.load %arg5[%c0_14, %c0_15] : memref<1x128xf32, #tpu.memory_space<vmem>>, vector<1x128xf32>
    %27 = vector.broadcast %26 : vector<1x128xf32> to vector<16x128xf32>
    %28 = arith.addf %25, %27 : vector<16x128xf32>
    %29 = arith.truncf %28 : vector<16x128xf32> to vector<16x128xbf16>
    %c0_16 = arith.constant 0 : index
    %c0_17 = arith.constant 0 : index
    %30 = vector.load %arg6[%c0_16, %c0_17] : memref<128x512xbf16, #tpu.memory_space<vmem>>, vector<128x512xbf16>
    %cst_18 = arith.constant dense<0.000000e+00> : vector<16x512xf32>
    %31 = tpu.matmul %29, %30, %cst_18 {dimension_numbers = #tpu.dot_dimension_numbers<[1], [0], [0], [1], [0, 0, 1, 1], [], []>} : vector<16x128xbf16>, vector<128x512xbf16>, vector<16x512xf32> -> vector<16x512xf32>
    %c0_19 = arith.constant 0 : index
    %c0_20 = arith.constant 0 : index
    %32 = vector.load %arg8[%c0_19, %c0_20] : memref<1x512xf32, #tpu.memory_space<vmem>>, vector<1x512xf32>
    %33 = vector.broadcast %32 : vector<1x512xf32> to vector<16x512xf32>
    %34 = arith.addf %31, %33 : vector<16x512xf32>
    %35 = vector.shape_cast %34 : vector<16x512xf32> to vector<2x8x512xf32>
    %c0_21 = arith.constant 0 : index
    %c0_22 = arith.constant 0 : index
    %36 = vector.load %arg9[%c0_21, %c0_22] : memref<2x128xf32, #tpu.memory_space<vmem>>, vector<2x128xf32>
    %c0_23 = arith.constant 0 : index
    %c0_24 = arith.constant 0 : index
    %37 = vector.load %arg10[%c0_23, %c0_24] : memref<2x128xf32, #tpu.memory_space<vmem>>, vector<2x128xf32>
    %38 = vector.extract_strided_slice %35 {offsets = [0, 0, 0], sizes = [2, 1, 512], strides = [1, 1, 1]} : vector<2x8x512xf32> to vector<2x1x512xf32>
    %39 = vector.shape_cast %38 : vector<2x1x512xf32> to vector<2x512xf32>
    %40 = arith.truncf %36 : vector<2x128xf32> to vector<2x128xbf16>
    %c0_25 = arith.constant 0 : index
    %c0_26 = arith.constant 0 : index
    %41 = vector.load %arg7[%c0_25, %c0_26] : memref<128x512xbf16, #tpu.memory_space<vmem>>, vector<128x512xbf16>
    %cst_27 = arith.constant dense<0.000000e+00> : vector<2x512xf32>
    %42 = tpu.matmul %40, %41, %cst_27 {dimension_numbers = #tpu.dot_dimension_numbers<[1], [0], [0], [1], [0, 0, 1, 1], [], []>} : vector<2x128xbf16>, vector<128x512xbf16>, vector<2x512xf32> -> vector<2x512xf32>
    %43 = arith.addf %39, %42 : vector<2x512xf32>
    %44 = vector.extract_strided_slice %43 {offsets = [0, 0], sizes = [2, 384], strides = [1, 1]} : vector<2x512xf32> to vector<2x384xf32>
    %45 = arith.negf %44 : vector<2x384xf32>
    %46 = math.exp %45 : vector<2x384xf32>
    %cst_28 = arith.constant 1.000000e+00 : f32
    %47 = vector.broadcast %cst_28 : f32 to vector<2x384xf32>
    %48 = arith.addf %47, %46 : vector<2x384xf32>
    %49 = arith.divf %47, %48 : vector<2x384xf32>
    %50 = vector.extract_strided_slice %43 {offsets = [0, 384], sizes = [2, 128], strides = [1, 1]} : vector<2x512xf32> to vector<2x128xf32>
    %51 = math.tanh %50 : vector<2x128xf32>
    %52 = vector.extract_strided_slice %49 {offsets = [0, 0], sizes = [2, 128], strides = [1, 1]} : vector<2x384xf32> to vector<2x128xf32>
    %53 = vector.extract_strided_slice %49 {offsets = [0, 128], sizes = [2, 128], strides = [1, 1]} : vector<2x384xf32> to vector<2x128xf32>
    %54 = vector.extract_strided_slice %49 {offsets = [0, 256], sizes = [2, 128], strides = [1, 1]} : vector<2x384xf32> to vector<2x128xf32>
    %55 = arith.mulf %53, %37 : vector<2x128xf32>
    %56 = arith.mulf %52, %51 : vector<2x128xf32>
    %57 = arith.addf %55, %56 : vector<2x128xf32>
    %58 = math.tanh %57 : vector<2x128xf32>
    %59 = arith.mulf %54, %58 : vector<2x128xf32>
    %c0_29 = arith.constant 0 : index
    %c0_30 = arith.constant 0 : index
    %c0_31 = arith.constant 0 : index
    %60 = vector.load %arg18[%c0_29, %c0_30, %c0_31] : memref<2x8x128xf32, #tpu.memory_space<vmem>>, vector<2x1x128xf32>
    %61 = vector.shape_cast %60 : vector<2x1x128xf32> to vector<2x128xf32>
    %62 = vector.shape_cast %59 : vector<2x128xf32> to vector<2x1x128xf32>
    tpu.vector_store %arg18[%c0_29, %c0_30, %c0_31], %62 {strides = array<i32>} : memref<2x8x128xf32, #tpu.memory_space<vmem>>, vector<2x1x128xf32>,
    %63 = vector.extract_strided_slice %35 {offsets = [0, 1, 0], sizes = [2, 1, 512], strides = [1, 1, 1]} : vector<2x8x512xf32> to vector<2x1x512xf32>
    %64 = vector.shape_cast %63 : vector<2x1x512xf32> to vector<2x512xf32>
    %65 = arith.truncf %59 : vector<2x128xf32> to vector<2x128xbf16>
    %c0_32 = arith.constant 0 : index
    %c0_33 = arith.constant 0 : index
    %66 = vector.load %arg7[%c0_32, %c0_33] : memref<128x512xbf16, #tpu.memory_space<vmem>>, vector<128x512xbf16>
    %cst_34 = arith.constant dense<0.000000e+00> : vector<2x512xf32>
    %67 = tpu.matmul %65, %66, %cst_34 {dimension_numbers = #tpu.dot_dimension_numbers<[1], [0], [0], [1], [0, 0, 1, 1], [], []>} : vector<2x128xbf16>, vector<128x512xbf16>, vector<2x512xf32> -> vector<2x512xf32>
    %68 = arith.addf %64, %67 : vector<2x512xf32>
    %69 = vector.extract_strided_slice %68 {offsets = [0, 0], sizes = [2, 384], strides = [1, 1]} : vector<2x512xf32> to vector<2x384xf32>
    %70 = arith.negf %69 : vector<2x384xf32>
    %71 = math.exp %70 : vector<2x384xf32>
    %cst_35 = arith.constant 1.000000e+00 : f32
    %72 = vector.broadcast %cst_35 : f32 to vector<2x384xf32>
    %73 = arith.addf %72, %71 : vector<2x384xf32>
    %74 = arith.divf %72, %73 : vector<2x384xf32>
    %75 = vector.extract_strided_slice %68 {offsets = [0, 384], sizes = [2, 128], strides = [1, 1]} : vector<2x512xf32> to vector<2x128xf32>
    %76 = math.tanh %75 : vector<2x128xf32>
    %77 = vector.extract_strided_slice %74 {offsets = [0, 0], sizes = [2, 128], strides = [1, 1]} : vector<2x384xf32> to vector<2x128xf32>
    %78 = vector.extract_strided_slice %74 {offsets = [0, 128], sizes = [2, 128], strides = [1, 1]} : vector<2x384xf32> to vector<2x128xf32>
    %79 = vector.extract_strided_slice %74 {offsets = [0, 256], sizes = [2, 128], strides = [1, 1]} : vector<2x384xf32> to vector<2x128xf32>
    %80 = arith.mulf %78, %57 : vector<2x128xf32>
    %81 = arith.mulf %77, %76 : vector<2x128xf32>
    %82 = arith.addf %80, %81 : vector<2x128xf32>
    %83 = math.tanh %82 : vector<2x128xf32>
    %84 = arith.mulf %79, %83 : vector<2x128xf32>
    %c0_36 = arith.constant 0 : index
    %c1 = arith.constant 1 : index
    %c0_37 = arith.constant 0 : index
    %85 = vector.load %arg18[%c0_36, %c1, %c0_37] : memref<2x8x128xf32, #tpu.memory_space<vmem>>, vector<2x1x128xf32>
    %86 = vector.shape_cast %85 : vector<2x1x128xf32> to vector<2x128xf32>
    %87 = vector.shape_cast %84 : vector<2x128xf32> to vector<2x1x128xf32>
    tpu.vector_store %arg18[%c0_36, %c1, %c0_37], %87 {strides = array<i32>} : memref<2x8x128xf32, #tpu.memory_space<vmem>>, vector<2x1x128xf32>,
    %88 = vector.extract_strided_slice %35 {offsets = [0, 2, 0], sizes = [2, 1, 512], strides = [1, 1, 1]} : vector<2x8x512xf32> to vector<2x1x512xf32>
    %89 = vector.shape_cast %88 : vector<2x1x512xf32> to vector<2x512xf32>
    %90 = arith.truncf %84 : vector<2x128xf32> to vector<2x128xbf16>
    %c0_38 = arith.constant 0 : index
    %c0_39 = arith.constant 0 : index
    %91 = vector.load %arg7[%c0_38, %c0_39] : memref<128x512xbf16, #tpu.memory_space<vmem>>, vector<128x512xbf16>
    %cst_40 = arith.constant dense<0.000000e+00> : vector<2x512xf32>
    %92 = tpu.matmul %90, %91, %cst_40 {dimension_numbers = #tpu.dot_dimension_numbers<[1], [0], [0], [1], [0, 0, 1, 1], [], []>} : vector<2x128xbf16>, vector<128x512xbf16>, vector<2x512xf32> -> vector<2x512xf32>
    %93 = arith.addf %89, %92 : vector<2x512xf32>
    %94 = vector.extract_strided_slice %93 {offsets = [0, 0], sizes = [2, 384], strides = [1, 1]} : vector<2x512xf32> to vector<2x384xf32>
    %95 = arith.negf %94 : vector<2x384xf32>
    %96 = math.exp %95 : vector<2x384xf32>
    %cst_41 = arith.constant 1.000000e+00 : f32
    %97 = vector.broadcast %cst_41 : f32 to vector<2x384xf32>
    %98 = arith.addf %97, %96 : vector<2x384xf32>
    %99 = arith.divf %97, %98 : vector<2x384xf32>
    %100 = vector.extract_strided_slice %93 {offsets = [0, 384], sizes = [2, 128], strides = [1, 1]} : vector<2x512xf32> to vector<2x128xf32>
    %101 = math.tanh %100 : vector<2x128xf32>
    %102 = vector.extract_strided_slice %99 {offsets = [0, 0], sizes = [2, 128], strides = [1, 1]} : vector<2x384xf32> to vector<2x128xf32>
    %103 = vector.extract_strided_slice %99 {offsets = [0, 128], sizes = [2, 128], strides = [1, 1]} : vector<2x384xf32> to vector<2x128xf32>
    %104 = vector.extract_strided_slice %99 {offsets = [0, 256], sizes = [2, 128], strides = [1, 1]} : vector<2x384xf32> to vector<2x128xf32>
    %105 = arith.mulf %103, %82 : vector<2x128xf32>
    %106 = arith.mulf %102, %101 : vector<2x128xf32>
    %107 = arith.addf %105, %106 : vector<2x128xf32>
    %108 = math.tanh %107 : vector<2x128xf32>
    %109 = arith.mulf %104, %108 : vector<2x128xf32>
    %c0_42 = arith.constant 0 : index
    %c2 = arith.constant 2 : index
    %c0_43 = arith.constant 0 : index
    %110 = vector.load %arg18[%c0_42, %c2, %c0_43] : memref<2x8x128xf32, #tpu.memory_space<vmem>>, vector<2x1x128xf32>
    %111 = vector.shape_cast %110 : vector<2x1x128xf32> to vector<2x128xf32>
    %112 = vector.shape_cast %109 : vector<2x128xf32> to vector<2x1x128xf32>
    tpu.vector_store %arg18[%c0_42, %c2, %c0_43], %112 {strides = array<i32>} : memref<2x8x128xf32, #tpu.memory_space<vmem>>, vector<2x1x128xf32>,
    %113 = vector.extract_strided_slice %35 {offsets = [0, 3, 0], sizes = [2, 1, 512], strides = [1, 1, 1]} : vector<2x8x512xf32> to vector<2x1x512xf32>
    %114 = vector.shape_cast %113 : vector<2x1x512xf32> to vector<2x512xf32>
    %115 = arith.truncf %109 : vector<2x128xf32> to vector<2x128xbf16>
    %c0_44 = arith.constant 0 : index
    %c0_45 = arith.constant 0 : index
    %116 = vector.load %arg7[%c0_44, %c0_45] : memref<128x512xbf16, #tpu.memory_space<vmem>>, vector<128x512xbf16>
    %cst_46 = arith.constant dense<0.000000e+00> : vector<2x512xf32>
    %117 = tpu.matmul %115, %116, %cst_46 {dimension_numbers = #tpu.dot_dimension_numbers<[1], [0], [0], [1], [0, 0, 1, 1], [], []>} : vector<2x128xbf16>, vector<128x512xbf16>, vector<2x512xf32> -> vector<2x512xf32>
    %118 = arith.addf %114, %117 : vector<2x512xf32>
    %119 = vector.extract_strided_slice %118 {offsets = [0, 0], sizes = [2, 384], strides = [1, 1]} : vector<2x512xf32> to vector<2x384xf32>
    %120 = arith.negf %119 : vector<2x384xf32>
    %121 = math.exp %120 : vector<2x384xf32>
    %cst_47 = arith.constant 1.000000e+00 : f32
    %122 = vector.broadcast %cst_47 : f32 to vector<2x384xf32>
    %123 = arith.addf %122, %121 : vector<2x384xf32>
    %124 = arith.divf %122, %123 : vector<2x384xf32>
    %125 = vector.extract_strided_slice %118 {offsets = [0, 384], sizes = [2, 128], strides = [1, 1]} : vector<2x512xf32> to vector<2x128xf32>
    %126 = math.tanh %125 : vector<2x128xf32>
    %127 = vector.extract_strided_slice %124 {offsets = [0, 0], sizes = [2, 128], strides = [1, 1]} : vector<2x384xf32> to vector<2x128xf32>
    %128 = vector.extract_strided_slice %124 {offsets = [0, 128], sizes = [2, 128], strides = [1, 1]} : vector<2x384xf32> to vector<2x128xf32>
    %129 = vector.extract_strided_slice %124 {offsets = [0, 256], sizes = [2, 128], strides = [1, 1]} : vector<2x384xf32> to vector<2x128xf32>
    %130 = arith.mulf %128, %107 : vector<2x128xf32>
    %131 = arith.mulf %127, %126 : vector<2x128xf32>
    %132 = arith.addf %130, %131 : vector<2x128xf32>
    %133 = math.tanh %132 : vector<2x128xf32>
    %134 = arith.mulf %129, %133 : vector<2x128xf32>
    %c0_48 = arith.constant 0 : index
    %c3 = arith.constant 3 : index
    %c0_49 = arith.constant 0 : index
    %135 = vector.load %arg18[%c0_48, %c3, %c0_49] : memref<2x8x128xf32, #tpu.memory_space<vmem>>, vector<2x1x128xf32>
    %136 = vector.shape_cast %135 : vector<2x1x128xf32> to vector<2x128xf32>
    %137 = vector.shape_cast %134 : vector<2x128xf32> to vector<2x1x128xf32>
    tpu.vector_store %arg18[%c0_48, %c3, %c0_49], %137 {strides = array<i32>} : memref<2x8x128xf32, #tpu.memory_space<vmem>>, vector<2x1x128xf32>,
    %138 = vector.extract_strided_slice %35 {offsets = [0, 4, 0], sizes = [2, 1, 512], strides = [1, 1, 1]} : vector<2x8x512xf32> to vector<2x1x512xf32>
    %139 = vector.shape_cast %138 : vector<2x1x512xf32> to vector<2x512xf32>
    %140 = arith.truncf %134 : vector<2x128xf32> to vector<2x128xbf16>
    %c0_50 = arith.constant 0 : index
    %c0_51 = arith.constant 0 : index
    %141 = vector.load %arg7[%c0_50, %c0_51] : memref<128x512xbf16, #tpu.memory_space<vmem>>, vector<128x512xbf16>
    %cst_52 = arith.constant dense<0.000000e+00> : vector<2x512xf32>
    %142 = tpu.matmul %140, %141, %cst_52 {dimension_numbers = #tpu.dot_dimension_numbers<[1], [0], [0], [1], [0, 0, 1, 1], [], []>} : vector<2x128xbf16>, vector<128x512xbf16>, vector<2x512xf32> -> vector<2x512xf32>
    %143 = arith.addf %139, %142 : vector<2x512xf32>
    %144 = vector.extract_strided_slice %143 {offsets = [0, 0], sizes = [2, 384], strides = [1, 1]} : vector<2x512xf32> to vector<2x384xf32>
    %145 = arith.negf %144 : vector<2x384xf32>
    %146 = math.exp %145 : vector<2x384xf32>
    %cst_53 = arith.constant 1.000000e+00 : f32
    %147 = vector.broadcast %cst_53 : f32 to vector<2x384xf32>
    %148 = arith.addf %147, %146 : vector<2x384xf32>
    %149 = arith.divf %147, %148 : vector<2x384xf32>
    %150 = vector.extract_strided_slice %143 {offsets = [0, 384], sizes = [2, 128], strides = [1, 1]} : vector<2x512xf32> to vector<2x128xf32>
    %151 = math.tanh %150 : vector<2x128xf32>
    %152 = vector.extract_strided_slice %149 {offsets = [0, 0], sizes = [2, 128], strides = [1, 1]} : vector<2x384xf32> to vector<2x128xf32>
    %153 = vector.extract_strided_slice %149 {offsets = [0, 128], sizes = [2, 128], strides = [1, 1]} : vector<2x384xf32> to vector<2x128xf32>
    %154 = vector.extract_strided_slice %149 {offsets = [0, 256], sizes = [2, 128], strides = [1, 1]} : vector<2x384xf32> to vector<2x128xf32>
    %155 = arith.mulf %153, %132 : vector<2x128xf32>
    %156 = arith.mulf %152, %151 : vector<2x128xf32>
    %157 = arith.addf %155, %156 : vector<2x128xf32>
    %158 = math.tanh %157 : vector<2x128xf32>
    %159 = arith.mulf %154, %158 : vector<2x128xf32>
    %c0_54 = arith.constant 0 : index
    %c4 = arith.constant 4 : index
    %c0_55 = arith.constant 0 : index
    %160 = vector.load %arg18[%c0_54, %c4, %c0_55] : memref<2x8x128xf32, #tpu.memory_space<vmem>>, vector<2x1x128xf32>
    %161 = vector.shape_cast %160 : vector<2x1x128xf32> to vector<2x128xf32>
    %162 = vector.shape_cast %159 : vector<2x128xf32> to vector<2x1x128xf32>
    tpu.vector_store %arg18[%c0_54, %c4, %c0_55], %162 {strides = array<i32>} : memref<2x8x128xf32, #tpu.memory_space<vmem>>, vector<2x1x128xf32>,
    %163 = vector.extract_strided_slice %35 {offsets = [0, 5, 0], sizes = [2, 1, 512], strides = [1, 1, 1]} : vector<2x8x512xf32> to vector<2x1x512xf32>
    %164 = vector.shape_cast %163 : vector<2x1x512xf32> to vector<2x512xf32>
    %165 = arith.truncf %159 : vector<2x128xf32> to vector<2x128xbf16>
    %c0_56 = arith.constant 0 : index
    %c0_57 = arith.constant 0 : index
    %166 = vector.load %arg7[%c0_56, %c0_57] : memref<128x512xbf16, #tpu.memory_space<vmem>>, vector<128x512xbf16>
    %cst_58 = arith.constant dense<0.000000e+00> : vector<2x512xf32>
    %167 = tpu.matmul %165, %166, %cst_58 {dimension_numbers = #tpu.dot_dimension_numbers<[1], [0], [0], [1], [0, 0, 1, 1], [], []>} : vector<2x128xbf16>, vector<128x512xbf16>, vector<2x512xf32> -> vector<2x512xf32>
    %168 = arith.addf %164, %167 : vector<2x512xf32>
    %169 = vector.extract_strided_slice %168 {offsets = [0, 0], sizes = [2, 384], strides = [1, 1]} : vector<2x512xf32> to vector<2x384xf32>
    %170 = arith.negf %169 : vector<2x384xf32>
    %171 = math.exp %170 : vector<2x384xf32>
    %cst_59 = arith.constant 1.000000e+00 : f32
    %172 = vector.broadcast %cst_59 : f32 to vector<2x384xf32>
    %173 = arith.addf %172, %171 : vector<2x384xf32>
    %174 = arith.divf %172, %173 : vector<2x384xf32>
    %175 = vector.extract_strided_slice %168 {offsets = [0, 384], sizes = [2, 128], strides = [1, 1]} : vector<2x512xf32> to vector<2x128xf32>
    %176 = math.tanh %175 : vector<2x128xf32>
    %177 = vector.extract_strided_slice %174 {offsets = [0, 0], sizes = [2, 128], strides = [1, 1]} : vector<2x384xf32> to vector<2x128xf32>
    %178 = vector.extract_strided_slice %174 {offsets = [0, 128], sizes = [2, 128], strides = [1, 1]} : vector<2x384xf32> to vector<2x128xf32>
    %179 = vector.extract_strided_slice %174 {offsets = [0, 256], sizes = [2, 128], strides = [1, 1]} : vector<2x384xf32> to vector<2x128xf32>
    %180 = arith.mulf %178, %157 : vector<2x128xf32>
    %181 = arith.mulf %177, %176 : vector<2x128xf32>
    %182 = arith.addf %180, %181 : vector<2x128xf32>
    %183 = math.tanh %182 : vector<2x128xf32>
    %184 = arith.mulf %179, %183 : vector<2x128xf32>
    %c0_60 = arith.constant 0 : index
    %c5 = arith.constant 5 : index
    %c0_61 = arith.constant 0 : index
    %185 = vector.load %arg18[%c0_60, %c5, %c0_61] : memref<2x8x128xf32, #tpu.memory_space<vmem>>, vector<2x1x128xf32>
    %186 = vector.shape_cast %185 : vector<2x1x128xf32> to vector<2x128xf32>
    %187 = vector.shape_cast %184 : vector<2x128xf32> to vector<2x1x128xf32>
    tpu.vector_store %arg18[%c0_60, %c5, %c0_61], %187 {strides = array<i32>} : memref<2x8x128xf32, #tpu.memory_space<vmem>>, vector<2x1x128xf32>,
    %188 = vector.extract_strided_slice %35 {offsets = [0, 6, 0], sizes = [2, 1, 512], strides = [1, 1, 1]} : vector<2x8x512xf32> to vector<2x1x512xf32>
    %189 = vector.shape_cast %188 : vector<2x1x512xf32> to vector<2x512xf32>
    %190 = arith.truncf %184 : vector<2x128xf32> to vector<2x128xbf16>
    %c0_62 = arith.constant 0 : index
    %c0_63 = arith.constant 0 : index
    %191 = vector.load %arg7[%c0_62, %c0_63] : memref<128x512xbf16, #tpu.memory_space<vmem>>, vector<128x512xbf16>
    %cst_64 = arith.constant dense<0.000000e+00> : vector<2x512xf32>
    %192 = tpu.matmul %190, %191, %cst_64 {dimension_numbers = #tpu.dot_dimension_numbers<[1], [0], [0], [1], [0, 0, 1, 1], [], []>} : vector<2x128xbf16>, vector<128x512xbf16>, vector<2x512xf32> -> vector<2x512xf32>
    %193 = arith.addf %189, %192 : vector<2x512xf32>
    %194 = vector.extract_strided_slice %193 {offsets = [0, 0], sizes = [2, 384], strides = [1, 1]} : vector<2x512xf32> to vector<2x384xf32>
    %195 = arith.negf %194 : vector<2x384xf32>
    %196 = math.exp %195 : vector<2x384xf32>
    %cst_65 = arith.constant 1.000000e+00 : f32
    %197 = vector.broadcast %cst_65 : f32 to vector<2x384xf32>
    %198 = arith.addf %197, %196 : vector<2x384xf32>
    %199 = arith.divf %197, %198 : vector<2x384xf32>
    %200 = vector.extract_strided_slice %193 {offsets = [0, 384], sizes = [2, 128], strides = [1, 1]} : vector<2x512xf32> to vector<2x128xf32>
    %201 = math.tanh %200 : vector<2x128xf32>
    %202 = vector.extract_strided_slice %199 {offsets = [0, 0], sizes = [2, 128], strides = [1, 1]} : vector<2x384xf32> to vector<2x128xf32>
    %203 = vector.extract_strided_slice %199 {offsets = [0, 128], sizes = [2, 128], strides = [1, 1]} : vector<2x384xf32> to vector<2x128xf32>
    %204 = vector.extract_strided_slice %199 {offsets = [0, 256], sizes = [2, 128], strides = [1, 1]} : vector<2x384xf32> to vector<2x128xf32>
    %205 = arith.mulf %203, %182 : vector<2x128xf32>
    %206 = arith.mulf %202, %201 : vector<2x128xf32>
    %207 = arith.addf %205, %206 : vector<2x128xf32>
    %208 = math.tanh %207 : vector<2x128xf32>
    %209 = arith.mulf %204, %208 : vector<2x128xf32>
    %c0_66 = arith.constant 0 : index
    %c6 = arith.constant 6 : index
    %c0_67 = arith.constant 0 : index
    %210 = vector.load %arg18[%c0_66, %c6, %c0_67] : memref<2x8x128xf32, #tpu.memory_space<vmem>>, vector<2x1x128xf32>
    %211 = vector.shape_cast %210 : vector<2x1x128xf32> to vector<2x128xf32>
    %212 = vector.shape_cast %209 : vector<2x128xf32> to vector<2x1x128xf32>
    tpu.vector_store %arg18[%c0_66, %c6, %c0_67], %212 {strides = array<i32>} : memref<2x8x128xf32, #tpu.memory_space<vmem>>, vector<2x1x128xf32>,
    %213 = vector.extract_strided_slice %35 {offsets = [0, 7, 0], sizes = [2, 1, 512], strides = [1, 1, 1]} : vector<2x8x512xf32> to vector<2x1x512xf32>
    %214 = vector.shape_cast %213 : vector<2x1x512xf32> to vector<2x512xf32>
    %215 = arith.truncf %209 : vector<2x128xf32> to vector<2x128xbf16>
    %c0_68 = arith.constant 0 : index
    %c0_69 = arith.constant 0 : index
    %216 = vector.load %arg7[%c0_68, %c0_69] : memref<128x512xbf16, #tpu.memory_space<vmem>>, vector<128x512xbf16>
    %cst_70 = arith.constant dense<0.000000e+00> : vector<2x512xf32>
    %217 = tpu.matmul %215, %216, %cst_70 {dimension_numbers = #tpu.dot_dimension_numbers<[1], [0], [0], [1], [0, 0, 1, 1], [], []>} : vector<2x128xbf16>, vector<128x512xbf16>, vector<2x512xf32> -> vector<2x512xf32>
    %218 = arith.addf %214, %217 : vector<2x512xf32>
    %219 = vector.extract_strided_slice %218 {offsets = [0, 0], sizes = [2, 384], strides = [1, 1]} : vector<2x512xf32> to vector<2x384xf32>
    %220 = arith.negf %219 : vector<2x384xf32>
    %221 = math.exp %220 : vector<2x384xf32>
    %cst_71 = arith.constant 1.000000e+00 : f32
    %222 = vector.broadcast %cst_71 : f32 to vector<2x384xf32>
    %223 = arith.addf %222, %221 : vector<2x384xf32>
    %224 = arith.divf %222, %223 : vector<2x384xf32>
    %225 = vector.extract_strided_slice %218 {offsets = [0, 384], sizes = [2, 128], strides = [1, 1]} : vector<2x512xf32> to vector<2x128xf32>
    %226 = math.tanh %225 : vector<2x128xf32>
    %227 = vector.extract_strided_slice %224 {offsets = [0, 0], sizes = [2, 128], strides = [1, 1]} : vector<2x384xf32> to vector<2x128xf32>
    %228 = vector.extract_strided_slice %224 {offsets = [0, 128], sizes = [2, 128], strides = [1, 1]} : vector<2x384xf32> to vector<2x128xf32>
    %229 = vector.extract_strided_slice %224 {offsets = [0, 256], sizes = [2, 128], strides = [1, 1]} : vector<2x384xf32> to vector<2x128xf32>
    %230 = arith.mulf %228, %207 : vector<2x128xf32>
    %231 = arith.mulf %227, %226 : vector<2x128xf32>
    %232 = arith.addf %230, %231 : vector<2x128xf32>
    %233 = math.tanh %232 : vector<2x128xf32>
    %234 = arith.mulf %229, %233 : vector<2x128xf32>
    %c0_72 = arith.constant 0 : index
    %c7 = arith.constant 7 : index
    %c0_73 = arith.constant 0 : index
    %235 = vector.load %arg18[%c0_72, %c7, %c0_73] : memref<2x8x128xf32, #tpu.memory_space<vmem>>, vector<2x1x128xf32>
    %236 = vector.shape_cast %235 : vector<2x1x128xf32> to vector<2x128xf32>
    %237 = vector.shape_cast %234 : vector<2x128xf32> to vector<2x1x128xf32>
    tpu.vector_store %arg18[%c0_72, %c7, %c0_73], %237 {strides = array<i32>} : memref<2x8x128xf32, #tpu.memory_space<vmem>>, vector<2x1x128xf32>,
    %c0_74 = arith.constant 0 : index
    %c0_75 = arith.constant 0 : index
    %238 = vector.load %arg16[%c0_74, %c0_75] : memref<2x128xf32, #tpu.memory_space<vmem>>, vector<2x128xf32>
    tpu.vector_store %arg16[%c0_74, %c0_75], %234 {strides = array<i32>} : memref<2x128xf32, #tpu.memory_space<vmem>>, vector<2x128xf32>,
    %c0_76 = arith.constant 0 : index
    %c0_77 = arith.constant 0 : index
    %239 = vector.load %arg17[%c0_76, %c0_77] : memref<2x128xf32, #tpu.memory_space<vmem>>, vector<2x128xf32>
    tpu.vector_store %arg17[%c0_76, %c0_77], %232 {strides = array<i32>} : memref<2x128xf32, #tpu.memory_space<vmem>>, vector<2x128xf32>,
    %c0_78 = arith.constant 0 : index
    %c0_79 = arith.constant 0 : index
    %c0_80 = arith.constant 0 : index
    %240 = vector.load %arg18[%c0_78, %c0_79, %c0_80] : memref<2x8x128xf32, #tpu.memory_space<vmem>>, vector<2x8x128xf32>
    %241 = vector.shape_cast %240 : vector<2x8x128xf32> to vector<16x128xf32>
    %242 = arith.truncf %241 : vector<16x128xf32> to vector<16x128xbf16>
    %c0_81 = arith.constant 0 : index
    %c0_82 = arith.constant 0 : index
    %243 = vector.load %arg11[%c0_81, %c0_82] : memref<128x128xbf16, #tpu.memory_space<vmem>>, vector<128x128xbf16>
    %cst_83 = arith.constant dense<0.000000e+00> : vector<16x128xf32>
    %244 = tpu.matmul %242, %243, %cst_83 {dimension_numbers = #tpu.dot_dimension_numbers<[1], [0], [0], [1], [0, 0, 1, 1], [], []>} : vector<16x128xbf16>, vector<128x128xbf16>, vector<16x128xf32> -> vector<16x128xf32>
    %c0_84 = arith.constant 0 : index
    %c0_85 = arith.constant 0 : index
    %245 = vector.load %arg12[%c0_84, %c0_85] : memref<1x128xf32, #tpu.memory_space<vmem>>, vector<1x128xf32>
    %246 = vector.broadcast %245 : vector<1x128xf32> to vector<16x128xf32>
    %247 = arith.addf %244, %246 : vector<16x128xf32>
    %cst_86 = arith.constant 5.000000e-01 : f32
    %248 = vector.broadcast %cst_86 : f32 to vector<16x128xf32>
    %249 = arith.mulf %248, %247 : vector<16x128xf32>
    %cst_87 = arith.constant 0.707106769 : f32
    %250 = vector.broadcast %cst_87 : f32 to vector<16x128xf32>
    %251 = arith.mulf %247, %250 : vector<16x128xf32>
    %252 = math.erf %251 : vector<16x128xf32>
    %cst_88 = arith.constant 1.000000e+00 : f32
    %253 = vector.broadcast %cst_88 : f32 to vector<16x128xf32>
    %254 = arith.addf %253, %252 : vector<16x128xf32>
    %255 = arith.mulf %249, %254 : vector<16x128xf32>
    %256 = arith.truncf %255 : vector<16x128xf32> to vector<16x128xbf16>
    %c0_89 = arith.constant 0 : index
    %c0_90 = arith.constant 0 : index
    %257 = vector.load %arg13[%c0_89, %c0_90] : memref<128x256xbf16, #tpu.memory_space<vmem>>, vector<128x256xbf16>
    %cst_91 = arith.constant dense<0.000000e+00> : vector<16x256xf32>
    %258 = tpu.matmul %256, %257, %cst_91 {dimension_numbers = #tpu.dot_dimension_numbers<[1], [0], [0], [1], [0, 0, 1, 1], [], []>} : vector<16x128xbf16>, vector<128x256xbf16>, vector<16x256xf32> -> vector<16x256xf32>
    %c0_92 = arith.constant 0 : index
    %c0_93 = arith.constant 0 : index
    %259 = vector.load %arg14[%c0_92, %c0_93] : memref<1x256xf32, #tpu.memory_space<vmem>>, vector<1x256xf32>
    %260 = vector.broadcast %259 : vector<1x256xf32> to vector<16x256xf32>
    %261 = arith.addf %258, %260 : vector<16x256xf32>
    %c0_94 = arith.constant 0 : index
    %c0_95 = arith.constant 0 : index
    %262 = vector.load %arg15[%c0_94, %c0_95] : memref<16x256xf32, #tpu.memory_space<vmem>>, vector<16x256xf32>
    tpu.vector_store %arg15[%c0_94, %c0_95], %261 {strides = array<i32>} : memref<16x256xf32, #tpu.memory_space<vmem>>, vector<16x256xf32>,
    return
  }
}

</mosaic_0001>

<llo_original>
// kernel: lstm_model_beefy_forward.1
$region0: #{lstm_model_beefy_forward.1}
  #allocation0 [shape = 'u32[]', space=smem, size = 0x4, offset = 0x4, fixed_abs, tag = 'smem constant byte address 0x4 - core index']
  #allocation1 [shape = 'u32[144,128]{1,0:T(1,128)}', space=vmem, size = 0x12000, scoped, tag = 'internal scratch']
  #allocation2 [shape = 'f32[2,8,128]{2,1,0:T(8,128)}', space=vmem, size = 0x2000, scoped, tag = 'scratch operand']
  %s0 = inlined_call_operand.vmem [shape: s32[16,1], index: 0, kind: input, shape index: {}]
  %s1 = inlined_call_operand.vmem [shape: bf16[256,128], index: 1, kind: input, shape index: {}]
  %s2 = inlined_call_operand.vmem [shape: bf16[128,128], index: 2, kind: input, shape index: {}]
  %s3 = inlined_call_operand.vmem [shape: f32[1,128], index: 3, kind: input, shape index: {}]
  %s4 = inlined_call_operand.vmem [shape: bf16[128,128], index: 4, kind: input, shape index: {}]
  %s5 = inlined_call_operand.vmem [shape: f32[1,128], index: 5, kind: input, shape index: {}]
  %s6 = inlined_call_operand.vmem [shape: bf16[128,512], index: 6, kind: input, shape index: {}]
  %s7 = inlined_call_operand.vmem [shape: bf16[128,512], index: 7, kind: input, shape index: {}]
  %s8 = inlined_call_operand.vmem [shape: f32[1,512], index: 8, kind: input, shape index: {}]
  %s9 = inlined_call_operand.vmem [shape: f32[2,128], index: 9, kind: input, shape index: {}]
  %s10 = inlined_call_operand.vmem [shape: f32[2,128], index: 10, kind: input, shape index: {}]
  %s11 = inlined_call_operand.vmem [shape: bf16[128,128], index: 11, kind: input, shape index: {}]
  %s12 = inlined_call_operand.vmem [shape: f32[1,128], index: 12, kind: input, shape index: {}]
  %s13 = inlined_call_operand.vmem [shape: bf16[128,256], index: 13, kind: input, shape index: {}]
  %s14 = inlined_call_operand.vmem [shape: f32[1,256], index: 14, kind: input, shape index: {}]
  %s15 = inlined_call_operand.hbm [shape: f32[16,256], index: 15, kind: output, shape index: {0}]
  %s16 = inlined_call_operand.hbm [shape: f32[2,128], index: 16, kind: output, shape index: {1}]
  %s17 = inlined_call_operand.hbm [shape: f32[2,128], index: 17, kind: output, shape index: {2}]
  %18 = xla_tuple %s15, %s16, %s17
  %s19 = sld [smem:[#allocation0]]
  $region86: #{lstm_model_beefy_forward.1} parent=0
    _
  %s21 = ssub.s32 1, %s19
  %s22 = scalar_select 0, %s21, %s19
  $region1: #{lstm_model_beefy_forward.1} parent=0
    #allocation3 [shape = 'u8[16384]{0}', space=vmem, size = 0x4000, scoped, tag = 'output window, operand 0, single buffered']
    #allocation4 [shape = 's32[1]{0}', space=sflag, size = 0x4, scoped, tag = 'scoped memory for lstm_model_beefy_forward.1']
    #allocation5 [shape = 'u8[1024]{0}', space=vmem, size = 0x400, scoped, tag = 'output window, operand 1, single buffered']
    #allocation6 [shape = 's32[1]{0}', space=sflag, size = 0x4, scoped, tag = 'scoped memory for lstm_model_beefy_forward.1']
    #allocation7 [shape = 'u8[1024]{0}', space=vmem, size = 0x400, scoped, tag = 'output window, operand 2, single buffered']
    %23 = vsyncpa [#allocation4], 0
    %24 = vsyncpa [#allocation6], 0
    // Predicated region
    $region2: #{lstm_model_beefy_forward.1} parent=1 // pred_check
      _
    $region3: #{lstm_model_beefy_forward.1} parent=1 // pred_check_branch
      %26 = sbr.rel (0) target = $region5
    $region4: #{lstm_model_beefy_forward.1} parent=1 // pred_region
      _
    $region5: #{lstm_model_beefy_forward.1} parent=1 // pred_fallthru
      _
    // Predicated region
    $region6: #{lstm_model_beefy_forward.1} parent=1 // pred_check
      _
    $region7: #{lstm_model_beefy_forward.1} parent=1 // pred_check_branch
      %28 = sbr.rel (0) target = $region9
    $region8: #{lstm_model_beefy_forward.1} parent=1 // pred_region
      _
    $region9: #{lstm_model_beefy_forward.1} parent=1 // pred_fallthru
      _
    // Predicated region
    $region10: #{lstm_model_beefy_forward.1} parent=1 // pred_check
      _
    $region11: #{lstm_model_beefy_forward.1} parent=1 // pred_check_branch
      %30 = sbr.rel (0) target = $region13
    $region12: #{lstm_model_beefy_forward.1} parent=1 // pred_region
      _
    $region13: #{lstm_model_beefy_forward.1} parent=1 // pred_fallthru
      _
    // Predicated region
    $region14: #{lstm_model_beefy_forward.1} parent=1 // pred_check
      _
    $region15: #{lstm_model_beefy_forward.1} parent=1 // pred_check_branch
      %32 = sbr.rel (0) target = $region17
    $region16: #{lstm_model_beefy_forward.1} parent=1 // pred_region
      _
    $region17: #{lstm_model_beefy_forward.1} parent=1 // pred_fallthru
      _
    // Predicated region
    $region18: #{lstm_model_beefy_forward.1} parent=1 // pred_check
      _
    $region19: #{lstm_model_beefy_forward.1} parent=1 // pred_check_branch
      %34 = sbr.rel (0) target = $region21
    $region20: #{lstm_model_beefy_forward.1} parent=1 // pred_region
      _
    $region21: #{lstm_model_beefy_forward.1} parent=1 // pred_fallthru
      _
    // Predicated region
    $region22: #{lstm_model_beefy_forward.1} parent=1 // pred_check
      _
    $region23: #{lstm_model_beefy_forward.1} parent=1 // pred_check_branch
      %36 = sbr.rel (0) target = $region25
    $region24: #{lstm_model_beefy_forward.1} parent=1 // pred_region
      _
    $region25: #{lstm_model_beefy_forward.1} parent=1 // pred_fallthru
      _
    // Predicated region
    $region26: #{lstm_model_beefy_forward.1} parent=1 // pred_check
      _
    $region27: #{lstm_model_beefy_forward.1} parent=1 // pred_check_branch
      %38 = sbr.rel (0) target = $region29
    $region28: #{lstm_model_beefy_forward.1} parent=1 // pred_region
      _
    $region29: #{lstm_model_beefy_forward.1} parent=1 // pred_fallthru
      _
    // Predicated region
    $region30: #{lstm_model_beefy_forward.1} parent=1 // pred_check
      _
    $region31: #{lstm_model_beefy_forward.1} parent=1 // pred_check_branch
      %40 = sbr.rel (0) target = $region33
    $region32: #{lstm_model_beefy_forward.1} parent=1 // pred_region
      _
    $region33: #{lstm_model_beefy_forward.1} parent=1 // pred_fallthru
      _
    // Predicated region
    $region34: #{lstm_model_beefy_forward.1} parent=1 // pred_check
      _
    $region35: #{lstm_model_beefy_forward.1} parent=1 // pred_check_branch
      %42 = sbr.rel (0) target = $region37
    $region36: #{lstm_model_beefy_forward.1} parent=1 // pred_region
      _
    $region37: #{lstm_model_beefy_forward.1} parent=1 // pred_fallthru
      _
    // Predicated region
    $region38: #{lstm_model_beefy_forward.1} parent=1 // pred_check
      _
    $region39: #{lstm_model_beefy_forward.1} parent=1 // pred_check_branch
      %44 = sbr.rel (0) target = $region41
    $region40: #{lstm_model_beefy_forward.1} parent=1 // pred_region
      _
    $region41: #{lstm_model_beefy_forward.1} parent=1 // pred_fallthru
      _
    // Predicated region
    $region42: #{lstm_model_beefy_forward.1} parent=1 // pred_check
      _
    $region43: #{lstm_model_beefy_forward.1} parent=1 // pred_check_branch
      %46 = sbr.rel (0) target = $region45
    $region44: #{lstm_model_beefy_forward.1} parent=1 // pred_region
      _
    $region45: #{lstm_model_beefy_forward.1} parent=1 // pred_fallthru
      _
    // Predicated region
    $region46: #{lstm_model_beefy_forward.1} parent=1 // pred_check
      _
    $region47: #{lstm_model_beefy_forward.1} parent=1 // pred_check_branch
      %48 = sbr.rel (0) target = $region49
    $region48: #{lstm_model_beefy_forward.1} parent=1 // pred_region
      _
    $region49: #{lstm_model_beefy_forward.1} parent=1 // pred_fallthru
      _
    // Predicated region
    $region50: #{lstm_model_beefy_forward.1} parent=1 // pred_check
      _
    $region51: #{lstm_model_beefy_forward.1} parent=1 // pred_check_branch
      %50 = sbr.rel (0) target = $region53
    $region52: #{lstm_model_beefy_forward.1} parent=1 // pred_region
      _
    $region53: #{lstm_model_beefy_forward.1} parent=1 // pred_fallthru
      _
    // Predicated region
    $region54: #{lstm_model_beefy_forward.1} parent=1 // pred_check
      _
    $region55: #{lstm_model_beefy_forward.1} parent=1 // pred_check_branch
      %52 = sbr.rel (0) target = $region57
    $region56: #{lstm_model_beefy_forward.1} parent=1 // pred_region
      _
    $region57: #{lstm_model_beefy_forward.1} parent=1 // pred_fallthru
      _
    // Predicated region
    $region58: #{lstm_model_beefy_forward.1} parent=1 // pred_check
      _
    $region59: #{lstm_model_beefy_forward.1} parent=1 // pred_check_branch
      %54 = sbr.rel (0) target = $region61
    $region60: #{lstm_model_beefy_forward.1} parent=1 // pred_region
      _
    $region61: #{lstm_model_beefy_forward.1} parent=1 // pred_fallthru
      _
    %v56 = vld [vmem:[%s0] sm:$0xff]
    %v57 = vld [vmem:[%s0 + $0x8] sm:$0xff]
    %v58 = vlaneseq
    %v59 = vand.u32 %v58, 127
    %v60 = vadd.s32 %v59, 128
    %61 = vset.pattern.permute.xlu0 0
    %62 = vperm.xlu0 %61, %v56
    %v63 = vpop.permute.xlu0 %62
    %64 = vset.pattern.permute.xlu0 0
    %65 = vperm.xlu0 %64, %v57
    %v66 = vpop.permute.xlu0 %65
    %vm67 = vcmp.eq.s32.totalorder %v59, %v63
    %vm68 = vcmp.eq.s32.totalorder %v60, %v63
    %vm69 = vcmp.eq.s32.totalorder %v59, %v66
    %vm70 = vcmp.eq.s32.totalorder %v60, %v66
    %v71 = vsel %vm67, 1, 0
    %v72 = vsel %vm68, 1, 0
    %v73 = vsel %vm69, 1, 0
    %v74 = vsel %vm70, 1, 0
    %v75 = vcvt.s32.f32 %v71
    %v76 = vcvt.s32.f32 %v72
    %v77 = vcvt.s32.f32 %v73
    %v78 = vcvt.s32.f32 %v74
    %v79 = vpack.c.bf16 %v77, %v75
    %v80 = vpack.c.bf16 %v78, %v76
    %v81 = vld [vmem:[%s1] sm:$0xf]
    %v82 = vld [vmem:[%s1 + $0x4] sm:$0xf]
    %v83 = vld [vmem:[%s1 + $0x8] sm:$0xf]
    %v84 = vld [vmem:[%s1 + $0xc] sm:$0xf]
    %v85 = vld [vmem:[%s1 + $0x10] sm:$0xf]
    %v86 = vld [vmem:[%s1 + $0x14] sm:$0xf]
    %v87 = vld [vmem:[%s1 + $0x18] sm:$0xf]
    %v88 = vld [vmem:[%s1 + $0x1c] sm:$0xf]
    %v89 = vld [vmem:[%s1 + $0x20] sm:$0xf]
    %v90 = vld [vmem:[%s1 + $0x24] sm:$0xf]
    %v91 = vld [vmem:[%s1 + $0x28] sm:$0xf]
    %v92 = vld [vmem:[%s1 + $0x2c] sm:$0xf]
    %v93 = vld [vmem:[%s1 + $0x30] sm:$0xf]
    %v94 = vld [vmem:[%s1 + $0x34] sm:$0xf]
    %v95 = vld [vmem:[%s1 + $0x38] sm:$0xf]
    %v96 = vld [vmem:[%s1 + $0x3c] sm:$0xf]
    %v97 = vld [vmem:[%s1 + $0x40] sm:$0xf]
    %v98 = vld [vmem:[%s1 + $0x44] sm:$0xf]
    %v99 = vld [vmem:[%s1 + $0x48] sm:$0xf]
    %v100 = vld [vmem:[%s1 + $0x4c] sm:$0xf]
    %v101 = vld [vmem:[%s1 + $0x50] sm:$0xf]
    %v102 = vld [vmem:[%s1 + $0x54] sm:$0xf]
    %v103 = vld [vmem:[%s1 + $0x58] sm:$0xf]
    %v104 = vld [vmem:[%s1 + $0x5c] sm:$0xf]
    %v105 = vld [vmem:[%s1 + $0x60] sm:$0xf]
    %v106 = vld [vmem:[%s1 + $0x64] sm:$0xf]
    %v107 = vld [vmem:[%s1 + $0x68] sm:$0xf]
    %v108 = vld [vmem:[%s1 + $0x6c] sm:$0xf]
    %v109 = vld [vmem:[%s1 + $0x70] sm:$0xf]
    %v110 = vld [vmem:[%s1 + $0x74] sm:$0xf]
    %v111 = vld [vmem:[%s1 + $0x78] sm:$0xf]
    %v112 = vld [vmem:[%s1 + $0x7c] sm:$0xf]
    %v145 = vunpack.c.l.b16 %v81
    %v146 = vunpack.c.l.b16 %v82
    %v147 = vunpack.c.l.b16 %v83
    %v148 = vunpack.c.l.b16 %v84
    %v149 = vunpack.c.l.b16 %v85
    %v150 = vunpack.c.l.b16 %v86
    %v151 = vunpack.c.l.b16 %v87
    %v152 = vunpack.c.l.b16 %v88
    %v153 = vunpack.c.l.b16 %v89
    %v154 = vunpack.c.l.b16 %v90
    %v155 = vunpack.c.l.b16 %v91
    %v156 = vunpack.c.l.b16 %v92
    %v157 = vunpack.c.l.b16 %v93
    %v158 = vunpack.c.l.b16 %v94
    %v159 = vunpack.c.l.b16 %v95
    %v160 = vunpack.c.l.b16 %v96
    %v161 = vunpack.c.l.b16 %v97
    %v162 = vunpack.c.l.b16 %v98
    %v163 = vunpack.c.l.b16 %v99
    %v164 = vunpack.c.l.b16 %v100
    %v165 = vunpack.c.l.b16 %v101
    %v166 = vunpack.c.l.b16 %v102
    %v167 = vunpack.c.l.b16 %v103
    %v168 = vunpack.c.l.b16 %v104
    %v169 = vunpack.c.l.b16 %v105
    %v170 = vunpack.c.l.b16 %v106
    %v171 = vunpack.c.l.b16 %v107
    %v172 = vunpack.c.l.b16 %v108
    %v173 = vunpack.c.l.b16 %v109
    %v174 = vunpack.c.l.b16 %v110
    %v175 = vunpack.c.l.b16 %v111
    %v176 = vunpack.c.l.b16 %v112
    %v177 = vpack.c.b16 %v146, %v145
    %v178 = vpack.c.b16 %v148, %v147
    %v179 = vpack.c.b16 %v150, %v149
    %v180 = vpack.c.b16 %v152, %v151
    %v181 = vpack.c.b16 %v154, %v153
    %v182 = vpack.c.b16 %v156, %v155
    %v183 = vpack.c.b16 %v158, %v157
    %v184 = vpack.c.b16 %v160, %v159
    %v185 = vpack.c.b16 %v162, %v161
    %v186 = vpack.c.b16 %v164, %v163
    %v187 = vpack.c.b16 %v166, %v165
    %v188 = vpack.c.b16 %v168, %v167
    %v189 = vpack.c.b16 %v170, %v169
    %v190 = vpack.c.b16 %v172, %v171
    %v191 = vpack.c.b16 %v174, %v173
    %v192 = vpack.c.b16 %v176, %v175
    %209 = vmatprep.subr.bf16.mxu0 0
    %210 = vmatpush1.bf16.msra.mxu0 %v177
    %211 = vmatprep.subr.bf16.mxu0 0
    %212 = vmatpush1.bf16.msra.mxu0 %v178
    %213 = vmatprep.subr.bf16.mxu0 0
    %214 = vmatpush1.bf16.msra.mxu0 %v179
    %215 = vmatprep.subr.bf16.mxu0 0
    %216 = vmatpush1.bf16.msra.mxu0 %v180
    %217 = vmatprep.subr.bf16.mxu0 0
    %218 = vmatpush1.bf16.msra.mxu0 %v181
    %219 = vmatprep.subr.bf16.mxu0 0
    %220 = vmatpush1.bf16.msra.mxu0 %v182
    %221 = vmatprep.subr.bf16.mxu0 0
    %222 = vmatpush1.bf16.msra.mxu0 %v183
    %223 = vmatprep.subr.bf16.mxu0 0
    %224 = vmatpush1.bf16.msra.mxu0 %v184
    %225 = vmatprep.subr.bf16.mxu0 0
    %226 = vmatpush1.bf16.msra.mxu0 %v185
    %227 = vmatprep.subr.bf16.mxu0 0
    %228 = vmatpush1.bf16.msra.mxu0 %v186
    %229 = vmatprep.subr.bf16.mxu0 0
    %230 = vmatpush1.bf16.msra.mxu0 %v187
    %231 = vmatprep.subr.bf16.mxu0 0
    %232 = vmatpush1.bf16.msra.mxu0 %v188
    %233 = vmatprep.subr.bf16.mxu0 0
    %234 = vmatpush1.bf16.msra.mxu0 %v189
    %235 = vmatprep.subr.bf16.mxu0 0
    %236 = vmatpush1.bf16.msra.mxu0 %v190
    %237 = vmatprep.subr.bf16.mxu0 0
    %238 = vmatpush1.bf16.msra.mxu0 %v191
    %239 = vmatprep.subr.bf16.mxu0 0
    %240 = vmatpush1.bf16.msra.mxu0 %v192
    %241 = vmatprep.mubr.bf16.mxu0 %v80
    %242 = vmatmul.mubr.bf16.gmra.mrb[0].mxu0 %v79
    %v243 = vpop.f32.mrb[0].mxu0
    %v244 = vadd.f32 0.0, %v243
    %v245 = vpop.f32.mrb[0].mxu0
    %v246 = vpop.f32.mrb[0].mxu0
    %v247 = vadd.f32 0.0, %v246
    %v248 = vpop.f32.mrb[0].mxu0
    %249 = vdwg.mxu0
    %v250 = vpack.c.bf16 %v247, %v244
    %v251 = vld [vmem:[%s2] sm:$0xf]
    %v252 = vld [vmem:[%s2 + $0x4] sm:$0xf]
    %v253 = vld [vmem:[%s2 + $0x8] sm:$0xf]
    %v254 = vld [vmem:[%s2 + $0xc] sm:$0xf]
    %v255 = vld [vmem:[%s2 + $0x10] sm:$0xf]
    %v256 = vld [vmem:[%s2 + $0x14] sm:$0xf]
    %v257 = vld [vmem:[%s2 + $0x18] sm:$0xf]
    %v258 = vld [vmem:[%s2 + $0x1c] sm:$0xf]
    %v259 = vld [vmem:[%s2 + $0x20] sm:$0xf]
    %v260 = vld [vmem:[%s2 + $0x24] sm:$0xf]
    %v261 = vld [vmem:[%s2 + $0x28] sm:$0xf]
    %v262 = vld [vmem:[%s2 + $0x2c] sm:$0xf]
    %v263 = vld [vmem:[%s2 + $0x30] sm:$0xf]
    %v264 = vld [vmem:[%s2 + $0x34] sm:$0xf]
    %v265 = vld [vmem:[%s2 + $0x38] sm:$0xf]
    %v266 = vld [vmem:[%s2 + $0x3c] sm:$0xf]
    %v267 = vld [vmem:[%s3] sm:$0x1]
    %v269 = vlaneseq
    %v270 = vshrl.u32 %v269, 7
    %v271 = vsub.s32 0, %v270
    %v272 = vrot.slane %v267, %v271
    %v290 = vunpack.c.l.b16 %v251
    %v291 = vunpack.c.l.b16 %v252
    %v292 = vunpack.c.l.b16 %v253
    %v293 = vunpack.c.l.b16 %v254
    %v294 = vunpack.c.l.b16 %v255
    %v295 = vunpack.c.l.b16 %v256
    %v296 = vunpack.c.l.b16 %v257
    %v297 = vunpack.c.l.b16 %v258
    %v298 = vunpack.c.l.b16 %v259
    %v299 = vunpack.c.l.b16 %v260
    %v300 = vunpack.c.l.b16 %v261
    %v301 = vunpack.c.l.b16 %v262
    %v302 = vunpack.c.l.b16 %v263
    %v303 = vunpack.c.l.b16 %v264
    %v304 = vunpack.c.l.b16 %v265
    %v305 = vunpack.c.l.b16 %v266
    %v306 = vpack.c.b16 %v291, %v290
    %v307 = vpack.c.b16 %v293, %v292
    %v308 = vpack.c.b16 %v295, %v294
    %v309 = vpack.c.b16 %v297, %v296
    %v310 = vpack.c.b16 %v299, %v298
    %v311 = vpack.c.b16 %v301, %v300
    %v312 = vpack.c.b16 %v303, %v302
    %v313 = vpack.c.b16 %v305, %v304
    %322 = vmatprep.subr.bf16.mxu0 0
    %323 = vmatpush1.bf16.msra.mxu0 %v306
    %324 = vmatprep.subr.bf16.mxu0 0
    %325 = vmatpush1.bf16.msra.mxu0 %v307
    %326 = vmatprep.subr.bf16.mxu0 0
    %327 = vmatpush1.bf16.msra.mxu0 %v308
    %328 = vmatprep.subr.bf16.mxu0 0
    %329 = vmatpush1.bf16.msra.mxu0 %v309
    %330 = vmatprep.subr.bf16.mxu0 0
    %331 = vmatpush1.bf16.msra.mxu0 %v310
    %332 = vmatprep.subr.bf16.mxu0 0
    %333 = vmatpush1.bf16.msra.mxu0 %v311
    %334 = vmatprep.subr.bf16.mxu0 0
    %335 = vmatpush1.bf16.msra.mxu0 %v312
    %336 = vmatprep.subr.bf16.mxu0 0
    %337 = vmatpush1.bf16.msra.mxu0 %v313
    %338 = vmatprep.subr.bf16.mxu0 0
    %339 = vmatpush1.bf16.msra.mxu0 0
    %340 = vmatprep.subr.bf16.mxu0 0
    %341 = vmatpush1.bf16.msra.mxu0 0
    %342 = vmatprep.subr.bf16.mxu0 0
    %343 = vmatpush1.bf16.msra.mxu0 0
    %344 = vmatprep.subr.bf16.mxu0 0
    %345 = vmatpush1.bf16.msra.mxu0 0
    %346 = vmatprep.subr.bf16.mxu0 0
    %347 = vmatpush1.bf16.msra.mxu0 0
    %348 = vmatprep.subr.bf16.mxu0 0
    %349 = vmatpush1.bf16.msra.mxu0 0
    %350 = vmatprep.subr.bf16.mxu0 0
    %351 = vmatpush1.bf16.msra.mxu0 0
    %352 = vmatprep.subr.bf16.mxu0 0
    %353 = vmatpush1.bf16.msra.mxu0 0
    %354 = vmatprep.mubr.bf16.mxu0 0
    %355 = vmatmul.mubr.bf16.gmra.mrb[0].mxu0 %v250
    %v356 = vpop.f32.mrb[0].mxu0
    %v357 = vadd.f32 %v272, %v356
    %v358 = vpop.f32.mrb[0].mxu0
    %v359 = vpop.f32.mrb[0].mxu0
    %v360 = vadd.f32 %v272, %v359
    %v361 = vpop.f32.mrb[0].mxu0
    %362 = vdwg.mxu0
    %v363 = vmul.f32 %v357, 0.5
    %v364 = vmul.f32 %v360, 0.5
    %v365 = vmul.f32 %v357, 0.70710677
    %v366 = vmul.f32 %v360, 0.70710677
    %v367 = verf.f32.pop %v365
    %v368 = verf.f32.pop %v366
    %v369 = vadd.f32 %v367, 1.0
    %v370 = vadd.f32 %v368, 1.0
    %v371 = vmul.f32 %v363, %v369
    %v372 = vmul.f32 %v364, %v370
    %v373 = vpack.c.bf16 %v372, %v371
    %v374 = vld [vmem:[%s4] sm:$0xf]
    %v375 = vld [vmem:[%s4 + $0x4] sm:$0xf]
    %v376 = vld [vmem:[%s4 + $0x8] sm:$0xf]
    %v377 = vld [vmem:[%s4 + $0xc] sm:$0xf]
    %v378 = vld [vmem:[%s4 + $0x10] sm:$0xf]
    %v379 = vld [vmem:[%s4 + $0x14] sm:$0xf]
    %v380 = vld [vmem:[%s4 + $0x18] sm:$0xf]
    %v381 = vld [vmem:[%s4 + $0x1c] sm:$0xf]
    %v382 = vld [vmem:[%s4 + $0x20] sm:$0xf]
    %v383 = vld [vmem:[%s4 + $0x24] sm:$0xf]
    %v384 = vld [vmem:[%s4 + $0x28] sm:$0xf]
    %v385 = vld [vmem:[%s4 + $0x2c] sm:$0xf]
    %v386 = vld [vmem:[%s4 + $0x30] sm:$0xf]
    %v387 = vld [vmem:[%s4 + $0x34] sm:$0xf]
    %v388 = vld [vmem:[%s4 + $0x38] sm:$0xf]
    %v389 = vld [vmem:[%s4 + $0x3c] sm:$0xf]
    %v390 = vld [vmem:[%s5] sm:$0x1]
    %v392 = vlaneseq
    %v393 = vshrl.u32 %v392, 7
    %v394 = vsub.s32 0, %v393
    %v395 = vrot.slane %v390, %v394
    %v413 = vunpack.c.l.b16 %v374
    %v414 = vunpack.c.l.b16 %v375
    %v415 = vunpack.c.l.b16 %v376
    %v416 = vunpack.c.l.b16 %v377
    %v417 = vunpack.c.l.b16 %v378
    %v418 = vunpack.c.l.b16 %v379
    %v419 = vunpack.c.l.b16 %v380
    %v420 = vunpack.c.l.b16 %v381
    %v421 = vunpack.c.l.b16 %v382
    %v422 = vunpack.c.l.b16 %v383
    %v423 = vunpack.c.l.b16 %v384
    %v424 = vunpack.c.l.b16 %v385
    %v425 = vunpack.c.l.b16 %v386
    %v426 = vunpack.c.l.b16 %v387
    %v427 = vunpack.c.l.b16 %v388
    %v428 = vunpack.c.l.b16 %v389
    %v429 = vpack.c.b16 %v414, %v413
    %v430 = vpack.c.b16 %v416, %v415
    %v431 = vpack.c.b16 %v418, %v417
    %v432 = vpack.c.b16 %v420, %v419
    %v433 = vpack.c.b16 %v422, %v421
    %v434 = vpack.c.b16 %v424, %v423
    %v435 = vpack.c.b16 %v426, %v425
    %v436 = vpack.c.b16 %v428, %v427
    %445 = vmatprep.subr.bf16.mxu0 0
    %446 = vmatpush1.bf16.msra.mxu0 %v429
    %447 = vmatprep.subr.bf16.mxu0 0
    %448 = vmatpush1.bf16.msra.mxu0 %v430
    %449 = vmatprep.subr.bf16.mxu0 0
    %450 = vmatpush1.bf16.msra.mxu0 %v431
    %451 = vmatprep.subr.bf16.mxu0 0
    %452 = vmatpush1.bf16.msra.mxu0 %v432
    %453 = vmatprep.subr.bf16.mxu0 0
    %454 = vmatpush1.bf16.msra.mxu0 %v433
    %455 = vmatprep.subr.bf16.mxu0 0
    %456 = vmatpush1.bf16.msra.mxu0 %v434
    %457 = vmatprep.subr.bf16.mxu0 0
    %458 = vmatpush1.bf16.msra.mxu0 %v435
    %459 = vmatprep.subr.bf16.mxu0 0
    %460 = vmatpush1.bf16.msra.mxu0 %v436
    %461 = vmatprep.subr.bf16.mxu0 0
    %462 = vmatpush1.bf16.msra.mxu0 0
    %463 = vmatprep.subr.bf16.mxu0 0
    %464 = vmatpush1.bf16.msra.mxu0 0
    %465 = vmatprep.subr.bf16.mxu0 0
    %466 = vmatpush1.bf16.msra.mxu0 0
    %467 = vmatprep.subr.bf16.mxu0 0
    %468 = vmatpush1.bf16.msra.mxu0 0
    %469 = vmatprep.subr.bf16.mxu0 0
    %470 = vmatpush1.bf16.msra.mxu0 0
    %471 = vmatprep.subr.bf16.mxu0 0
    %472 = vmatpush1.bf16.msra.mxu0 0
    %473 = vmatprep.subr.bf16.mxu0 0
    %474 = vmatpush1.bf16.msra.mxu0 0
    %475 = vmatprep.subr.bf16.mxu0 0
    %476 = vmatpush1.bf16.msra.mxu0 0
    %477 = vmatprep.mubr.bf16.mxu0 0
    %478 = vmatmul.mubr.bf16.gmra.mrb[0].mxu0 %v373
    %v479 = vpop.f32.mrb[0].mxu0
    %v480 = vadd.f32 %v395, %v479
    %v481 = vpop.f32.mrb[0].mxu0
    %v482 = vpop.f32.mrb[0].mxu0
    %v483 = vadd.f32 %v395, %v482
    %v484 = vpop.f32.mrb[0].mxu0
    %485 = vdwg.mxu0
    %v486 = vpack.c.bf16 %v483, %v480
    %v487 = vld [vmem:[%s6] sm:$0xff]
    %v488 = vld [vmem:[%s6 + $0x8] sm:$0xff]
    %v489 = vld [vmem:[%s6 + $0x10] sm:$0xff]
    %v490 = vld [vmem:[%s6 + $0x18] sm:$0xff]
    %v491 = vld [vmem:[%s6 + $0x20] sm:$0xff]
    %v492 = vld [vmem:[%s6 + $0x28] sm:$0xff]
    %v493 = vld [vmem:[%s6 + $0x30] sm:$0xff]
    %v494 = vld [vmem:[%s6 + $0x38] sm:$0xff]
    %v495 = vld [vmem:[%s6 + $0x40] sm:$0xff]
    %v496 = vld [vmem:[%s6 + $0x48] sm:$0xff]
    %v497 = vld [vmem:[%s6 + $0x50] sm:$0xff]
    %v498 = vld [vmem:[%s6 + $0x58] sm:$0xff]
    %v499 = vld [vmem:[%s6 + $0x60] sm:$0xff]
    %v500 = vld [vmem:[%s6 + $0x68] sm:$0xff]
    %v501 = vld [vmem:[%s6 + $0x70] sm:$0xff]
    %v502 = vld [vmem:[%s6 + $0x78] sm:$0xff]
    %v503 = vld [vmem:[%s6 + $0x80] sm:$0xff]
    %v504 = vld [vmem:[%s6 + $0x88] sm:$0xff]
    %v505 = vld [vmem:[%s6 + $0x90] sm:$0xff]
    %v506 = vld [vmem:[%s6 + $0x98] sm:$0xff]
    %v507 = vld [vmem:[%s6 + $0xa0] sm:$0xff]
    %v508 = vld [vmem:[%s6 + $0xa8] sm:$0xff]
    %v509 = vld [vmem:[%s6 + $0xb0] sm:$0xff]
    %v510 = vld [vmem:[%s6 + $0xb8] sm:$0xff]
    %v511 = vld [vmem:[%s6 + $0xc0] sm:$0xff]
    %v512 = vld [vmem:[%s6 + $0xc8] sm:$0xff]
    %v513 = vld [vmem:[%s6 + $0xd0] sm:$0xff]
    %v514 = vld [vmem:[%s6 + $0xd8] sm:$0xff]
    %v515 = vld [vmem:[%s6 + $0xe0] sm:$0xff]
    %v516 = vld [vmem:[%s6 + $0xe8] sm:$0xff]
    %v517 = vld [vmem:[%s6 + $0xf0] sm:$0xff]
    %v518 = vld [vmem:[%s6 + $0xf8] sm:$0xff]
    %v519 = vld [vmem:[%s8] sm:$0xf]
    %v521 = vlaneseq
    %v522 = vshrl.u32 %v521, 7
    %v523 = vsub.s32 0, %v522
    %v524 = vrot.slane %v519, %v523
    %v525 = vlaneseq
    %v526 = vshrl.u32 %v525, 7
    %v527 = vsub.s32 1, %v526
    %v528 = vrot.slane %v519, %v527
    %v529 = vlaneseq
    %v530 = vshrl.u32 %v529, 7
    %v531 = vsub.s32 2, %v530
    %v532 = vrot.slane %v519, %v531
    %v533 = vlaneseq
    %v534 = vshrl.u32 %v533, 7
    %v535 = vsub.s32 3, %v534
    %v536 = vrot.slane %v519, %v535
    %v573 = vunpack.c.l.b16 %v487
    %v574 = vunpack.c.h.b16 %v487
    %v575 = vunpack.c.l.b16 %v488
    %v576 = vunpack.c.h.b16 %v488
    %v577 = vunpack.c.l.b16 %v489
    %v578 = vunpack.c.h.b16 %v489
    %v579 = vunpack.c.l.b16 %v490
    %v580 = vunpack.c.h.b16 %v490
    %v581 = vunpack.c.l.b16 %v491
    %v582 = vunpack.c.h.b16 %v491
    %v583 = vunpack.c.l.b16 %v492
    %v584 = vunpack.c.h.b16 %v492
    %v585 = vunpack.c.l.b16 %v493
    %v586 = vunpack.c.h.b16 %v493
    %v587 = vunpack.c.l.b16 %v494
    %v588 = vunpack.c.h.b16 %v494
    %v589 = vunpack.c.l.b16 %v495
    %v590 = vunpack.c.h.b16 %v495
    %v591 = vunpack.c.l.b16 %v496
    %v592 = vunpack.c.h.b16 %v496
    %v593 = vunpack.c.l.b16 %v497
    %v594 = vunpack.c.h.b16 %v497
    %v595 = vunpack.c.l.b16 %v498
    %v596 = vunpack.c.h.b16 %v498
    %v597 = vunpack.c.l.b16 %v499
    %v598 = vunpack.c.h.b16 %v499
    %v599 = vunpack.c.l.b16 %v500
    %v600 = vunpack.c.h.b16 %v500
    %v601 = vunpack.c.l.b16 %v501
    %v602 = vunpack.c.h.b16 %v501
    %v603 = vunpack.c.l.b16 %v502
    %v604 = vunpack.c.h.b16 %v502
    %v605 = vunpack.c.l.b16 %v503
    %v606 = vunpack.c.h.b16 %v503
    %v607 = vunpack.c.l.b16 %v504
    %v608 = vunpack.c.h.b16 %v504
    %v609 = vunpack.c.l.b16 %v505
    %v610 = vunpack.c.h.b16 %v505
    %v611 = vunpack.c.l.b16 %v506
    %v612 = vunpack.c.h.b16 %v506
    %v613 = vunpack.c.l.b16 %v507
    %v614 = vunpack.c.h.b16 %v507
    %v615 = vunpack.c.l.b16 %v508
    %v616 = vunpack.c.h.b16 %v508
    %v617 = vunpack.c.l.b16 %v509
    %v618 = vunpack.c.h.b16 %v509
    %v619 = vunpack.c.l.b16 %v510
    %v620 = vunpack.c.h.b16 %v510
    %v621 = vunpack.c.l.b16 %v511
    %v622 = vunpack.c.h.b16 %v511
    %v623 = vunpack.c.l.b16 %v512
    %v624 = vunpack.c.h.b16 %v512
    %v625 = vunpack.c.l.b16 %v513
    %v626 = vunpack.c.h.b16 %v513
    %v627 = vunpack.c.l.b16 %v514
    %v628 = vunpack.c.h.b16 %v514
    %v629 = vunpack.c.l.b16 %v515
    %v630 = vunpack.c.h.b16 %v515
    %v631 = vunpack.c.l.b16 %v516
    %v632 = vunpack.c.h.b16 %v516
    %v633 = vunpack.c.l.b16 %v517
    %v634 = vunpack.c.h.b16 %v517
    %v635 = vunpack.c.l.b16 %v518
    %v636 = vunpack.c.h.b16 %v518
    %v637 = vpack.c.b16 %v577, %v573
    %v638 = vpack.c.b16 %v578, %v574
    %v639 = vpack.c.b16 %v579, %v575
    %v640 = vpack.c.b16 %v580, %v576
    %v641 = vpack.c.b16 %v585, %v581
    %v642 = vpack.c.b16 %v586, %v582
    %v643 = vpack.c.b16 %v587, %v583
    %v644 = vpack.c.b16 %v588, %v584
    %v645 = vpack.c.b16 %v593, %v589
    %v646 = vpack.c.b16 %v594, %v590
    %v647 = vpack.c.b16 %v595, %v591
    %v648 = vpack.c.b16 %v596, %v592
    %v649 = vpack.c.b16 %v601, %v597
    %v650 = vpack.c.b16 %v602, %v598
    %v651 = vpack.c.b16 %v603, %v599
    %v652 = vpack.c.b16 %v604, %v600
    %v653 = vpack.c.b16 %v609, %v605
    %v654 = vpack.c.b16 %v610, %v606
    %v655 = vpack.c.b16 %v611, %v607
    %v656 = vpack.c.b16 %v612, %v608
    %v657 = vpack.c.b16 %v617, %v613
    %v658 = vpack.c.b16 %v618, %v614
    %v659 = vpack.c.b16 %v619, %v615
    %v660 = vpack.c.b16 %v620, %v616
    %v661 = vpack.c.b16 %v625, %v621
    %v662 = vpack.c.b16 %v626, %v622
    %v663 = vpack.c.b16 %v627, %v623
    %v664 = vpack.c.b16 %v628, %v624
    %v665 = vpack.c.b16 %v633, %v629
    %v666 = vpack.c.b16 %v634, %v630
    %v667 = vpack.c.b16 %v635, %v631
    %v668 = vpack.c.b16 %v636, %v632
    %701 = vmatprep.subr.bf16.mxu0 %v638
    %702 = vmatpush1.bf16.msra.mxu0 %v637
    %703 = vmatprep.subr.bf16.mxu0 %v642
    %704 = vmatpush1.bf16.msra.mxu0 %v641
    %705 = vmatprep.subr.bf16.mxu0 %v646
    %706 = vmatpush1.bf16.msra.mxu0 %v645
    %707 = vmatprep.subr.bf16.mxu0 %v650
    %708 = vmatpush1.bf16.msra.mxu0 %v649
    %709 = vmatprep.subr.bf16.mxu0 %v654
    %710 = vmatpush1.bf16.msra.mxu0 %v653
    %711 = vmatprep.subr.bf16.mxu0 %v658
    %712 = vmatpush1.bf16.msra.mxu0 %v657
    %713 = vmatprep.subr.bf16.mxu0 %v662
    %714 = vmatpush1.bf16.msra.mxu0 %v661
    %715 = vmatprep.subr.bf16.mxu0 %v666
    %716 = vmatpush1.bf16.msra.mxu0 %v665
    %717 = vmatprep.subr.bf16.mxu0 0
    %718 = vmatpush1.bf16.msra.mxu0 0
    %719 = vmatprep.subr.bf16.mxu0 0
    %720 = vmatpush1.bf16.msra.mxu0 0
    %721 = vmatprep.subr.bf16.mxu0 0
    %722 = vmatpush1.bf16.msra.mxu0 0
    %723 = vmatprep.subr.bf16.mxu0 0
    %724 = vmatpush1.bf16.msra.mxu0 0
    %725 = vmatprep.subr.bf16.mxu0 0
    %726 = vmatpush1.bf16.msra.mxu0 0
    %727 = vmatprep.subr.bf16.mxu0 0
    %728 = vmatpush1.bf16.msra.mxu0 0
    %729 = vmatprep.subr.bf16.mxu0 0
    %730 = vmatpush1.bf16.msra.mxu0 0
    %731 = vmatprep.subr.bf16.mxu0 0
    %732 = vmatpush1.bf16.msra.mxu0 0
    %733 = vmatprep.mubr.bf16.mxu0 0
    %734 = vmatmul.mubr.bf16.gmra.mrb[0].mxu0 %v486
    %v735 = vpop.f32.mrb[0].mxu0
    %v736 = vadd.f32 %v524, %v735
    %v737 = vpop.f32.mrb[0].mxu0
    %v738 = vadd.f32 %v528, %v737
    %v739 = vpop.f32.mrb[0].mxu0
    %v740 = vadd.f32 %v524, %v739
    %v741 = vpop.f32.mrb[0].mxu0
    %v742 = vadd.f32 %v528, %v741
    %743 = vdwg.mxu0
    %744 = vmatprep.subr.bf16.mxu0 %v640
    %745 = vmatpush1.bf16.msra.mxu0 %v639
    %746 = vmatprep.subr.bf16.mxu0 %v644
    %747 = vmatpush1.bf16.msra.mxu0 %v643
    %748 = vmatprep.subr.bf16.mxu0 %v648
    %749 = vmatpush1.bf16.msra.mxu0 %v647
    %750 = vmatprep.subr.bf16.mxu0 %v652
    %751 = vmatpush1.bf16.msra.mxu0 %v651
    %752 = vmatprep.subr.bf16.mxu0 %v656
    %753 = vmatpush1.bf16.msra.mxu0 %v655
    %754 = vmatprep.subr.bf16.mxu0 %v660
    %755 = vmatpush1.bf16.msra.mxu0 %v659
    %756 = vmatprep.subr.bf16.mxu0 %v664
    %757 = vmatpush1.bf16.msra.mxu0 %v663
    %758 = vmatprep.subr.bf16.mxu0 %v668
    %759 = vmatpush1.bf16.msra.mxu0 %v667
    %760 = vmatprep.subr.bf16.mxu0 0
    %761 = vmatpush1.bf16.msra.mxu0 0
    %762 = vmatprep.subr.bf16.mxu0 0
    %763 = vmatpush1.bf16.msra.mxu0 0
    %764 = vmatprep.subr.bf16.mxu0 0
    %765 = vmatpush1.bf16.msra.mxu0 0
    %766 = vmatprep.subr.bf16.mxu0 0
    %767 = vmatpush1.bf16.msra.mxu0 0
    %768 = vmatprep.subr.bf16.mxu0 0
    %769 = vmatpush1.bf16.msra.mxu0 0
    %770 = vmatprep.subr.bf16.mxu0 0
    %771 = vmatpush1.bf16.msra.mxu0 0
    %772 = vmatprep.subr.bf16.mxu0 0
    %773 = vmatpush1.bf16.msra.mxu0 0
    %774 = vmatprep.subr.bf16.mxu0 0
    %775 = vmatpush1.bf16.msra.mxu0 0
    %776 = vmatprep.mubr.bf16.mxu0 0
    %777 = vmatmul.mubr.bf16.gmra.mrb[0].mxu0 %v486
    %v778 = vpop.f32.mrb[0].mxu0
    %v779 = vadd.f32 %v532, %v778
    %v780 = vpop.f32.mrb[0].mxu0
    %v781 = vadd.f32 %v536, %v780
    %v782 = vpop.f32.mrb[0].mxu0
    %v783 = vadd.f32 %v532, %v782
    %v784 = vpop.f32.mrb[0].mxu0
    %v785 = vadd.f32 %v536, %v784
    %786 = vdwg.mxu0
    %v787 = vld [vmem:[%s9] sm:$0x3]
    %v788 = vld [vmem:[%s10] sm:$0x3]
    %v789 = vpack.c.bf16 %v787, %v787
    %v790 = vld [vmem:[%s7] sm:$0xff]
    %v791 = vld [vmem:[%s7 + $0x8] sm:$0xff]
    %v792 = vld [vmem:[%s7 + $0x10] sm:$0xff]
    %v793 = vld [vmem:[%s7 + $0x18] sm:$0xff]
    %v794 = vld [vmem:[%s7 + $0x20] sm:$0xff]
    %v795 = vld [vmem:[%s7 + $0x28] sm:$0xff]
    %v796 = vld [vmem:[%s7 + $0x30] sm:$0xff]
    %v797 = vld [vmem:[%s7 + $0x38] sm:$0xff]
    %v798 = vld [vmem:[%s7 + $0x40] sm:$0xff]
    %v799 = vld [vmem:[%s7 + $0x48] sm:$0xff]
    %v800 = vld [vmem:[%s7 + $0x50] sm:$0xff]
    %v801 = vld [vmem:[%s7 + $0x58] sm:$0xff]
    %v802 = vld [vmem:[%s7 + $0x60] sm:$0xff]
    %v803 = vld [vmem:[%s7 + $0x68] sm:$0xff]
    %v804 = vld [vmem:[%s7 + $0x70] sm:$0xff]
    %v805 = vld [vmem:[%s7 + $0x78] sm:$0xff]
    %v806 = vld [vmem:[%s7 + $0x80] sm:$0xff]
    %v807 = vld [vmem:[%s7 + $0x88] sm:$0xff]
    %v808 = vld [vmem:[%s7 + $0x90] sm:$0xff]
    %v809 = vld [vmem:[%s7 + $0x98] sm:$0xff]
    %v810 = vld [vmem:[%s7 + $0xa0] sm:$0xff]
    %v811 = vld [vmem:[%s7 + $0xa8] sm:$0xff]
    %v812 = vld [vmem:[%s7 + $0xb0] sm:$0xff]
    %v813 = vld [vmem:[%s7 + $0xb8] sm:$0xff]
    %v814 = vld [vmem:[%s7 + $0xc0] sm:$0xff]
    %v815 = vld [vmem:[%s7 + $0xc8] sm:$0xff]
    %v816 = vld [vmem:[%s7 + $0xd0] sm:$0xff]
    %v817 = vld [vmem:[%s7 + $0xd8] sm:$0xff]
    %v818 = vld [vmem:[%s7 + $0xe0] sm:$0xff]
    %v819 = vld [vmem:[%s7 + $0xe8] sm:$0xff]
    %v820 = vld [vmem:[%s7 + $0xf0] sm:$0xff]
    %v821 = vld [vmem:[%s7 + $0xf8] sm:$0xff]
    %v854 = vunpack.c.l.b16 %v790
    %v855 = vunpack.c.h.b16 %v790
    %v856 = vunpack.c.l.b16 %v791
    %v857 = vunpack.c.h.b16 %v791
    %v858 = vunpack.c.l.b16 %v792
    %v859 = vunpack.c.h.b16 %v792
    %v860 = vunpack.c.l.b16 %v793
    %v861 = vunpack.c.h.b16 %v793
    %v862 = vunpack.c.l.b16 %v794
    %v863 = vunpack.c.h.b16 %v794
    %v864 = vunpack.c.l.b16 %v795
    %v865 = vunpack.c.h.b16 %v795
    %v866 = vunpack.c.l.b16 %v796
    %v867 = vunpack.c.h.b16 %v796
    %v868 = vunpack.c.l.b16 %v797
    %v869 = vunpack.c.h.b16 %v797
    %v870 = vunpack.c.l.b16 %v798
    %v871 = vunpack.c.h.b16 %v798
    %v872 = vunpack.c.l.b16 %v799
    %v873 = vunpack.c.h.b16 %v799
    %v874 = vunpack.c.l.b16 %v800
    %v875 = vunpack.c.h.b16 %v800
    %v876 = vunpack.c.l.b16 %v801
    %v877 = vunpack.c.h.b16 %v801
    %v878 = vunpack.c.l.b16 %v802
    %v879 = vunpack.c.h.b16 %v802
    %v880 = vunpack.c.l.b16 %v803
    %v881 = vunpack.c.h.b16 %v803
    %v882 = vunpack.c.l.b16 %v804
    %v883 = vunpack.c.h.b16 %v804
    %v884 = vunpack.c.l.b16 %v805
    %v885 = vunpack.c.h.b16 %v805
    %v886 = vunpack.c.l.b16 %v806
    %v887 = vunpack.c.h.b16 %v806
    %v888 = vunpack.c.l.b16 %v807
    %v889 = vunpack.c.h.b16 %v807
    %v890 = vunpack.c.l.b16 %v808
    %v891 = vunpack.c.h.b16 %v808
    %v892 = vunpack.c.l.b16 %v809
    %v893 = vunpack.c.h.b16 %v809
    %v894 = vunpack.c.l.b16 %v810
    %v895 = vunpack.c.h.b16 %v810
    %v896 = vunpack.c.l.b16 %v811
    %v897 = vunpack.c.h.b16 %v811
    %v898 = vunpack.c.l.b16 %v812
    %v899 = vunpack.c.h.b16 %v812
    %v900 = vunpack.c.l.b16 %v813
    %v901 = vunpack.c.h.b16 %v813
    %v902 = vunpack.c.l.b16 %v814
    %v903 = vunpack.c.h.b16 %v814
    %v904 = vunpack.c.l.b16 %v815
    %v905 = vunpack.c.h.b16 %v815
    %v906 = vunpack.c.l.b16 %v816
    %v907 = vunpack.c.h.b16 %v816
    %v908 = vunpack.c.l.b16 %v817
    %v909 = vunpack.c.h.b16 %v817
    %v910 = vunpack.c.l.b16 %v818
    %v911 = vunpack.c.h.b16 %v818
    %v912 = vunpack.c.l.b16 %v819
    %v913 = vunpack.c.h.b16 %v819
    %v914 = vunpack.c.l.b16 %v820
    %v915 = vunpack.c.h.b16 %v820
    %v916 = vunpack.c.l.b16 %v821
    %v917 = vunpack.c.h.b16 %v821
    %v918 = vpack.c.b16 %v858, %v854
    %v919 = vpack.c.b16 %v859, %v855
    %v920 = vpack.c.b16 %v860, %v856
    %v921 = vpack.c.b16 %v861, %v857
    %v922 = vpack.c.b16 %v866, %v862
    %v923 = vpack.c.b16 %v867, %v863
    %v924 = vpack.c.b16 %v868, %v864
    %v925 = vpack.c.b16 %v869, %v865
    %v926 = vpack.c.b16 %v874, %v870
    %v927 = vpack.c.b16 %v875, %v871
    %v928 = vpack.c.b16 %v876, %v872
    %v929 = vpack.c.b16 %v877, %v873
    %v930 = vpack.c.b16 %v882, %v878
    %v931 = vpack.c.b16 %v883, %v879
    %v932 = vpack.c.b16 %v884, %v880
    %v933 = vpack.c.b16 %v885, %v881
    %v934 = vpack.c.b16 %v890, %v886
    %v935 = vpack.c.b16 %v891, %v887
    %v936 = vpack.c.b16 %v892, %v888
    %v937 = vpack.c.b16 %v893, %v889
    %v938 = vpack.c.b16 %v898, %v894
    %v939 = vpack.c.b16 %v899, %v895
    %v940 = vpack.c.b16 %v900, %v896
    %v941 = vpack.c.b16 %v901, %v897
    %v942 = vpack.c.b16 %v906, %v902
    %v943 = vpack.c.b16 %v907, %v903
    %v944 = vpack.c.b16 %v908, %v904
    %v945 = vpack.c.b16 %v909, %v905
    %v946 = vpack.c.b16 %v914, %v910
    %v947 = vpack.c.b16 %v915, %v911
    %v948 = vpack.c.b16 %v916, %v912
    %v949 = vpack.c.b16 %v917, %v913
    %982 = vmatprep.subr.bf16.mxu0 %v919
    %983 = vmatpush1.bf16.msra.mxu0 %v918
    %984 = vmatprep.subr.bf16.mxu0 %v923
    %985 = vmatpush1.bf16.msra.mxu0 %v922
    %986 = vmatprep.subr.bf16.mxu0 %v927
    %987 = vmatpush1.bf16.msra.mxu0 %v926
    %988 = vmatprep.subr.bf16.mxu0 %v931
    %989 = vmatpush1.bf16.msra.mxu0 %v930
    %990 = vmatprep.subr.bf16.mxu0 %v935
    %991 = vmatpush1.bf16.msra.mxu0 %v934
    %992 = vmatprep.subr.bf16.mxu0 %v939
    %993 = vmatpush1.bf16.msra.mxu0 %v938
    %994 = vmatprep.subr.bf16.mxu0 %v943
    %995 = vmatpush1.bf16.msra.mxu0 %v942
    %996 = vmatprep.subr.bf16.mxu0 %v947
    %997 = vmatpush1.bf16.msra.mxu0 %v946
    %998 = vmatprep.subr.bf16.mxu0 0
    %999 = vmatpush1.bf16.msra.mxu0 0
    %1000 = vmatprep.subr.bf16.mxu0 0
    %1001 = vmatpush1.bf16.msra.mxu0 0
    %1002 = vmatprep.subr.bf16.mxu0 0
    %1003 = vmatpush1.bf16.msra.mxu0 0
    %1004 = vmatprep.subr.bf16.mxu0 0
    %1005 = vmatpush1.bf16.msra.mxu0 0
    %1006 = vmatprep.subr.bf16.mxu0 0
    %1007 = vmatpush1.bf16.msra.mxu0 0
    %1008 = vmatprep.subr.bf16.mxu0 0
    %1009 = vmatpush1.bf16.msra.mxu0 0
    %1010 = vmatprep.subr.bf16.mxu0 0
    %1011 = vmatpush1.bf16.msra.mxu0 0
    %1012 = vmatprep.subr.bf16.mxu0 0
    %1013 = vmatpush1.bf16.msra.mxu0 0
    %1014 = vmatprep.mubr.bf16.mxu0 0
    %1015 = vmatmul.mubr.bf16.gmra.mrb[0].mxu0 %v789
    %v1016 = vpop.f32.mrb[0].mxu0
    %v1017 = vadd.f32 0.0, %v1016
    %v1018 = vpop.f32.mrb[0].mxu0
    %v1019 = vadd.f32 0.0, %v1018
    %v1020 = vpop.f32.mrb[0].mxu0
    %v1021 = vpop.f32.mrb[0].mxu0
    %1022 = vdwg.mxu0
    %1023 = vmatprep.subr.bf16.mxu0 %v921
    %1024 = vmatpush1.bf16.msra.mxu0 %v920
    %1025 = vmatprep.subr.bf16.mxu0 %v925
    %1026 = vmatpush1.bf16.msra.mxu0 %v924
    %1027 = vmatprep.subr.bf16.mxu0 %v929
    %1028 = vmatpush1.bf16.msra.mxu0 %v928
    %1029 = vmatprep.subr.bf16.mxu0 %v933
    %1030 = vmatpush1.bf16.msra.mxu0 %v932
    %1031 = vmatprep.subr.bf16.mxu0 %v937
    %1032 = vmatpush1.bf16.msra.mxu0 %v936
    %1033 = vmatprep.subr.bf16.mxu0 %v941
    %1034 = vmatpush1.bf16.msra.mxu0 %v940
    %1035 = vmatprep.subr.bf16.mxu0 %v945
    %1036 = vmatpush1.bf16.msra.mxu0 %v944
    %1037 = vmatprep.subr.bf16.mxu0 %v949
    %1038 = vmatpush1.bf16.msra.mxu0 %v948
    %1039 = vmatprep.subr.bf16.mxu0 0
    %1040 = vmatpush1.bf16.msra.mxu0 0
    %1041 = vmatprep.subr.bf16.mxu0 0
    %1042 = vmatpush1.bf16.msra.mxu0 0
    %1043 = vmatprep.subr.bf16.mxu0 0
    %1044 = vmatpush1.bf16.msra.mxu0 0
    %1045 = vmatprep.subr.bf16.mxu0 0
    %1046 = vmatpush1.bf16.msra.mxu0 0
    %1047 = vmatprep.subr.bf16.mxu0 0
    %1048 = vmatpush1.bf16.msra.mxu0 0
    %1049 = vmatprep.subr.bf16.mxu0 0
    %1050 = vmatpush1.bf16.msra.mxu0 0
    %1051 = vmatprep.subr.bf16.mxu0 0
    %1052 = vmatpush1.bf16.msra.mxu0 0
    %1053 = vmatprep.subr.bf16.mxu0 0
    %1054 = vmatpush1.bf16.msra.mxu0 0
    %1055 = vmatprep.mubr.bf16.mxu0 0
    %1056 = vmatmul.mubr.bf16.gmra.mrb[0].mxu0 %v789
    %v1057 = vpop.f32.mrb[0].mxu0
    %v1058 = vadd.f32 0.0, %v1057
    %v1059 = vpop.f32.mrb[0].mxu0
    %v1060 = vadd.f32 0.0, %v1059
    %v1061 = vpop.f32.mrb[0].mxu0
    %v1062 = vpop.f32.mrb[0].mxu0
    %1063 = vdwg.mxu0
    %v1068 = vrot.slane %v1017, 1
    %v1069 = vrot.slane %v1019, 1
    %v1070 = vrot.slane %v1058, 1
    %v1071 = vrot.slane %v1060, 1
    %v1080 = vadd.f32 %v736, %v1017
    %v1081 = vadd.f32 %v738, %v1019
    %v1082 = vadd.f32 %v779, %v1058
    %v1083 = vadd.f32 %v781, %v1060
    %v1084 = vadd.f32 %v740, %v1068
    %v1085 = vadd.f32 %v742, %v1069
    %v1086 = vadd.f32 %v783, %v1070
    %v1087 = vadd.f32 %v785, %v1071
    %v1088 = vxor.u32 %v1080, 2147483648
    %v1089 = vxor.u32 %v1081, 2147483648
    %v1090 = vxor.u32 %v1082, 2147483648
    %v1091 = vxor.u32 %v1084, 2147483648
    %v1092 = vxor.u32 %v1085, 2147483648
    %v1093 = vxor.u32 %v1086, 2147483648
    %v1094 = vmul.f32 %v1088, 1.442695
    %v1095 = vpow.pop %v1094
    %v1096 = vmul.f32 %v1089, 1.442695
    %v1097 = vpow.pop %v1096
    %v1098 = vmul.f32 %v1090, 1.442695
    %v1099 = vpow.pop %v1098
    %v1100 = vmul.f32 %v1091, 1.442695
    %v1101 = vpow.pop %v1100
    %v1102 = vmul.f32 %v1092, 1.442695
    %v1103 = vpow.pop %v1102
    %v1104 = vmul.f32 %v1093, 1.442695
    %v1105 = vpow.pop %v1104
    %v1106 = vadd.f32 %v1095, 1.0
    %v1107 = vadd.f32 %v1097, 1.0
    %v1108 = vadd.f32 %v1099, 1.0
    %v1109 = vadd.f32 %v1101, 1.0
    %v1110 = vadd.f32 %v1103, 1.0
    %v1111 = vadd.f32 %v1105, 1.0
    %v1112 = vrcp.pop %v1106
    %v1113 = vmul.f32 1.0, %v1112
    %v1114 = vrcp.pop %v1107
    %v1115 = vmul.f32 1.0, %v1114
    %v1116 = vrcp.pop %v1108
    %v1117 = vmul.f32 1.0, %v1116
    %v1118 = vrcp.pop %v1109
    %v1119 = vmul.f32 1.0, %v1118
    %v1120 = vrcp.pop %v1110
    %v1121 = vmul.f32 1.0, %v1120
    %v1122 = vrcp.pop %v1111
    %v1123 = vmul.f32 1.0, %v1122
    %v1124 = vtanh.pop %v1083
    %v1125 = vtanh.pop %v1087
    %v1127 = vrot.slane %v788, 1
    %v1130 = vmul.f32 %v1115, %v788
    %v1131 = vmul.f32 %v1121, %v1127
    %v1132 = vmul.f32 %v1113, %v1124
    %v1133 = vmul.f32 %v1119, %v1125
    %v1134 = vadd.f32 %v1130, %v1132
    %v1135 = vadd.f32 %v1131, %v1133
    %v1136 = vtanh.pop %v1134
    %v1137 = vtanh.pop %v1135
    %v1138 = vmul.f32 %v1117, %v1136
    %v1139 = vmul.f32 %v1123, %v1137
    %1140 = vst [vmem:[#allocation2] sm:$0x1] %v1138
    %1141 = vst [vmem:[#allocation2 + $0x8] sm:$0x1] %v1139
    %v1142 = vpack.c.bf16 %v1138, %v1138
    %v1143 = vpack.c.bf16 %v1139, %v1139
    %v1144 = vld [vmem:[%s7] sm:$0xff]
    %v1145 = vld [vmem:[%s7 + $0x8] sm:$0xff]
    %v1146 = vld [vmem:[%s7 + $0x10] sm:$0xff]
    %v1147 = vld [vmem:[%s7 + $0x18] sm:$0xff]
    %v1148 = vld [vmem:[%s7 + $0x20] sm:$0xff]
    %v1149 = vld [vmem:[%s7 + $0x28] sm:$0xff]
    %v1150 = vld [vmem:[%s7 + $0x30] sm:$0xff]
    %v1151 = vld [vmem:[%s7 + $0x38] sm:$0xff]
    %v1152 = vld [vmem:[%s7 + $0x40] sm:$0xff]
    %v1153 = vld [vmem:[%s7 + $0x48] sm:$0xff]
    %v1154 = vld [vmem:[%s7 + $0x50] sm:$0xff]
    %v1155 = vld [vmem:[%s7 + $0x58] sm:$0xff]
    %v1156 = vld [vmem:[%s7 + $0x60] sm:$0xff]
    %v1157 = vld [vmem:[%s7 + $0x68] sm:$0xff]
    %v1158 = vld [vmem:[%s7 + $0x70] sm:$0xff]
    %v1159 = vld [vmem:[%s7 + $0x78] sm:$0xff]
    %v1160 = vld [vmem:[%s7 + $0x80] sm:$0xff]
    %v1161 = vld [vmem:[%s7 + $0x88] sm:$0xff]
    %v1162 = vld [vmem:[%s7 + $0x90] sm:$0xff]
    %v1163 = vld [vmem:[%s7 + $0x98] sm:$0xff]
    %v1164 = vld [vmem:[%s7 + $0xa0] sm:$0xff]
    %v1165 = vld [vmem:[%s7 + $0xa8] sm:$0xff]
    %v1166 = vld [vmem:[%s7 + $0xb0] sm:$0xff]
    %v1167 = vld [vmem:[%s7 + $0xb8] sm:$0xff]
    %v1168 = vld [vmem:[%s7 + $0xc0] sm:$0xff]
    %v1169 = vld [vmem:[%s7 + $0xc8] sm:$0xff]
    %v1170 = vld [vmem:[%s7 + $0xd0] sm:$0xff]
    %v1171 = vld [vmem:[%s7 + $0xd8] sm:$0xff]
    %v1172 = vld [vmem:[%s7 + $0xe0] sm:$0xff]
    %v1173 = vld [vmem:[%s7 + $0xe8] sm:$0xff]
    %v1174 = vld [vmem:[%s7 + $0xf0] sm:$0xff]
    %v1175 = vld [vmem:[%s7 + $0xf8] sm:$0xff]
    %v1178 = vunpack.c.l.b16 %v1142
    %v1179 = vunpack.c.l.b16 %v1143
    %v1180 = vrot.slane %v1179, 7
    %vm1181 = vcmask 1041409
    %v1182 = vsel %vm1181, %v1180, %v1178
    %v1183 = vpack.c.b16 %v1182, %v1182
    %v1217 = vunpack.c.l.b16 %v1144
    %v1218 = vunpack.c.h.b16 %v1144
    %v1219 = vunpack.c.l.b16 %v1145
    %v1220 = vunpack.c.h.b16 %v1145
    %v1221 = vunpack.c.l.b16 %v1146
    %v1222 = vunpack.c.h.b16 %v1146
    %v1223 = vunpack.c.l.b16 %v1147
    %v1224 = vunpack.c.h.b16 %v1147
    %v1225 = vunpack.c.l.b16 %v1148
    %v1226 = vunpack.c.h.b16 %v1148
    %v1227 = vunpack.c.l.b16 %v1149
    %v1228 = vunpack.c.h.b16 %v1149
    %v1229 = vunpack.c.l.b16 %v1150
    %v1230 = vunpack.c.h.b16 %v1150
    %v1231 = vunpack.c.l.b16 %v1151
    %v1232 = vunpack.c.h.b16 %v1151
    %v1233 = vunpack.c.l.b16 %v1152
    %v1234 = vunpack.c.h.b16 %v1152
    %v1235 = vunpack.c.l.b16 %v1153
    %v1236 = vunpack.c.h.b16 %v1153
    %v1237 = vunpack.c.l.b16 %v1154
    %v1238 = vunpack.c.h.b16 %v1154
    %v1239 = vunpack.c.l.b16 %v1155
    %v1240 = vunpack.c.h.b16 %v1155
    %v1241 = vunpack.c.l.b16 %v1156
    %v1242 = vunpack.c.h.b16 %v1156
    %v1243 = vunpack.c.l.b16 %v1157
    %v1244 = vunpack.c.h.b16 %v1157
    %v1245 = vunpack.c.l.b16 %v1158
    %v1246 = vunpack.c.h.b16 %v1158
    %v1247 = vunpack.c.l.b16 %v1159
    %v1248 = vunpack.c.h.b16 %v1159
    %v1249 = vunpack.c.l.b16 %v1160
    %v1250 = vunpack.c.h.b16 %v1160
    %v1251 = vunpack.c.l.b16 %v1161
    %v1252 = vunpack.c.h.b16 %v1161
    %v1253 = vunpack.c.l.b16 %v1162
    %v1254 = vunpack.c.h.b16 %v1162
    %v1255 = vunpack.c.l.b16 %v1163
    %v1256 = vunpack.c.h.b16 %v1163
    %v1257 = vunpack.c.l.b16 %v1164
    %v1258 = vunpack.c.h.b16 %v1164
    %v1259 = vunpack.c.l.b16 %v1165
    %v1260 = vunpack.c.h.b16 %v1165
    %v1261 = vunpack.c.l.b16 %v1166
    %v1262 = vunpack.c.h.b16 %v1166
    %v1263 = vunpack.c.l.b16 %v1167
    %v1264 = vunpack.c.h.b16 %v1167
    %v1265 = vunpack.c.l.b16 %v1168
    %v1266 = vunpack.c.h.b16 %v1168
    %v1267 = vunpack.c.l.b16 %v1169
    %v1268 = vunpack.c.h.b16 %v1169
    %v1269 = vunpack.c.l.b16 %v1170
    %v1270 = vunpack.c.h.b16 %v1170
    %v1271 = vunpack.c.l.b16 %v1171
    %v1272 = vunpack.c.h.b16 %v1171
    %v1273 = vunpack.c.l.b16 %v1172
    %v1274 = vunpack.c.h.b16 %v1172
    %v1275 = vunpack.c.l.b16 %v1173
    %v1276 = vunpack.c.h.b16 %v1173
    %v1277 = vunpack.c.l.b16 %v1174
    %v1278 = vunpack.c.h.b16 %v1174
    %v1279 = vunpack.c.l.b16 %v1175
    %v1280 = vunpack.c.h.b16 %v1175
    %v1281 = vpack.c.b16 %v1221, %v1217
    %v1282 = vpack.c.b16 %v1222, %v1218
    %v1283 = vpack.c.b16 %v1223, %v1219
    %v1284 = vpack.c.b16 %v1224, %v1220
    %v1285 = vpack.c.b16 %v1229, %v1225
    %v1286 = vpack.c.b16 %v1230, %v1226
    %v1287 = vpack.c.b16 %v1231, %v1227
    %v1288 = vpack.c.b16 %v1232, %v1228
    %v1289 = vpack.c.b16 %v1237, %v1233
    %v1290 = vpack.c.b16 %v1238, %v1234
    %v1291 = vpack.c.b16 %v1239, %v1235
    %v1292 = vpack.c.b16 %v1240, %v1236
    %v1293 = vpack.c.b16 %v1245, %v1241
    %v1294 = vpack.c.b16 %v1246, %v1242
    %v1295 = vpack.c.b16 %v1247, %v1243
    %v1296 = vpack.c.b16 %v1248, %v1244
    %v1297 = vpack.c.b16 %v1253, %v1249
    %v1298 = vpack.c.b16 %v1254, %v1250
    %v1299 = vpack.c.b16 %v1255, %v1251
    %v1300 = vpack.c.b16 %v1256, %v1252
    %v1301 = vpack.c.b16 %v1261, %v1257
    %v1302 = vpack.c.b16 %v1262, %v1258
    %v1303 = vpack.c.b16 %v1263, %v1259
    %v1304 = vpack.c.b16 %v1264, %v1260
    %v1305 = vpack.c.b16 %v1269, %v1265
    %v1306 = vpack.c.b16 %v1270, %v1266
    %v1307 = vpack.c.b16 %v1271, %v1267
    %v1308 = vpack.c.b16 %v1272, %v1268
    %v1309 = vpack.c.b16 %v1277, %v1273
    %v1310 = vpack.c.b16 %v1278, %v1274
    %v1311 = vpack.c.b16 %v1279, %v1275
    %v1312 = vpack.c.b16 %v1280, %v1276
    %1345 = vmatprep.subr.bf16.mxu0 %v1282
    %1346 = vmatpush1.bf16.msra.mxu0 %v1281
    %1347 = vmatprep.subr.bf16.mxu0 %v1286
    %1348 = vmatpush1.bf16.msra.mxu0 %v1285
    %1349 = vmatprep.subr.bf16.mxu0 %v1290
    %1350 = vmatpush1.bf16.msra.mxu0 %v1289
    %1351 = vmatprep.subr.bf16.mxu0 %v1294
    %1352 = vmatpush1.bf16.msra.mxu0 %v1293
    %1353 = vmatprep.subr.bf16.mxu0 %v1298
    %1354 = vmatpush1.bf16.msra.mxu0 %v1297
    %1355 = vmatprep.subr.bf16.mxu0 %v1302
    %1356 = vmatpush1.bf16.msra.mxu0 %v1301
    %1357 = vmatprep.subr.bf16.mxu0 %v1306
    %1358 = vmatpush1.bf16.msra.mxu0 %v1305
    %1359 = vmatprep.subr.bf16.mxu0 %v1310
    %1360 = vmatpush1.bf16.msra.mxu0 %v1309
    %1361 = vmatprep.subr.bf16.mxu0 0
    %1362 = vmatpush1.bf16.msra.mxu0 0
    %1363 = vmatprep.subr.bf16.mxu0 0
    %1364 = vmatpush1.bf16.msra.mxu0 0
    %1365 = vmatprep.subr.bf16.mxu0 0
    %1366 = vmatpush1.bf16.msra.mxu0 0
    %1367 = vmatprep.subr.bf16.mxu0 0
    %1368 = vmatpush1.bf16.msra.mxu0 0
    %1369 = vmatprep.subr.bf16.mxu0 0
    %1370 = vmatpush1.bf16.msra.mxu0 0
    %1371 = vmatprep.subr.bf16.mxu0 0
    %1372 = vmatpush1.bf16.msra.mxu0 0
    %1373 = vmatprep.subr.bf16.mxu0 0
    %1374 = vmatpush1.bf16.msra.mxu0 0
    %1375 = vmatprep.subr.bf16.mxu0 0
    %1376 = vmatpush1.bf16.msra.mxu0 0
    %1377 = vmatprep.mubr.bf16.mxu0 0
    %1378 = vmatmul.mubr.bf16.gmra.mrb[0].mxu0 %v1183
    %v1379 = vpop.f32.mrb[0].mxu0
    %v1380 = vadd.f32 0.0, %v1379
    %v1381 = vpop.f32.mrb[0].mxu0
    %v1382 = vadd.f32 0.0, %v1381
    %v1383 = vpop.f32.mrb[0].mxu0
    %v1384 = vpop.f32.mrb[0].mxu0
    %1385 = vdwg.mxu0
    %1386 = vmatprep.subr.bf16.mxu0 %v1284
    %1387 = vmatpush1.bf16.msra.mxu0 %v1283
    %1388 = vmatprep.subr.bf16.mxu0 %v1288
    %1389 = vmatpush1.bf16.msra.mxu0 %v1287
    %1390 = vmatprep.subr.bf16.mxu0 %v1292
    %1391 = vmatpush1.bf16.msra.mxu0 %v1291
    %1392 = vmatprep.subr.bf16.mxu0 %v1296
    %1393 = vmatpush1.bf16.msra.mxu0 %v1295
    %1394 = vmatprep.subr.bf16.mxu0 %v1300
    %1395 = vmatpush1.bf16.msra.mxu0 %v1299
    %1396 = vmatprep.subr.bf16.mxu0 %v1304
    %1397 = vmatpush1.bf16.msra.mxu0 %v1303
    %1398 = vmatprep.subr.bf16.mxu0 %v1308
    %1399 = vmatpush1.bf16.msra.mxu0 %v1307
    %1400 = vmatprep.subr.bf16.mxu0 %v1312
    %1401 = vmatpush1.bf16.msra.mxu0 %v1311
    %1402 = vmatprep.subr.bf16.mxu0 0
    %1403 = vmatpush1.bf16.msra.mxu0 0
    %1404 = vmatprep.subr.bf16.mxu0 0
    %1405 = vmatpush1.bf16.msra.mxu0 0
    %1406 = vmatprep.subr.bf16.mxu0 0
    %1407 = vmatpush1.bf16.msra.mxu0 0
    %1408 = vmatprep.subr.bf16.mxu0 0
    %1409 = vmatpush1.bf16.msra.mxu0 0
    %1410 = vmatprep.subr.bf16.mxu0 0
    %1411 = vmatpush1.bf16.msra.mxu0 0
    %1412 = vmatprep.subr.bf16.mxu0 0
    %1413 = vmatpush1.bf16.msra.mxu0 0
    %1414 = vmatprep.subr.bf16.mxu0 0
    %1415 = vmatpush1.bf16.msra.mxu0 0
    %1416 = vmatprep.subr.bf16.mxu0 0
    %1417 = vmatpush1.bf16.msra.mxu0 0
    %1418 = vmatprep.mubr.bf16.mxu0 0
    %1419 = vmatmul.mubr.bf16.gmra.mrb[0].mxu0 %v1183
    %v1420 = vpop.f32.mrb[0].mxu0
    %v1421 = vadd.f32 0.0, %v1420
    %v1422 = vpop.f32.mrb[0].mxu0
    %v1423 = vadd.f32 0.0, %v1422
    %v1424 = vpop.f32.mrb[0].mxu0
    %v1425 = vpop.f32.mrb[0].mxu0
    %1426 = vdwg.mxu0
    %v1431 = vrot.slane %v1380, 7
    %v1432 = vrot.slane %v1382, 7
    %v1433 = vrot.slane %v1421, 7
    %v1434 = vrot.slane %v1423, 7
    %v1443 = vadd.f32 %v736, %v1431
    %v1444 = vadd.f32 %v738, %v1432
    %v1445 = vadd.f32 %v779, %v1433
    %v1446 = vadd.f32 %v781, %v1434
    %v1447 = vadd.f32 %v740, %v1380
    %v1448 = vadd.f32 %v742, %v1382
    %v1449 = vadd.f32 %v783, %v1421
    %v1450 = vadd.f32 %v785, %v1423
    %v1451 = vxor.u32 %v1443, 2147483648
    %v1452 = vxor.u32 %v1444, 2147483648
    %v1453 = vxor.u32 %v1445, 2147483648
    %v1454 = vxor.u32 %v1447, 2147483648
    %v1455 = vxor.u32 %v1448, 2147483648
    %v1456 = vxor.u32 %v1449, 2147483648
    %v1457 = vmul.f32 %v1451, 1.442695
    %v1458 = vpow.pop %v1457
    %v1459 = vmul.f32 %v1452, 1.442695
    %v1460 = vpow.pop %v1459
    %v1461 = vmul.f32 %v1453, 1.442695
    %v1462 = vpow.pop %v1461
    %v1463 = vmul.f32 %v1454, 1.442695
    %v1464 = vpow.pop %v1463
    %v1465 = vmul.f32 %v1455, 1.442695
    %v1466 = vpow.pop %v1465
    %v1467 = vmul.f32 %v1456, 1.442695
    %v1468 = vpow.pop %v1467
    %v1469 = vadd.f32 %v1458, 1.0
    %v1470 = vadd.f32 %v1460, 1.0
    %v1471 = vadd.f32 %v1462, 1.0
    %v1472 = vadd.f32 %v1464, 1.0
    %v1473 = vadd.f32 %v1466, 1.0
    %v1474 = vadd.f32 %v1468, 1.0
    %v1475 = vrcp.pop %v1469
    %v1476 = vmul.f32 1.0, %v1475
    %v1477 = vrcp.pop %v1470
    %v1478 = vmul.f32 1.0, %v1477
    %v1479 = vrcp.pop %v1471
    %v1480 = vmul.f32 1.0, %v1479
    %v1481 = vrcp.pop %v1472
    %v1482 = vmul.f32 1.0, %v1481
    %v1483 = vrcp.pop %v1473
    %v1484 = vmul.f32 1.0, %v1483
    %v1485 = vrcp.pop %v1474
    %v1486 = vmul.f32 1.0, %v1485
    %v1487 = vtanh.pop %v1446
    %v1488 = vtanh.pop %v1450
    %v1491 = vrot.slane %v1134, 7
    %v1492 = vrot.slane %v1135, 7
    %v1495 = vmul.f32 %v1478, %v1491
    %v1496 = vmul.f32 %v1484, %v1492
    %v1497 = vmul.f32 %v1476, %v1487
    %v1498 = vmul.f32 %v1482, %v1488
    %v1499 = vadd.f32 %v1495, %v1497
    %v1500 = vadd.f32 %v1496, %v1498
    %v1501 = vtanh.pop %v1499
    %v1502 = vtanh.pop %v1500
    %v1503 = vmul.f32 %v1480, %v1501
    %v1504 = vmul.f32 %v1486, %v1502
    %1505 = vst [vmem:[#allocation2] sm:$0x2] %v1503
    %1506 = vst [vmem:[#allocation2 + $0x8] sm:$0x2] %v1504
    %v1507 = vpack.c.bf16 %v1503, %v1503
    %v1508 = vpack.c.bf16 %v1504, %v1504
    %v1509 = vld [vmem:[%s7] sm:$0xff]
    %v1510 = vld [vmem:[%s7 + $0x8] sm:$0xff]
    %v1511 = vld [vmem:[%s7 + $0x10] sm:$0xff]
    %v1512 = vld [vmem:[%s7 + $0x18] sm:$0xff]
    %v1513 = vld [vmem:[%s7 + $0x20] sm:$0xff]
    %v1514 = vld [vmem:[%s7 + $0x28] sm:$0xff]
    %v1515 = vld [vmem:[%s7 + $0x30] sm:$0xff]
    %v1516 = vld [vmem:[%s7 + $0x38] sm:$0xff]
    %v1517 = vld [vmem:[%s7 + $0x40] sm:$0xff]
    %v1518 = vld [vmem:[%s7 + $0x48] sm:$0xff]
    %v1519 = vld [vmem:[%s7 + $0x50] sm:$0xff]
    %v1520 = vld [vmem:[%s7 + $0x58] sm:$0xff]
    %v1521 = vld [vmem:[%s7 + $0x60] sm:$0xff]
    %v1522 = vld [vmem:[%s7 + $0x68] sm:$0xff]
    %v1523 = vld [vmem:[%s7 + $0x70] sm:$0xff]
    %v1524 = vld [vmem:[%s7 + $0x78] sm:$0xff]
    %v1525 = vld [vmem:[%s7 + $0x80] sm:$0xff]
    %v1526 = vld [vmem:[%s7 + $0x88] sm:$0xff]
    %v1527 = vld [vmem:[%s7 + $0x90] sm:$0xff]
    %v1528 = vld [vmem:[%s7 + $0x98] sm:$0xff]
    %v1529 = vld [vmem:[%s7 + $0xa0] sm:$0xff]
    %v1530 = vld [vmem:[%s7 + $0xa8] sm:$0xff]
    %v1531 = vld [vmem:[%s7 + $0xb0] sm:$0xff]
    %v1532 = vld [vmem:[%s7 + $0xb8] sm:$0xff]
    %v1533 = vld [vmem:[%s7 + $0xc0] sm:$0xff]
    %v1534 = vld [vmem:[%s7 + $0xc8] sm:$0xff]
    %v1535 = vld [vmem:[%s7 + $0xd0] sm:$0xff]
    %v1536 = vld [vmem:[%s7 + $0xd8] sm:$0xff]
    %v1537 = vld [vmem:[%s7 + $0xe0] sm:$0xff]
    %v1538 = vld [vmem:[%s7 + $0xe8] sm:$0xff]
    %v1539 = vld [vmem:[%s7 + $0xf0] sm:$0xff]
    %v1540 = vld [vmem:[%s7 + $0xf8] sm:$0xff]
    %v1543 = vunpack.c.l.b16 %v1507
    %v1544 = vunpack.c.l.b16 %v1508
    %v1545 = vrot.slane %v1543, 1
    %v1546 = vsel %vm1181, %v1544, %v1545
    %v1547 = vpack.c.b16 %v1546, %v1546
    %v1581 = vunpack.c.l.b16 %v1509
    %v1582 = vunpack.c.h.b16 %v1509
    %v1583 = vunpack.c.l.b16 %v1510
    %v1584 = vunpack.c.h.b16 %v1510
    %v1585 = vunpack.c.l.b16 %v1511
    %v1586 = vunpack.c.h.b16 %v1511
    %v1587 = vunpack.c.l.b16 %v1512
    %v1588 = vunpack.c.h.b16 %v1512
    %v1589 = vunpack.c.l.b16 %v1513
    %v1590 = vunpack.c.h.b16 %v1513
    %v1591 = vunpack.c.l.b16 %v1514
    %v1592 = vunpack.c.h.b16 %v1514
    %v1593 = vunpack.c.l.b16 %v1515
    %v1594 = vunpack.c.h.b16 %v1515
    %v1595 = vunpack.c.l.b16 %v1516
    %v1596 = vunpack.c.h.b16 %v1516
    %v1597 = vunpack.c.l.b16 %v1517
    %v1598 = vunpack.c.h.b16 %v1517
    %v1599 = vunpack.c.l.b16 %v1518
    %v1600 = vunpack.c.h.b16 %v1518
    %v1601 = vunpack.c.l.b16 %v1519
    %v1602 = vunpack.c.h.b16 %v1519
    %v1603 = vunpack.c.l.b16 %v1520
    %v1604 = vunpack.c.h.b16 %v1520
    %v1605 = vunpack.c.l.b16 %v1521
    %v1606 = vunpack.c.h.b16 %v1521
    %v1607 = vunpack.c.l.b16 %v1522
    %v1608 = vunpack.c.h.b16 %v1522
    %v1609 = vunpack.c.l.b16 %v1523
    %v1610 = vunpack.c.h.b16 %v1523
    %v1611 = vunpack.c.l.b16 %v1524
    %v1612 = vunpack.c.h.b16 %v1524
    %v1613 = vunpack.c.l.b16 %v1525
    %v1614 = vunpack.c.h.b16 %v1525
    %v1615 = vunpack.c.l.b16 %v1526
    %v1616 = vunpack.c.h.b16 %v1526
    %v1617 = vunpack.c.l.b16 %v1527
    %v1618 = vunpack.c.h.b16 %v1527
    %v1619 = vunpack.c.l.b16 %v1528
    %v1620 = vunpack.c.h.b16 %v1528
    %v1621 = vunpack.c.l.b16 %v1529
    %v1622 = vunpack.c.h.b16 %v1529
    %v1623 = vunpack.c.l.b16 %v1530
    %v1624 = vunpack.c.h.b16 %v1530
    %v1625 = vunpack.c.l.b16 %v1531
    %v1626 = vunpack.c.h.b16 %v1531
    %v1627 = vunpack.c.l.b16 %v1532
    %v1628 = vunpack.c.h.b16 %v1532
    %v1629 = vunpack.c.l.b16 %v1533
    %v1630 = vunpack.c.h.b16 %v1533
    %v1631 = vunpack.c.l.b16 %v1534
    %v1632 = vunpack.c.h.b16 %v1534
    %v1633 = vunpack.c.l.b16 %v1535
    %v1634 = vunpack.c.h.b16 %v1535
    %v1635 = vunpack.c.l.b16 %v1536
    %v1636 = vunpack.c.h.b16 %v1536
    %v1637 = vunpack.c.l.b16 %v1537
    %v1638 = vunpack.c.h.b16 %v1537
    %v1639 = vunpack.c.l.b16 %v1538
    %v1640 = vunpack.c.h.b16 %v1538
    %v1641 = vunpack.c.l.b16 %v1539
    %v1642 = vunpack.c.h.b16 %v1539
    %v1643 = vunpack.c.l.b16 %v1540
    %v1644 = vunpack.c.h.b16 %v1540
    %v1645 = vpack.c.b16 %v1585, %v1581
    %v1646 = vpack.c.b16 %v1586, %v1582
    %v1647 = vpack.c.b16 %v1587, %v1583
    %v1648 = vpack.c.b16 %v1588, %v1584
    %v1649 = vpack.c.b16 %v1593, %v1589
    %v1650 = vpack.c.b16 %v1594, %v1590
    %v1651 = vpack.c.b16 %v1595, %v1591
    %v1652 = vpack.c.b16 %v1596, %v1592
    %v1653 = vpack.c.b16 %v1601, %v1597
    %v1654 = vpack.c.b16 %v1602, %v1598
    %v1655 = vpack.c.b16 %v1603, %v1599
    %v1656 = vpack.c.b16 %v1604, %v1600
    %v1657 = vpack.c.b16 %v1609, %v1605
    %v1658 = vpack.c.b16 %v1610, %v1606
    %v1659 = vpack.c.b16 %v1611, %v1607
    %v1660 = vpack.c.b16 %v1612, %v1608
    %v1661 = vpack.c.b16 %v1617, %v1613
    %v1662 = vpack.c.b16 %v1618, %v1614
    %v1663 = vpack.c.b16 %v1619, %v1615
    %v1664 = vpack.c.b16 %v1620, %v1616
    %v1665 = vpack.c.b16 %v1625, %v1621
    %v1666 = vpack.c.b16 %v1626, %v1622
    %v1667 = vpack.c.b16 %v1627, %v1623
    %v1668 = vpack.c.b16 %v1628, %v1624
    %v1669 = vpack.c.b16 %v1633, %v1629
    %v1670 = vpack.c.b16 %v1634, %v1630
    %v1671 = vpack.c.b16 %v1635, %v1631
    %v1672 = vpack.c.b16 %v1636, %v1632
    %v1673 = vpack.c.b16 %v1641, %v1637
    %v1674 = vpack.c.b16 %v1642, %v1638
    %v1675 = vpack.c.b16 %v1643, %v1639
    %v1676 = vpack.c.b16 %v1644, %v1640
    %1709 = vmatprep.subr.bf16.mxu0 %v1646
    %1710 = vmatpush1.bf16.msra.mxu0 %v1645
    %1711 = vmatprep.subr.bf16.mxu0 %v1650
    %1712 = vmatpush1.bf16.msra.mxu0 %v1649
    %1713 = vmatprep.subr.bf16.mxu0 %v1654
    %1714 = vmatpush1.bf16.msra.mxu0 %v1653
    %1715 = vmatprep.subr.bf16.mxu0 %v1658
    %1716 = vmatpush1.bf16.msra.mxu0 %v1657
    %1717 = vmatprep.subr.bf16.mxu0 %v1662
    %1718 = vmatpush1.bf16.msra.mxu0 %v1661
    %1719 = vmatprep.subr.bf16.mxu0 %v1666
    %1720 = vmatpush1.bf16.msra.mxu0 %v1665
    %1721 = vmatprep.subr.bf16.mxu0 %v1670
    %1722 = vmatpush1.bf16.msra.mxu0 %v1669
    %1723 = vmatprep.subr.bf16.mxu0 %v1674
    %1724 = vmatpush1.bf16.msra.mxu0 %v1673
    %1725 = vmatprep.subr.bf16.mxu0 0
    %1726 = vmatpush1.bf16.msra.mxu0 0
    %1727 = vmatprep.subr.bf16.mxu0 0
    %1728 = vmatpush1.bf16.msra.mxu0 0
    %1729 = vmatprep.subr.bf16.mxu0 0
    %1730 = vmatpush1.bf16.msra.mxu0 0
    %1731 = vmatprep.subr.bf16.mxu0 0
    %1732 = vmatpush1.bf16.msra.mxu0 0
    %1733 = vmatprep.subr.bf16.mxu0 0
    %1734 = vmatpush1.bf16.msra.mxu0 0
    %1735 = vmatprep.subr.bf16.mxu0 0
    %1736 = vmatpush1.bf16.msra.mxu0 0
    %1737 = vmatprep.subr.bf16.mxu0 0
    %1738 = vmatpush1.bf16.msra.mxu0 0
    %1739 = vmatprep.subr.bf16.mxu0 0
    %1740 = vmatpush1.bf16.msra.mxu0 0
    %1741 = vmatprep.mubr.bf16.mxu0 0
    %1742 = vmatmul.mubr.bf16.gmra.mrb[0].mxu0 %v1547
    %v1743 = vpop.f32.mrb[0].mxu0
    %v1744 = vadd.f32 0.0, %v1743
    %v1745 = vpop.f32.mrb[0].mxu0
    %v1746 = vadd.f32 0.0, %v1745
    %v1747 = vpop.f32.mrb[0].mxu0
    %v1748 = vpop.f32.mrb[0].mxu0
    %1749 = vdwg.mxu0
    %1750 = vmatprep.subr.bf16.mxu0 %v1648
    %1751 = vmatpush1.bf16.msra.mxu0 %v1647
    %1752 = vmatprep.subr.bf16.mxu0 %v1652
    %1753 = vmatpush1.bf16.msra.mxu0 %v1651
    %1754 = vmatprep.subr.bf16.mxu0 %v1656
    %1755 = vmatpush1.bf16.msra.mxu0 %v1655
    %1756 = vmatprep.subr.bf16.mxu0 %v1660
    %1757 = vmatpush1.bf16.msra.mxu0 %v1659
    %1758 = vmatprep.subr.bf16.mxu0 %v1664
    %1759 = vmatpush1.bf16.msra.mxu0 %v1663
    %1760 = vmatprep.subr.bf16.mxu0 %v1668
    %1761 = vmatpush1.bf16.msra.mxu0 %v1667
    %1762 = vmatprep.subr.bf16.mxu0 %v1672
    %1763 = vmatpush1.bf16.msra.mxu0 %v1671
    %1764 = vmatprep.subr.bf16.mxu0 %v1676
    %1765 = vmatpush1.bf16.msra.mxu0 %v1675
    %1766 = vmatprep.subr.bf16.mxu0 0
    %1767 = vmatpush1.bf16.msra.mxu0 0
    %1768 = vmatprep.subr.bf16.mxu0 0
    %1769 = vmatpush1.bf16.msra.mxu0 0
    %1770 = vmatprep.subr.bf16.mxu0 0
    %1771 = vmatpush1.bf16.msra.mxu0 0
    %1772 = vmatprep.subr.bf16.mxu0 0
    %1773 = vmatpush1.bf16.msra.mxu0 0
    %1774 = vmatprep.subr.bf16.mxu0 0
    %1775 = vmatpush1.bf16.msra.mxu0 0
    %1776 = vmatprep.subr.bf16.mxu0 0
    %1777 = vmatpush1.bf16.msra.mxu0 0
    %1778 = vmatprep.subr.bf16.mxu0 0
    %1779 = vmatpush1.bf16.msra.mxu0 0
    %1780 = vmatprep.subr.bf16.mxu0 0
    %1781 = vmatpush1.bf16.msra.mxu0 0
    %1782 = vmatprep.mubr.bf16.mxu0 0
    %1783 = vmatmul.mubr.bf16.gmra.mrb[0].mxu0 %v1547
    %v1784 = vpop.f32.mrb[0].mxu0
    %v1785 = vadd.f32 0.0, %v1784
    %v1786 = vpop.f32.mrb[0].mxu0
    %v1787 = vadd.f32 0.0, %v1786
    %v1788 = vpop.f32.mrb[0].mxu0
    %v1789 = vpop.f32.mrb[0].mxu0
    %1790 = vdwg.mxu0
    %v1795 = vrot.slane %v1744, 6
    %v1796 = vrot.slane %v1746, 6
    %v1797 = vrot.slane %v1785, 6
    %v1798 = vrot.slane %v1787, 6
    %v1799 = vrot.slane %v1744, 7
    %v1800 = vrot.slane %v1746, 7
    %v1801 = vrot.slane %v1785, 7
    %v1802 = vrot.slane %v1787, 7
    %v1811 = vadd.f32 %v736, %v1795
    %v1812 = vadd.f32 %v738, %v1796
    %v1813 = vadd.f32 %v779, %v1797
    %v1814 = vadd.f32 %v781, %v1798
    %v1815 = vadd.f32 %v740, %v1799
    %v1816 = vadd.f32 %v742, %v1800
    %v1817 = vadd.f32 %v783, %v1801
    %v1818 = vadd.f32 %v785, %v1802
    %v1819 = vxor.u32 %v1811, 2147483648
    %v1820 = vxor.u32 %v1812, 2147483648
    %v1821 = vxor.u32 %v1813, 2147483648
    %v1822 = vxor.u32 %v1815, 2147483648
    %v1823 = vxor.u32 %v1816, 2147483648
    %v1824 = vxor.u32 %v1817, 2147483648
    %v1825 = vmul.f32 %v1819, 1.442695
    %v1826 = vpow.pop %v1825
    %v1827 = vmul.f32 %v1820, 1.442695
    %v1828 = vpow.pop %v1827
    %v1829 = vmul.f32 %v1821, 1.442695
    %v1830 = vpow.pop %v1829
    %v1831 = vmul.f32 %v1822, 1.442695
    %v1832 = vpow.pop %v1831
    %v1833 = vmul.f32 %v1823, 1.442695
    %v1834 = vpow.pop %v1833
    %v1835 = vmul.f32 %v1824, 1.442695
    %v1836 = vpow.pop %v1835
    %v1837 = vadd.f32 %v1826, 1.0
    %v1838 = vadd.f32 %v1828, 1.0
    %v1839 = vadd.f32 %v1830, 1.0
    %v1840 = vadd.f32 %v1832, 1.0
    %v1841 = vadd.f32 %v1834, 1.0
    %v1842 = vadd.f32 %v1836, 1.0
    %v1843 = vrcp.pop %v1837
    %v1844 = vmul.f32 1.0, %v1843
    %v1845 = vrcp.pop %v1838
    %v1846 = vmul.f32 1.0, %v1845
    %v1847 = vrcp.pop %v1839
    %v1848 = vmul.f32 1.0, %v1847
    %v1849 = vrcp.pop %v1840
    %v1850 = vmul.f32 1.0, %v1849
    %v1851 = vrcp.pop %v1841
    %v1852 = vmul.f32 1.0, %v1851
    %v1853 = vrcp.pop %v1842
    %v1854 = vmul.f32 1.0, %v1853
    %v1855 = vtanh.pop %v1814
    %v1856 = vtanh.pop %v1818
    %v1859 = vrot.slane %v1499, 7
    %v1860 = vrot.slane %v1500, 7
    %v1863 = vmul.f32 %v1846, %v1859
    %v1864 = vmul.f32 %v1852, %v1860
    %v1865 = vmul.f32 %v1844, %v1855
    %v1866 = vmul.f32 %v1850, %v1856
    %v1867 = vadd.f32 %v1863, %v1865
    %v1868 = vadd.f32 %v1864, %v1866
    %v1869 = vtanh.pop %v1867
    %v1870 = vtanh.pop %v1868
    %v1871 = vmul.f32 %v1848, %v1869
    %v1872 = vmul.f32 %v1854, %v1870
    %1873 = vst [vmem:[#allocation2] sm:$0x4] %v1871
    %1874 = vst [vmem:[#allocation2 + $0x8] sm:$0x4] %v1872
    %v1875 = vpack.c.bf16 %v1871, %v1871
    %v1876 = vpack.c.bf16 %v1872, %v1872
    %v1877 = vld [vmem:[%s7] sm:$0xff]
    %v1878 = vld [vmem:[%s7 + $0x8] sm:$0xff]
    %v1879 = vld [vmem:[%s7 + $0x10] sm:$0xff]
    %v1880 = vld [vmem:[%s7 + $0x18] sm:$0xff]
    %v1881 = vld [vmem:[%s7 + $0x20] sm:$0xff]
    %v1882 = vld [vmem:[%s7 + $0x28] sm:$0xff]
    %v1883 = vld [vmem:[%s7 + $0x30] sm:$0xff]
    %v1884 = vld [vmem:[%s7 + $0x38] sm:$0xff]
    %v1885 = vld [vmem:[%s7 + $0x40] sm:$0xff]
    %v1886 = vld [vmem:[%s7 + $0x48] sm:$0xff]
    %v1887 = vld [vmem:[%s7 + $0x50] sm:$0xff]
    %v1888 = vld [vmem:[%s7 + $0x58] sm:$0xff]
    %v1889 = vld [vmem:[%s7 + $0x60] sm:$0xff]
    %v1890 = vld [vmem:[%s7 + $0x68] sm:$0xff]
    %v1891 = vld [vmem:[%s7 + $0x70] sm:$0xff]
    %v1892 = vld [vmem:[%s7 + $0x78] sm:$0xff]
    %v1893 = vld [vmem:[%s7 + $0x80] sm:$0xff]
    %v1894 = vld [vmem:[%s7 + $0x88] sm:$0xff]
    %v1895 = vld [vmem:[%s7 + $0x90] sm:$0xff]
    %v1896 = vld [vmem:[%s7 + $0x98] sm:$0xff]
    %v1897 = vld [vmem:[%s7 + $0xa0] sm:$0xff]
    %v1898 = vld [vmem:[%s7 + $0xa8] sm:$0xff]
    %v1899 = vld [vmem:[%s7 + $0xb0] sm:$0xff]
    %v1900 = vld [vmem:[%s7 + $0xb8] sm:$0xff]
    %v1901 = vld [vmem:[%s7 + $0xc0] sm:$0xff]
    %v1902 = vld [vmem:[%s7 + $0xc8] sm:$0xff]
    %v1903 = vld [vmem:[%s7 + $0xd0] sm:$0xff]
    %v1904 = vld [vmem:[%s7 + $0xd8] sm:$0xff]
    %v1905 = vld [vmem:[%s7 + $0xe0] sm:$0xff]
    %v1906 = vld [vmem:[%s7 + $0xe8] sm:$0xff]
    %v1907 = vld [vmem:[%s7 + $0xf0] sm:$0xff]
    %v1908 = vld [vmem:[%s7 + $0xf8] sm:$0xff]
    %v1911 = vunpack.c.l.b16 %v1875
    %v1912 = vunpack.c.l.b16 %v1876
    %v1913 = vrot.slane %v1911, 2
    %v1914 = vrot.slane %v1912, 1
    %v1915 = vsel %vm1181, %v1914, %v1913
    %v1916 = vpack.c.b16 %v1915, %v1915
    %v1950 = vunpack.c.l.b16 %v1877
    %v1951 = vunpack.c.h.b16 %v1877
    %v1952 = vunpack.c.l.b16 %v1878
    %v1953 = vunpack.c.h.b16 %v1878
    %v1954 = vunpack.c.l.b16 %v1879
    %v1955 = vunpack.c.h.b16 %v1879
    %v1956 = vunpack.c.l.b16 %v1880
    %v1957 = vunpack.c.h.b16 %v1880
    %v1958 = vunpack.c.l.b16 %v1881
    %v1959 = vunpack.c.h.b16 %v1881
    %v1960 = vunpack.c.l.b16 %v1882
    %v1961 = vunpack.c.h.b16 %v1882
    %v1962 = vunpack.c.l.b16 %v1883
    %v1963 = vunpack.c.h.b16 %v1883
    %v1964 = vunpack.c.l.b16 %v1884
    %v1965 = vunpack.c.h.b16 %v1884
    %v1966 = vunpack.c.l.b16 %v1885
    %v1967 = vunpack.c.h.b16 %v1885
    %v1968 = vunpack.c.l.b16 %v1886
    %v1969 = vunpack.c.h.b16 %v1886
    %v1970 = vunpack.c.l.b16 %v1887
    %v1971 = vunpack.c.h.b16 %v1887
    %v1972 = vunpack.c.l.b16 %v1888
    %v1973 = vunpack.c.h.b16 %v1888
    %v1974 = vunpack.c.l.b16 %v1889
    %v1975 = vunpack.c.h.b16 %v1889
    %v1976 = vunpack.c.l.b16 %v1890
    %v1977 = vunpack.c.h.b16 %v1890
    %v1978 = vunpack.c.l.b16 %v1891
    %v1979 = vunpack.c.h.b16 %v1891
    %v1980 = vunpack.c.l.b16 %v1892
    %v1981 = vunpack.c.h.b16 %v1892
    %v1982 = vunpack.c.l.b16 %v1893
    %v1983 = vunpack.c.h.b16 %v1893
    %v1984 = vunpack.c.l.b16 %v1894
    %v1985 = vunpack.c.h.b16 %v1894
    %v1986 = vunpack.c.l.b16 %v1895
    %v1987 = vunpack.c.h.b16 %v1895
    %v1988 = vunpack.c.l.b16 %v1896
    %v1989 = vunpack.c.h.b16 %v1896
    %v1990 = vunpack.c.l.b16 %v1897
    %v1991 = vunpack.c.h.b16 %v1897
    %v1992 = vunpack.c.l.b16 %v1898
    %v1993 = vunpack.c.h.b16 %v1898
    %v1994 = vunpack.c.l.b16 %v1899
    %v1995 = vunpack.c.h.b16 %v1899
    %v1996 = vunpack.c.l.b16 %v1900
    %v1997 = vunpack.c.h.b16 %v1900
    %v1998 = vunpack.c.l.b16 %v1901
    %v1999 = vunpack.c.h.b16 %v1901
    %v2000 = vunpack.c.l.b16 %v1902
    %v2001 = vunpack.c.h.b16 %v1902
    %v2002 = vunpack.c.l.b16 %v1903
    %v2003 = vunpack.c.h.b16 %v1903
    %v2004 = vunpack.c.l.b16 %v1904
    %v2005 = vunpack.c.h.b16 %v1904
    %v2006 = vunpack.c.l.b16 %v1905
    %v2007 = vunpack.c.h.b16 %v1905
    %v2008 = vunpack.c.l.b16 %v1906
    %v2009 = vunpack.c.h.b16 %v1906
    %v2010 = vunpack.c.l.b16 %v1907
    %v2011 = vunpack.c.h.b16 %v1907
    %v2012 = vunpack.c.l.b16 %v1908
    %v2013 = vunpack.c.h.b16 %v1908
    %v2014 = vpack.c.b16 %v1954, %v1950
    %v2015 = vpack.c.b16 %v1955, %v1951
    %v2016 = vpack.c.b16 %v1956, %v1952
    %v2017 = vpack.c.b16 %v1957, %v1953
    %v2018 = vpack.c.b16 %v1962, %v1958
    %v2019 = vpack.c.b16 %v1963, %v1959
    %v2020 = vpack.c.b16 %v1964, %v1960
    %v2021 = vpack.c.b16 %v1965, %v1961
    %v2022 = vpack.c.b16 %v1970, %v1966
    %v2023 = vpack.c.b16 %v1971, %v1967
    %v2024 = vpack.c.b16 %v1972, %v1968
    %v2025 = vpack.c.b16 %v1973, %v1969
    %v2026 = vpack.c.b16 %v1978, %v1974
    %v2027 = vpack.c.b16 %v1979, %v1975
    %v2028 = vpack.c.b16 %v1980, %v1976
    %v2029 = vpack.c.b16 %v1981, %v1977
    %v2030 = vpack.c.b16 %v1986, %v1982
    %v2031 = vpack.c.b16 %v1987, %v1983
    %v2032 = vpack.c.b16 %v1988, %v1984
    %v2033 = vpack.c.b16 %v1989, %v1985
    %v2034 = vpack.c.b16 %v1994, %v1990
    %v2035 = vpack.c.b16 %v1995, %v1991
    %v2036 = vpack.c.b16 %v1996, %v1992
    %v2037 = vpack.c.b16 %v1997, %v1993
    %v2038 = vpack.c.b16 %v2002, %v1998
    %v2039 = vpack.c.b16 %v2003, %v1999
    %v2040 = vpack.c.b16 %v2004, %v2000
    %v2041 = vpack.c.b16 %v2005, %v2001
    %v2042 = vpack.c.b16 %v2010, %v2006
    %v2043 = vpack.c.b16 %v2011, %v2007
    %v2044 = vpack.c.b16 %v2012, %v2008
    %v2045 = vpack.c.b16 %v2013, %v2009
    %2078 = vmatprep.subr.bf16.mxu0 %v2015
    %2079 = vmatpush1.bf16.msra.mxu0 %v2014
    %2080 = vmatprep.subr.bf16.mxu0 %v2019
    %2081 = vmatpush1.bf16.msra.mxu0 %v2018
    %2082 = vmatprep.subr.bf16.mxu0 %v2023
    %2083 = vmatpush1.bf16.msra.mxu0 %v2022
    %2084 = vmatprep.subr.bf16.mxu0 %v2027
    %2085 = vmatpush1.bf16.msra.mxu0 %v2026
    %2086 = vmatprep.subr.bf16.mxu0 %v2031
    %2087 = vmatpush1.bf16.msra.mxu0 %v2030
    %2088 = vmatprep.subr.bf16.mxu0 %v2035
    %2089 = vmatpush1.bf16.msra.mxu0 %v2034
    %2090 = vmatprep.subr.bf16.mxu0 %v2039
    %2091 = vmatpush1.bf16.msra.mxu0 %v2038
    %2092 = vmatprep.subr.bf16.mxu0 %v2043
    %2093 = vmatpush1.bf16.msra.mxu0 %v2042
    %2094 = vmatprep.subr.bf16.mxu0 0
    %2095 = vmatpush1.bf16.msra.mxu0 0
    %2096 = vmatprep.subr.bf16.mxu0 0
    %2097 = vmatpush1.bf16.msra.mxu0 0
    %2098 = vmatprep.subr.bf16.mxu0 0
    %2099 = vmatpush1.bf16.msra.mxu0 0
    %2100 = vmatprep.subr.bf16.mxu0 0
    %2101 = vmatpush1.bf16.msra.mxu0 0
    %2102 = vmatprep.subr.bf16.mxu0 0
    %2103 = vmatpush1.bf16.msra.mxu0 0
    %2104 = vmatprep.subr.bf16.mxu0 0
    %2105 = vmatpush1.bf16.msra.mxu0 0
    %2106 = vmatprep.subr.bf16.mxu0 0
    %2107 = vmatpush1.bf16.msra.mxu0 0
    %2108 = vmatprep.subr.bf16.mxu0 0
    %2109 = vmatpush1.bf16.msra.mxu0 0
    %2110 = vmatprep.mubr.bf16.mxu0 0
    %2111 = vmatmul.mubr.bf16.gmra.mrb[0].mxu0 %v1916
    %v2112 = vpop.f32.mrb[0].mxu0
    %v2113 = vadd.f32 0.0, %v2112
    %v2114 = vpop.f32.mrb[0].mxu0
    %v2115 = vadd.f32 0.0, %v2114
    %v2116 = vpop.f32.mrb[0].mxu0
    %v2117 = vpop.f32.mrb[0].mxu0
    %2118 = vdwg.mxu0
    %2119 = vmatprep.subr.bf16.mxu0 %v2017
    %2120 = vmatpush1.bf16.msra.mxu0 %v2016
    %2121 = vmatprep.subr.bf16.mxu0 %v2021
    %2122 = vmatpush1.bf16.msra.mxu0 %v2020
    %2123 = vmatprep.subr.bf16.mxu0 %v2025
    %2124 = vmatpush1.bf16.msra.mxu0 %v2024
    %2125 = vmatprep.subr.bf16.mxu0 %v2029
    %2126 = vmatpush1.bf16.msra.mxu0 %v2028
    %2127 = vmatprep.subr.bf16.mxu0 %v2033
    %2128 = vmatpush1.bf16.msra.mxu0 %v2032
    %2129 = vmatprep.subr.bf16.mxu0 %v2037
    %2130 = vmatpush1.bf16.msra.mxu0 %v2036
    %2131 = vmatprep.subr.bf16.mxu0 %v2041
    %2132 = vmatpush1.bf16.msra.mxu0 %v2040
    %2133 = vmatprep.subr.bf16.mxu0 %v2045
    %2134 = vmatpush1.bf16.msra.mxu0 %v2044
    %2135 = vmatprep.subr.bf16.mxu0 0
    %2136 = vmatpush1.bf16.msra.mxu0 0
    %2137 = vmatprep.subr.bf16.mxu0 0
    %2138 = vmatpush1.bf16.msra.mxu0 0
    %2139 = vmatprep.subr.bf16.mxu0 0
    %2140 = vmatpush1.bf16.msra.mxu0 0
    %2141 = vmatprep.subr.bf16.mxu0 0
    %2142 = vmatpush1.bf16.msra.mxu0 0
    %2143 = vmatprep.subr.bf16.mxu0 0
    %2144 = vmatpush1.bf16.msra.mxu0 0
    %2145 = vmatprep.subr.bf16.mxu0 0
    %2146 = vmatpush1.bf16.msra.mxu0 0
    %2147 = vmatprep.subr.bf16.mxu0 0
    %2148 = vmatpush1.bf16.msra.mxu0 0
    %2149 = vmatprep.subr.bf16.mxu0 0
    %2150 = vmatpush1.bf16.msra.mxu0 0
    %2151 = vmatprep.mubr.bf16.mxu0 0
    %2152 = vmatmul.mubr.bf16.gmra.mrb[0].mxu0 %v1916
    %v2153 = vpop.f32.mrb[0].mxu0
    %v2154 = vadd.f32 0.0, %v2153
    %v2155 = vpop.f32.mrb[0].mxu0
    %v2156 = vadd.f32 0.0, %v2155
    %v2157 = vpop.f32.mrb[0].mxu0
    %v2158 = vpop.f32.mrb[0].mxu0
    %2159 = vdwg.mxu0
    %v2164 = vrot.slane %v2113, 5
    %v2165 = vrot.slane %v2115, 5
    %v2166 = vrot.slane %v2154, 5
    %v2167 = vrot.slane %v2156, 5
    %v2168 = vrot.slane %v2113, 6
    %v2169 = vrot.slane %v2115, 6
    %v2170 = vrot.slane %v2154, 6
    %v2171 = vrot.slane %v2156, 6
    %v2180 = vadd.f32 %v736, %v2164
    %v2181 = vadd.f32 %v738, %v2165
    %v2182 = vadd.f32 %v779, %v2166
    %v2183 = vadd.f32 %v781, %v2167
    %v2184 = vadd.f32 %v740, %v2168
    %v2185 = vadd.f32 %v742, %v2169
    %v2186 = vadd.f32 %v783, %v2170
    %v2187 = vadd.f32 %v785, %v2171
    %v2188 = vxor.u32 %v2180, 2147483648
    %v2189 = vxor.u32 %v2181, 2147483648
    %v2190 = vxor.u32 %v2182, 2147483648
    %v2191 = vxor.u32 %v2184, 2147483648
    %v2192 = vxor.u32 %v2185, 2147483648
    %v2193 = vxor.u32 %v2186, 2147483648
    %v2194 = vmul.f32 %v2188, 1.442695
    %v2195 = vpow.pop %v2194
    %v2196 = vmul.f32 %v2189, 1.442695
    %v2197 = vpow.pop %v2196
    %v2198 = vmul.f32 %v2190, 1.442695
    %v2199 = vpow.pop %v2198
    %v2200 = vmul.f32 %v2191, 1.442695
    %v2201 = vpow.pop %v2200
    %v2202 = vmul.f32 %v2192, 1.442695
    %v2203 = vpow.pop %v2202
    %v2204 = vmul.f32 %v2193, 1.442695
    %v2205 = vpow.pop %v2204
    %v2206 = vadd.f32 %v2195, 1.0
    %v2207 = vadd.f32 %v2197, 1.0
    %v2208 = vadd.f32 %v2199, 1.0
    %v2209 = vadd.f32 %v2201, 1.0
    %v2210 = vadd.f32 %v2203, 1.0
    %v2211 = vadd.f32 %v2205, 1.0
    %v2212 = vrcp.pop %v2206
    %v2213 = vmul.f32 1.0, %v2212
    %v2214 = vrcp.pop %v2207
    %v2215 = vmul.f32 1.0, %v2214
    %v2216 = vrcp.pop %v2208
    %v2217 = vmul.f32 1.0, %v2216
    %v2218 = vrcp.pop %v2209
    %v2219 = vmul.f32 1.0, %v2218
    %v2220 = vrcp.pop %v2210
    %v2221 = vmul.f32 1.0, %v2220
    %v2222 = vrcp.pop %v2211
    %v2223 = vmul.f32 1.0, %v2222
    %v2224 = vtanh.pop %v2183
    %v2225 = vtanh.pop %v2187
    %v2228 = vrot.slane %v1867, 7
    %v2229 = vrot.slane %v1868, 7
    %v2232 = vmul.f32 %v2215, %v2228
    %v2233 = vmul.f32 %v2221, %v2229
    %v2234 = vmul.f32 %v2213, %v2224
    %v2235 = vmul.f32 %v2219, %v2225
    %v2236 = vadd.f32 %v2232, %v2234
    %v2237 = vadd.f32 %v2233, %v2235
    %v2238 = vtanh.pop %v2236
    %v2239 = vtanh.pop %v2237
    %v2240 = vmul.f32 %v2217, %v2238
    %v2241 = vmul.f32 %v2223, %v2239
    %2242 = vst [vmem:[#allocation2] sm:$0x8] %v2240
    %2243 = vst [vmem:[#allocation2 + $0x8] sm:$0x8] %v2241
    %v2244 = vpack.c.bf16 %v2240, %v2240
    %v2245 = vpack.c.bf16 %v2241, %v2241
    %v2246 = vld [vmem:[%s7] sm:$0xff]
    %v2247 = vld [vmem:[%s7 + $0x8] sm:$0xff]
    %v2248 = vld [vmem:[%s7 + $0x10] sm:$0xff]
    %v2249 = vld [vmem:[%s7 + $0x18] sm:$0xff]
    %v2250 = vld [vmem:[%s7 + $0x20] sm:$0xff]
    %v2251 = vld [vmem:[%s7 + $0x28] sm:$0xff]
    %v2252 = vld [vmem:[%s7 + $0x30] sm:$0xff]
    %v2253 = vld [vmem:[%s7 + $0x38] sm:$0xff]
    %v2254 = vld [vmem:[%s7 + $0x40] sm:$0xff]
    %v2255 = vld [vmem:[%s7 + $0x48] sm:$0xff]
    %v2256 = vld [vmem:[%s7 + $0x50] sm:$0xff]
    %v2257 = vld [vmem:[%s7 + $0x58] sm:$0xff]
    %v2258 = vld [vmem:[%s7 + $0x60] sm:$0xff]
    %v2259 = vld [vmem:[%s7 + $0x68] sm:$0xff]
    %v2260 = vld [vmem:[%s7 + $0x70] sm:$0xff]
    %v2261 = vld [vmem:[%s7 + $0x78] sm:$0xff]
    %v2262 = vld [vmem:[%s7 + $0x80] sm:$0xff]
    %v2263 = vld [vmem:[%s7 + $0x88] sm:$0xff]
    %v2264 = vld [vmem:[%s7 + $0x90] sm:$0xff]
    %v2265 = vld [vmem:[%s7 + $0x98] sm:$0xff]
    %v2266 = vld [vmem:[%s7 + $0xa0] sm:$0xff]
    %v2267 = vld [vmem:[%s7 + $0xa8] sm:$0xff]
    %v2268 = vld [vmem:[%s7 + $0xb0] sm:$0xff]
    %v2269 = vld [vmem:[%s7 + $0xb8] sm:$0xff]
    %v2270 = vld [vmem:[%s7 + $0xc0] sm:$0xff]
    %v2271 = vld [vmem:[%s7 + $0xc8] sm:$0xff]
    %v2272 = vld [vmem:[%s7 + $0xd0] sm:$0xff]
    %v2273 = vld [vmem:[%s7 + $0xd8] sm:$0xff]
    %v2274 = vld [vmem:[%s7 + $0xe0] sm:$0xff]
    %v2275 = vld [vmem:[%s7 + $0xe8] sm:$0xff]
    %v2276 = vld [vmem:[%s7 + $0xf0] sm:$0xff]
    %v2277 = vld [vmem:[%s7 + $0xf8] sm:$0xff]
    %v2280 = vunpack.c.l.b16 %v2244
    %v2281 = vunpack.c.l.b16 %v2245
    %v2282 = vrot.slane %v2280, 3
    %v2283 = vrot.slane %v2281, 2
    %v2284 = vsel %vm1181, %v2283, %v2282
    %v2285 = vpack.c.b16 %v2284, %v2284
    %v2319 = vunpack.c.l.b16 %v2246
    %v2320 = vunpack.c.h.b16 %v2246
    %v2321 = vunpack.c.l.b16 %v2247
    %v2322 = vunpack.c.h.b16 %v2247
    %v2323 = vunpack.c.l.b16 %v2248
    %v2324 = vunpack.c.h.b16 %v2248
    %v2325 = vunpack.c.l.b16 %v2249
    %v2326 = vunpack.c.h.b16 %v2249
    %v2327 = vunpack.c.l.b16 %v2250
    %v2328 = vunpack.c.h.b16 %v2250
    %v2329 = vunpack.c.l.b16 %v2251
    %v2330 = vunpack.c.h.b16 %v2251
    %v2331 = vunpack.c.l.b16 %v2252
    %v2332 = vunpack.c.h.b16 %v2252
    %v2333 = vunpack.c.l.b16 %v2253
    %v2334 = vunpack.c.h.b16 %v2253
    %v2335 = vunpack.c.l.b16 %v2254
    %v2336 = vunpack.c.h.b16 %v2254
    %v2337 = vunpack.c.l.b16 %v2255
    %v2338 = vunpack.c.h.b16 %v2255
    %v2339 = vunpack.c.l.b16 %v2256
    %v2340 = vunpack.c.h.b16 %v2256
    %v2341 = vunpack.c.l.b16 %v2257
    %v2342 = vunpack.c.h.b16 %v2257
    %v2343 = vunpack.c.l.b16 %v2258
    %v2344 = vunpack.c.h.b16 %v2258
    %v2345 = vunpack.c.l.b16 %v2259
    %v2346 = vunpack.c.h.b16 %v2259
    %v2347 = vunpack.c.l.b16 %v2260
    %v2348 = vunpack.c.h.b16 %v2260
    %v2349 = vunpack.c.l.b16 %v2261
    %v2350 = vunpack.c.h.b16 %v2261
    %v2351 = vunpack.c.l.b16 %v2262
    %v2352 = vunpack.c.h.b16 %v2262
    %v2353 = vunpack.c.l.b16 %v2263
    %v2354 = vunpack.c.h.b16 %v2263
    %v2355 = vunpack.c.l.b16 %v2264
    %v2356 = vunpack.c.h.b16 %v2264
    %v2357 = vunpack.c.l.b16 %v2265
    %v2358 = vunpack.c.h.b16 %v2265
    %v2359 = vunpack.c.l.b16 %v2266
    %v2360 = vunpack.c.h.b16 %v2266
    %v2361 = vunpack.c.l.b16 %v2267
    %v2362 = vunpack.c.h.b16 %v2267
    %v2363 = vunpack.c.l.b16 %v2268
    %v2364 = vunpack.c.h.b16 %v2268
    %v2365 = vunpack.c.l.b16 %v2269
    %v2366 = vunpack.c.h.b16 %v2269
    %v2367 = vunpack.c.l.b16 %v2270
    %v2368 = vunpack.c.h.b16 %v2270
    %v2369 = vunpack.c.l.b16 %v2271
    %v2370 = vunpack.c.h.b16 %v2271
    %v2371 = vunpack.c.l.b16 %v2272
    %v2372 = vunpack.c.h.b16 %v2272
    %v2373 = vunpack.c.l.b16 %v2273
    %v2374 = vunpack.c.h.b16 %v2273
    %v2375 = vunpack.c.l.b16 %v2274
    %v2376 = vunpack.c.h.b16 %v2274
    %v2377 = vunpack.c.l.b16 %v2275
    %v2378 = vunpack.c.h.b16 %v2275
    %v2379 = vunpack.c.l.b16 %v2276
    %v2380 = vunpack.c.h.b16 %v2276
    %v2381 = vunpack.c.l.b16 %v2277
    %v2382 = vunpack.c.h.b16 %v2277
    %v2383 = vpack.c.b16 %v2323, %v2319
    %v2384 = vpack.c.b16 %v2324, %v2320
    %v2385 = vpack.c.b16 %v2325, %v2321
    %v2386 = vpack.c.b16 %v2326, %v2322
    %v2387 = vpack.c.b16 %v2331, %v2327
    %v2388 = vpack.c.b16 %v2332, %v2328
    %v2389 = vpack.c.b16 %v2333, %v2329
    %v2390 = vpack.c.b16 %v2334, %v2330
    %v2391 = vpack.c.b16 %v2339, %v2335
    %v2392 = vpack.c.b16 %v2340, %v2336
    %v2393 = vpack.c.b16 %v2341, %v2337
    %v2394 = vpack.c.b16 %v2342, %v2338
    %v2395 = vpack.c.b16 %v2347, %v2343
    %v2396 = vpack.c.b16 %v2348, %v2344
    %v2397 = vpack.c.b16 %v2349, %v2345
    %v2398 = vpack.c.b16 %v2350, %v2346
    %v2399 = vpack.c.b16 %v2355, %v2351
    %v2400 = vpack.c.b16 %v2356, %v2352
    %v2401 = vpack.c.b16 %v2357, %v2353
    %v2402 = vpack.c.b16 %v2358, %v2354
    %v2403 = vpack.c.b16 %v2363, %v2359
    %v2404 = vpack.c.b16 %v2364, %v2360
    %v2405 = vpack.c.b16 %v2365, %v2361
    %v2406 = vpack.c.b16 %v2366, %v2362
    %v2407 = vpack.c.b16 %v2371, %v2367
    %v2408 = vpack.c.b16 %v2372, %v2368
    %v2409 = vpack.c.b16 %v2373, %v2369
    %v2410 = vpack.c.b16 %v2374, %v2370
    %v2411 = vpack.c.b16 %v2379, %v2375
    %v2412 = vpack.c.b16 %v2380, %v2376
    %v2413 = vpack.c.b16 %v2381, %v2377
    %v2414 = vpack.c.b16 %v2382, %v2378
    %2447 = vmatprep.subr.bf16.mxu0 %v2384
    %2448 = vmatpush1.bf16.msra.mxu0 %v2383
    %2449 = vmatprep.subr.bf16.mxu0 %v2388
    %2450 = vmatpush1.bf16.msra.mxu0 %v2387
    %2451 = vmatprep.subr.bf16.mxu0 %v2392
    %2452 = vmatpush1.bf16.msra.mxu0 %v2391
    %2453 = vmatprep.subr.bf16.mxu0 %v2396
    %2454 = vmatpush1.bf16.msra.mxu0 %v2395
    %2455 = vmatprep.subr.bf16.mxu0 %v2400
    %2456 = vmatpush1.bf16.msra.mxu0 %v2399
    %2457 = vmatprep.subr.bf16.mxu0 %v2404
    %2458 = vmatpush1.bf16.msra.mxu0 %v2403
    %2459 = vmatprep.subr.bf16.mxu0 %v2408
    %2460 = vmatpush1.bf16.msra.mxu0 %v2407
    %2461 = vmatprep.subr.bf16.mxu0 %v2412
    %2462 = vmatpush1.bf16.msra.mxu0 %v2411
    %2463 = vmatprep.subr.bf16.mxu0 0
    %2464 = vmatpush1.bf16.msra.mxu0 0
    %2465 = vmatprep.subr.bf16.mxu0 0
    %2466 = vmatpush1.bf16.msra.mxu0 0
    %2467 = vmatprep.subr.bf16.mxu0 0
    %2468 = vmatpush1.bf16.msra.mxu0 0
    %2469 = vmatprep.subr.bf16.mxu0 0
    %2470 = vmatpush1.bf16.msra.mxu0 0
    %2471 = vmatprep.subr.bf16.mxu0 0
    %2472 = vmatpush1.bf16.msra.mxu0 0
    %2473 = vmatprep.subr.bf16.mxu0 0
    %2474 = vmatpush1.bf16.msra.mxu0 0
    %2475 = vmatprep.subr.bf16.mxu0 0
    %2476 = vmatpush1.bf16.msra.mxu0 0
    %2477 = vmatprep.subr.bf16.mxu0 0
    %2478 = vmatpush1.bf16.msra.mxu0 0
    %2479 = vmatprep.mubr.bf16.mxu0 0
    %2480 = vmatmul.mubr.bf16.gmra.mrb[0].mxu0 %v2285
    %v2481 = vpop.f32.mrb[0].mxu0
    %v2482 = vadd.f32 0.0, %v2481
    %v2483 = vpop.f32.mrb[0].mxu0
    %v2484 = vadd.f32 0.0, %v2483
    %v2485 = vpop.f32.mrb[0].mxu0
    %v2486 = vpop.f32.mrb[0].mxu0
    %2487 = vdwg.mxu0
    %2488 = vmatprep.subr.bf16.mxu0 %v2386
    %2489 = vmatpush1.bf16.msra.mxu0 %v2385
    %2490 = vmatprep.subr.bf16.mxu0 %v2390
    %2491 = vmatpush1.bf16.msra.mxu0 %v2389
    %2492 = vmatprep.subr.bf16.mxu0 %v2394
    %2493 = vmatpush1.bf16.msra.mxu0 %v2393
    %2494 = vmatprep.subr.bf16.mxu0 %v2398
    %2495 = vmatpush1.bf16.msra.mxu0 %v2397
    %2496 = vmatprep.subr.bf16.mxu0 %v2402
    %2497 = vmatpush1.bf16.msra.mxu0 %v2401
    %2498 = vmatprep.subr.bf16.mxu0 %v2406
    %2499 = vmatpush1.bf16.msra.mxu0 %v2405
    %2500 = vmatprep.subr.bf16.mxu0 %v2410
    %2501 = vmatpush1.bf16.msra.mxu0 %v2409
    %2502 = vmatprep.subr.bf16.mxu0 %v2414
    %2503 = vmatpush1.bf16.msra.mxu0 %v2413
    %2504 = vmatprep.subr.bf16.mxu0 0
    %2505 = vmatpush1.bf16.msra.mxu0 0
    %2506 = vmatprep.subr.bf16.mxu0 0
    %2507 = vmatpush1.bf16.msra.mxu0 0
    %2508 = vmatprep.subr.bf16.mxu0 0
    %2509 = vmatpush1.bf16.msra.mxu0 0
    %2510 = vmatprep.subr.bf16.mxu0 0
    %2511 = vmatpush1.bf16.msra.mxu0 0
    %2512 = vmatprep.subr.bf16.mxu0 0
    %2513 = vmatpush1.bf16.msra.mxu0 0
    %2514 = vmatprep.subr.bf16.mxu0 0
    %2515 = vmatpush1.bf16.msra.mxu0 0
    %2516 = vmatprep.subr.bf16.mxu0 0
    %2517 = vmatpush1.bf16.msra.mxu0 0
    %2518 = vmatprep.subr.bf16.mxu0 0
    %2519 = vmatpush1.bf16.msra.mxu0 0
    %2520 = vmatprep.mubr.bf16.mxu0 0
    %2521 = vmatmul.mubr.bf16.gmra.mrb[0].mxu0 %v2285
    %v2522 = vpop.f32.mrb[0].mxu0
    %v2523 = vadd.f32 0.0, %v2522
    %v2524 = vpop.f32.mrb[0].mxu0
    %v2525 = vadd.f32 0.0, %v2524
    %v2526 = vpop.f32.mrb[0].mxu0
    %v2527 = vpop.f32.mrb[0].mxu0
    %2528 = vdwg.mxu0
    %v2533 = vrot.slane %v2482, 4
    %v2534 = vrot.slane %v2484, 4
    %v2535 = vrot.slane %v2523, 4
    %v2536 = vrot.slane %v2525, 4
    %v2537 = vrot.slane %v2482, 5
    %v2538 = vrot.slane %v2484, 5
    %v2539 = vrot.slane %v2523, 5
    %v2540 = vrot.slane %v2525, 5
    %v2549 = vadd.f32 %v736, %v2533
    %v2550 = vadd.f32 %v738, %v2534
    %v2551 = vadd.f32 %v779, %v2535
    %v2552 = vadd.f32 %v781, %v2536
    %v2553 = vadd.f32 %v740, %v2537
    %v2554 = vadd.f32 %v742, %v2538
    %v2555 = vadd.f32 %v783, %v2539
    %v2556 = vadd.f32 %v785, %v2540
    %v2557 = vxor.u32 %v2549, 2147483648
    %v2558 = vxor.u32 %v2550, 2147483648
    %v2559 = vxor.u32 %v2551, 2147483648
    %v2560 = vxor.u32 %v2553, 2147483648
    %v2561 = vxor.u32 %v2554, 2147483648
    %v2562 = vxor.u32 %v2555, 2147483648
    %v2563 = vmul.f32 %v2557, 1.442695
    %v2564 = vpow.pop %v2563
    %v2565 = vmul.f32 %v2558, 1.442695
    %v2566 = vpow.pop %v2565
    %v2567 = vmul.f32 %v2559, 1.442695
    %v2568 = vpow.pop %v2567
    %v2569 = vmul.f32 %v2560, 1.442695
    %v2570 = vpow.pop %v2569
    %v2571 = vmul.f32 %v2561, 1.442695
    %v2572 = vpow.pop %v2571
    %v2573 = vmul.f32 %v2562, 1.442695
    %v2574 = vpow.pop %v2573
    %v2575 = vadd.f32 %v2564, 1.0
    %v2576 = vadd.f32 %v2566, 1.0
    %v2577 = vadd.f32 %v2568, 1.0
    %v2578 = vadd.f32 %v2570, 1.0
    %v2579 = vadd.f32 %v2572, 1.0
    %v2580 = vadd.f32 %v2574, 1.0
    %v2581 = vrcp.pop %v2575
    %v2582 = vmul.f32 1.0, %v2581
    %v2583 = vrcp.pop %v2576
    %v2584 = vmul.f32 1.0, %v2583
    %v2585 = vrcp.pop %v2577
    %v2586 = vmul.f32 1.0, %v2585
    %v2587 = vrcp.pop %v2578
    %v2588 = vmul.f32 1.0, %v2587
    %v2589 = vrcp.pop %v2579
    %v2590 = vmul.f32 1.0, %v2589
    %v2591 = vrcp.pop %v2580
    %v2592 = vmul.f32 1.0, %v2591
    %v2593 = vtanh.pop %v2552
    %v2594 = vtanh.pop %v2556
    %v2597 = vrot.slane %v2236, 7
    %v2598 = vrot.slane %v2237, 7
    %v2601 = vmul.f32 %v2584, %v2597
    %v2602 = vmul.f32 %v2590, %v2598
    %v2603 = vmul.f32 %v2582, %v2593
    %v2604 = vmul.f32 %v2588, %v2594
    %v2605 = vadd.f32 %v2601, %v2603
    %v2606 = vadd.f32 %v2602, %v2604
    %v2607 = vtanh.pop %v2605
    %v2608 = vtanh.pop %v2606
    %v2609 = vmul.f32 %v2586, %v2607
    %v2610 = vmul.f32 %v2592, %v2608
    %2611 = vst [vmem:[#allocation2] sm:$0x10] %v2609
    %2612 = vst [vmem:[#allocation2 + $0x8] sm:$0x10] %v2610
    %v2613 = vpack.c.bf16 %v2609, %v2609
    %v2614 = vpack.c.bf16 %v2610, %v2610
    %v2615 = vld [vmem:[%s7] sm:$0xff]
    %v2616 = vld [vmem:[%s7 + $0x8] sm:$0xff]
    %v2617 = vld [vmem:[%s7 + $0x10] sm:$0xff]
    %v2618 = vld [vmem:[%s7 + $0x18] sm:$0xff]
    %v2619 = vld [vmem:[%s7 + $0x20] sm:$0xff]
    %v2620 = vld [vmem:[%s7 + $0x28] sm:$0xff]
    %v2621 = vld [vmem:[%s7 + $0x30] sm:$0xff]
    %v2622 = vld [vmem:[%s7 + $0x38] sm:$0xff]
    %v2623 = vld [vmem:[%s7 + $0x40] sm:$0xff]
    %v2624 = vld [vmem:[%s7 + $0x48] sm:$0xff]
    %v2625 = vld [vmem:[%s7 + $0x50] sm:$0xff]
    %v2626 = vld [vmem:[%s7 + $0x58] sm:$0xff]
    %v2627 = vld [vmem:[%s7 + $0x60] sm:$0xff]
    %v2628 = vld [vmem:[%s7 + $0x68] sm:$0xff]
    %v2629 = vld [vmem:[%s7 + $0x70] sm:$0xff]
    %v2630 = vld [vmem:[%s7 + $0x78] sm:$0xff]
    %v2631 = vld [vmem:[%s7 + $0x80] sm:$0xff]
    %v2632 = vld [vmem:[%s7 + $0x88] sm:$0xff]
    %v2633 = vld [vmem:[%s7 + $0x90] sm:$0xff]
    %v2634 = vld [vmem:[%s7 + $0x98] sm:$0xff]
    %v2635 = vld [vmem:[%s7 + $0xa0] sm:$0xff]
    %v2636 = vld [vmem:[%s7 + $0xa8] sm:$0xff]
    %v2637 = vld [vmem:[%s7 + $0xb0] sm:$0xff]
    %v2638 = vld [vmem:[%s7 + $0xb8] sm:$0xff]
    %v2639 = vld [vmem:[%s7 + $0xc0] sm:$0xff]
    %v2640 = vld [vmem:[%s7 + $0xc8] sm:$0xff]
    %v2641 = vld [vmem:[%s7 + $0xd0] sm:$0xff]
    %v2642 = vld [vmem:[%s7 + $0xd8] sm:$0xff]
    %v2643 = vld [vmem:[%s7 + $0xe0] sm:$0xff]
    %v2644 = vld [vmem:[%s7 + $0xe8] sm:$0xff]
    %v2645 = vld [vmem:[%s7 + $0xf0] sm:$0xff]
    %v2646 = vld [vmem:[%s7 + $0xf8] sm:$0xff]
    %v2649 = vunpack.c.l.b16 %v2613
    %v2650 = vunpack.c.l.b16 %v2614
    %v2651 = vrot.slane %v2649, 4
    %v2652 = vrot.slane %v2650, 3
    %v2653 = vsel %vm1181, %v2652, %v2651
    %v2654 = vpack.c.b16 %v2653, %v2653
    %v2688 = vunpack.c.l.b16 %v2615
    %v2689 = vunpack.c.h.b16 %v2615
    %v2690 = vunpack.c.l.b16 %v2616
    %v2691 = vunpack.c.h.b16 %v2616
    %v2692 = vunpack.c.l.b16 %v2617
    %v2693 = vunpack.c.h.b16 %v2617
    %v2694 = vunpack.c.l.b16 %v2618
    %v2695 = vunpack.c.h.b16 %v2618
    %v2696 = vunpack.c.l.b16 %v2619
    %v2697 = vunpack.c.h.b16 %v2619
    %v2698 = vunpack.c.l.b16 %v2620
    %v2699 = vunpack.c.h.b16 %v2620
    %v2700 = vunpack.c.l.b16 %v2621
    %v2701 = vunpack.c.h.b16 %v2621
    %v2702 = vunpack.c.l.b16 %v2622
    %v2703 = vunpack.c.h.b16 %v2622
    %v2704 = vunpack.c.l.b16 %v2623
    %v2705 = vunpack.c.h.b16 %v2623
    %v2706 = vunpack.c.l.b16 %v2624
    %v2707 = vunpack.c.h.b16 %v2624
    %v2708 = vunpack.c.l.b16 %v2625
    %v2709 = vunpack.c.h.b16 %v2625
    %v2710 = vunpack.c.l.b16 %v2626
    %v2711 = vunpack.c.h.b16 %v2626
    %v2712 = vunpack.c.l.b16 %v2627
    %v2713 = vunpack.c.h.b16 %v2627
    %v2714 = vunpack.c.l.b16 %v2628
    %v2715 = vunpack.c.h.b16 %v2628
    %v2716 = vunpack.c.l.b16 %v2629
    %v2717 = vunpack.c.h.b16 %v2629
    %v2718 = vunpack.c.l.b16 %v2630
    %v2719 = vunpack.c.h.b16 %v2630
    %v2720 = vunpack.c.l.b16 %v2631
    %v2721 = vunpack.c.h.b16 %v2631
    %v2722 = vunpack.c.l.b16 %v2632
    %v2723 = vunpack.c.h.b16 %v2632
    %v2724 = vunpack.c.l.b16 %v2633
    %v2725 = vunpack.c.h.b16 %v2633
    %v2726 = vunpack.c.l.b16 %v2634
    %v2727 = vunpack.c.h.b16 %v2634
    %v2728 = vunpack.c.l.b16 %v2635
    %v2729 = vunpack.c.h.b16 %v2635
    %v2730 = vunpack.c.l.b16 %v2636
    %v2731 = vunpack.c.h.b16 %v2636
    %v2732 = vunpack.c.l.b16 %v2637
    %v2733 = vunpack.c.h.b16 %v2637
    %v2734 = vunpack.c.l.b16 %v2638
    %v2735 = vunpack.c.h.b16 %v2638
    %v2736 = vunpack.c.l.b16 %v2639
    %v2737 = vunpack.c.h.b16 %v2639
    %v2738 = vunpack.c.l.b16 %v2640
    %v2739 = vunpack.c.h.b16 %v2640
    %v2740 = vunpack.c.l.b16 %v2641
    %v2741 = vunpack.c.h.b16 %v2641
    %v2742 = vunpack.c.l.b16 %v2642
    %v2743 = vunpack.c.h.b16 %v2642
    %v2744 = vunpack.c.l.b16 %v2643
    %v2745 = vunpack.c.h.b16 %v2643
    %v2746 = vunpack.c.l.b16 %v2644
    %v2747 = vunpack.c.h.b16 %v2644
    %v2748 = vunpack.c.l.b16 %v2645
    %v2749 = vunpack.c.h.b16 %v2645
    %v2750 = vunpack.c.l.b16 %v2646
    %v2751 = vunpack.c.h.b16 %v2646
    %v2752 = vpack.c.b16 %v2692, %v2688
    %v2753 = vpack.c.b16 %v2693, %v2689
    %v2754 = vpack.c.b16 %v2694, %v2690
    %v2755 = vpack.c.b16 %v2695, %v2691
    %v2756 = vpack.c.b16 %v2700, %v2696
    %v2757 = vpack.c.b16 %v2701, %v2697
    %v2758 = vpack.c.b16 %v2702, %v2698
    %v2759 = vpack.c.b16 %v2703, %v2699
    %v2760 = vpack.c.b16 %v2708, %v2704
    %v2761 = vpack.c.b16 %v2709, %v2705
    %v2762 = vpack.c.b16 %v2710, %v2706
    %v2763 = vpack.c.b16 %v2711, %v2707
    %v2764 = vpack.c.b16 %v2716, %v2712
    %v2765 = vpack.c.b16 %v2717, %v2713
    %v2766 = vpack.c.b16 %v2718, %v2714
    %v2767 = vpack.c.b16 %v2719, %v2715
    %v2768 = vpack.c.b16 %v2724, %v2720
    %v2769 = vpack.c.b16 %v2725, %v2721
    %v2770 = vpack.c.b16 %v2726, %v2722
    %v2771 = vpack.c.b16 %v2727, %v2723
    %v2772 = vpack.c.b16 %v2732, %v2728
    %v2773 = vpack.c.b16 %v2733, %v2729
    %v2774 = vpack.c.b16 %v2734, %v2730
    %v2775 = vpack.c.b16 %v2735, %v2731
    %v2776 = vpack.c.b16 %v2740, %v2736
    %v2777 = vpack.c.b16 %v2741, %v2737
    %v2778 = vpack.c.b16 %v2742, %v2738
    %v2779 = vpack.c.b16 %v2743, %v2739
    %v2780 = vpack.c.b16 %v2748, %v2744
    %v2781 = vpack.c.b16 %v2749, %v2745
    %v2782 = vpack.c.b16 %v2750, %v2746
    %v2783 = vpack.c.b16 %v2751, %v2747
    %2816 = vmatprep.subr.bf16.mxu0 %v2753
    %2817 = vmatpush1.bf16.msra.mxu0 %v2752
    %2818 = vmatprep.subr.bf16.mxu0 %v2757
    %2819 = vmatpush1.bf16.msra.mxu0 %v2756
    %2820 = vmatprep.subr.bf16.mxu0 %v2761
    %2821 = vmatpush1.bf16.msra.mxu0 %v2760
    %2822 = vmatprep.subr.bf16.mxu0 %v2765
    %2823 = vmatpush1.bf16.msra.mxu0 %v2764
    %2824 = vmatprep.subr.bf16.mxu0 %v2769
    %2825 = vmatpush1.bf16.msra.mxu0 %v2768
    %2826 = vmatprep.subr.bf16.mxu0 %v2773
    %2827 = vmatpush1.bf16.msra.mxu0 %v2772
    %2828 = vmatprep.subr.bf16.mxu0 %v2777
    %2829 = vmatpush1.bf16.msra.mxu0 %v2776
    %2830 = vmatprep.subr.bf16.mxu0 %v2781
    %2831 = vmatpush1.bf16.msra.mxu0 %v2780
    %2832 = vmatprep.subr.bf16.mxu0 0
    %2833 = vmatpush1.bf16.msra.mxu0 0
    %2834 = vmatprep.subr.bf16.mxu0 0
    %2835 = vmatpush1.bf16.msra.mxu0 0
    %2836 = vmatprep.subr.bf16.mxu0 0
    %2837 = vmatpush1.bf16.msra.mxu0 0
    %2838 = vmatprep.subr.bf16.mxu0 0
    %2839 = vmatpush1.bf16.msra.mxu0 0
    %2840 = vmatprep.subr.bf16.mxu0 0
    %2841 = vmatpush1.bf16.msra.mxu0 0
    %2842 = vmatprep.subr.bf16.mxu0 0
    %2843 = vmatpush1.bf16.msra.mxu0 0
    %2844 = vmatprep.subr.bf16.mxu0 0
    %2845 = vmatpush1.bf16.msra.mxu0 0
    %2846 = vmatprep.subr.bf16.mxu0 0
    %2847 = vmatpush1.bf16.msra.mxu0 0
    %2848 = vmatprep.mubr.bf16.mxu0 0
    %2849 = vmatmul.mubr.bf16.gmra.mrb[0].mxu0 %v2654
    %v2850 = vpop.f32.mrb[0].mxu0
    %v2851 = vadd.f32 0.0, %v2850
    %v2852 = vpop.f32.mrb[0].mxu0
    %v2853 = vadd.f32 0.0, %v2852
    %v2854 = vpop.f32.mrb[0].mxu0
    %v2855 = vpop.f32.mrb[0].mxu0
    %2856 = vdwg.mxu0
    %2857 = vmatprep.subr.bf16.mxu0 %v2755
    %2858 = vmatpush1.bf16.msra.mxu0 %v2754
    %2859 = vmatprep.subr.bf16.mxu0 %v2759
    %2860 = vmatpush1.bf16.msra.mxu0 %v2758
    %2861 = vmatprep.subr.bf16.mxu0 %v2763
    %2862 = vmatpush1.bf16.msra.mxu0 %v2762
    %2863 = vmatprep.subr.bf16.mxu0 %v2767
    %2864 = vmatpush1.bf16.msra.mxu0 %v2766
    %2865 = vmatprep.subr.bf16.mxu0 %v2771
    %2866 = vmatpush1.bf16.msra.mxu0 %v2770
    %2867 = vmatprep.subr.bf16.mxu0 %v2775
    %2868 = vmatpush1.bf16.msra.mxu0 %v2774
    %2869 = vmatprep.subr.bf16.mxu0 %v2779
    %2870 = vmatpush1.bf16.msra.mxu0 %v2778
    %2871 = vmatprep.subr.bf16.mxu0 %v2783
    %2872 = vmatpush1.bf16.msra.mxu0 %v2782
    %2873 = vmatprep.subr.bf16.mxu0 0
    %2874 = vmatpush1.bf16.msra.mxu0 0
    %2875 = vmatprep.subr.bf16.mxu0 0
    %2876 = vmatpush1.bf16.msra.mxu0 0
    %2877 = vmatprep.subr.bf16.mxu0 0
    %2878 = vmatpush1.bf16.msra.mxu0 0
    %2879 = vmatprep.subr.bf16.mxu0 0
    %2880 = vmatpush1.bf16.msra.mxu0 0
    %2881 = vmatprep.subr.bf16.mxu0 0
    %2882 = vmatpush1.bf16.msra.mxu0 0
    %2883 = vmatprep.subr.bf16.mxu0 0
    %2884 = vmatpush1.bf16.msra.mxu0 0
    %2885 = vmatprep.subr.bf16.mxu0 0
    %2886 = vmatpush1.bf16.msra.mxu0 0
    %2887 = vmatprep.subr.bf16.mxu0 0
    %2888 = vmatpush1.bf16.msra.mxu0 0
    %2889 = vmatprep.mubr.bf16.mxu0 0
    %2890 = vmatmul.mubr.bf16.gmra.mrb[0].mxu0 %v2654
    %v2891 = vpop.f32.mrb[0].mxu0
    %v2892 = vadd.f32 0.0, %v2891
    %v2893 = vpop.f32.mrb[0].mxu0
    %v2894 = vadd.f32 0.0, %v2893
    %v2895 = vpop.f32.mrb[0].mxu0
    %v2896 = vpop.f32.mrb[0].mxu0
    %2897 = vdwg.mxu0
    %v2902 = vrot.slane %v2851, 3
    %v2903 = vrot.slane %v2853, 3
    %v2904 = vrot.slane %v2892, 3
    %v2905 = vrot.slane %v2894, 3
    %v2906 = vrot.slane %v2851, 4
    %v2907 = vrot.slane %v2853, 4
    %v2908 = vrot.slane %v2892, 4
    %v2909 = vrot.slane %v2894, 4
    %v2918 = vadd.f32 %v736, %v2902
    %v2919 = vadd.f32 %v738, %v2903
    %v2920 = vadd.f32 %v779, %v2904
    %v2921 = vadd.f32 %v781, %v2905
    %v2922 = vadd.f32 %v740, %v2906
    %v2923 = vadd.f32 %v742, %v2907
    %v2924 = vadd.f32 %v783, %v2908
    %v2925 = vadd.f32 %v785, %v2909
    %v2926 = vxor.u32 %v2918, 2147483648
    %v2927 = vxor.u32 %v2919, 2147483648
    %v2928 = vxor.u32 %v2920, 2147483648
    %v2929 = vxor.u32 %v2922, 2147483648
    %v2930 = vxor.u32 %v2923, 2147483648
    %v2931 = vxor.u32 %v2924, 2147483648
    %v2932 = vmul.f32 %v2926, 1.442695
    %v2933 = vpow.pop %v2932
    %v2934 = vmul.f32 %v2927, 1.442695
    %v2935 = vpow.pop %v2934
    %v2936 = vmul.f32 %v2928, 1.442695
    %v2937 = vpow.pop %v2936
    %v2938 = vmul.f32 %v2929, 1.442695
    %v2939 = vpow.pop %v2938
    %v2940 = vmul.f32 %v2930, 1.442695
    %v2941 = vpow.pop %v2940
    %v2942 = vmul.f32 %v2931, 1.442695
    %v2943 = vpow.pop %v2942
    %v2944 = vadd.f32 %v2933, 1.0
    %v2945 = vadd.f32 %v2935, 1.0
    %v2946 = vadd.f32 %v2937, 1.0
    %v2947 = vadd.f32 %v2939, 1.0
    %v2948 = vadd.f32 %v2941, 1.0
    %v2949 = vadd.f32 %v2943, 1.0
    %v2950 = vrcp.pop %v2944
    %v2951 = vmul.f32 1.0, %v2950
    %v2952 = vrcp.pop %v2945
    %v2953 = vmul.f32 1.0, %v2952
    %v2954 = vrcp.pop %v2946
    %v2955 = vmul.f32 1.0, %v2954
    %v2956 = vrcp.pop %v2947
    %v2957 = vmul.f32 1.0, %v2956
    %v2958 = vrcp.pop %v2948
    %v2959 = vmul.f32 1.0, %v2958
    %v2960 = vrcp.pop %v2949
    %v2961 = vmul.f32 1.0, %v2960
    %v2962 = vtanh.pop %v2921
    %v2963 = vtanh.pop %v2925
    %v2966 = vrot.slane %v2605, 7
    %v2967 = vrot.slane %v2606, 7
    %v2970 = vmul.f32 %v2953, %v2966
    %v2971 = vmul.f32 %v2959, %v2967
    %v2972 = vmul.f32 %v2951, %v2962
    %v2973 = vmul.f32 %v2957, %v2963
    %v2974 = vadd.f32 %v2970, %v2972
    %v2975 = vadd.f32 %v2971, %v2973
    %v2976 = vtanh.pop %v2974
    %v2977 = vtanh.pop %v2975
    %v2978 = vmul.f32 %v2955, %v2976
    %v2979 = vmul.f32 %v2961, %v2977
    %2980 = vst [vmem:[#allocation2] sm:$0x20] %v2978
    %2981 = vst [vmem:[#allocation2 + $0x8] sm:$0x20] %v2979
    %v2982 = vpack.c.bf16 %v2978, %v2978
    %v2983 = vpack.c.bf16 %v2979, %v2979
    %v2984 = vld [vmem:[%s7] sm:$0xff]
    %v2985 = vld [vmem:[%s7 + $0x8] sm:$0xff]
    %v2986 = vld [vmem:[%s7 + $0x10] sm:$0xff]
    %v2987 = vld [vmem:[%s7 + $0x18] sm:$0xff]
    %v2988 = vld [vmem:[%s7 + $0x20] sm:$0xff]
    %v2989 = vld [vmem:[%s7 + $0x28] sm:$0xff]
    %v2990 = vld [vmem:[%s7 + $0x30] sm:$0xff]
    %v2991 = vld [vmem:[%s7 + $0x38] sm:$0xff]
    %v2992 = vld [vmem:[%s7 + $0x40] sm:$0xff]
    %v2993 = vld [vmem:[%s7 + $0x48] sm:$0xff]
    %v2994 = vld [vmem:[%s7 + $0x50] sm:$0xff]
    %v2995 = vld [vmem:[%s7 + $0x58] sm:$0xff]
    %v2996 = vld [vmem:[%s7 + $0x60] sm:$0xff]
    %v2997 = vld [vmem:[%s7 + $0x68] sm:$0xff]
    %v2998 = vld [vmem:[%s7 + $0x70] sm:$0xff]
    %v2999 = vld [vmem:[%s7 + $0x78] sm:$0xff]
    %v3000 = vld [vmem:[%s7 + $0x80] sm:$0xff]
    %v3001 = vld [vmem:[%s7 + $0x88] sm:$0xff]
    %v3002 = vld [vmem:[%s7 + $0x90] sm:$0xff]
    %v3003 = vld [vmem:[%s7 + $0x98] sm:$0xff]
    %v3004 = vld [vmem:[%s7 + $0xa0] sm:$0xff]
    %v3005 = vld [vmem:[%s7 + $0xa8] sm:$0xff]
    %v3006 = vld [vmem:[%s7 + $0xb0] sm:$0xff]
    %v3007 = vld [vmem:[%s7 + $0xb8] sm:$0xff]
    %v3008 = vld [vmem:[%s7 + $0xc0] sm:$0xff]
    %v3009 = vld [vmem:[%s7 + $0xc8] sm:$0xff]
    %v3010 = vld [vmem:[%s7 + $0xd0] sm:$0xff]
    %v3011 = vld [vmem:[%s7 + $0xd8] sm:$0xff]
    %v3012 = vld [vmem:[%s7 + $0xe0] sm:$0xff]
    %v3013 = vld [vmem:[%s7 + $0xe8] sm:$0xff]
    %v3014 = vld [vmem:[%s7 + $0xf0] sm:$0xff]
    %v3015 = vld [vmem:[%s7 + $0xf8] sm:$0xff]
    %v3018 = vunpack.c.l.b16 %v2982
    %v3019 = vunpack.c.l.b16 %v2983
    %v3020 = vrot.slane %v3018, 5
    %v3021 = vrot.slane %v3019, 4
    %v3022 = vsel %vm1181, %v3021, %v3020
    %v3023 = vpack.c.b16 %v3022, %v3022
    %v3057 = vunpack.c.l.b16 %v2984
    %v3058 = vunpack.c.h.b16 %v2984
    %v3059 = vunpack.c.l.b16 %v2985
    %v3060 = vunpack.c.h.b16 %v2985
    %v3061 = vunpack.c.l.b16 %v2986
    %v3062 = vunpack.c.h.b16 %v2986
    %v3063 = vunpack.c.l.b16 %v2987
    %v3064 = vunpack.c.h.b16 %v2987
    %v3065 = vunpack.c.l.b16 %v2988
    %v3066 = vunpack.c.h.b16 %v2988
    %v3067 = vunpack.c.l.b16 %v2989
    %v3068 = vunpack.c.h.b16 %v2989
    %v3069 = vunpack.c.l.b16 %v2990
    %v3070 = vunpack.c.h.b16 %v2990
    %v3071 = vunpack.c.l.b16 %v2991
    %v3072 = vunpack.c.h.b16 %v2991
    %v3073 = vunpack.c.l.b16 %v2992
    %v3074 = vunpack.c.h.b16 %v2992
    %v3075 = vunpack.c.l.b16 %v2993
    %v3076 = vunpack.c.h.b16 %v2993
    %v3077 = vunpack.c.l.b16 %v2994
    %v3078 = vunpack.c.h.b16 %v2994
    %v3079 = vunpack.c.l.b16 %v2995
    %v3080 = vunpack.c.h.b16 %v2995
    %v3081 = vunpack.c.l.b16 %v2996
    %v3082 = vunpack.c.h.b16 %v2996
    %v3083 = vunpack.c.l.b16 %v2997
    %v3084 = vunpack.c.h.b16 %v2997
    %v3085 = vunpack.c.l.b16 %v2998
    %v3086 = vunpack.c.h.b16 %v2998
    %v3087 = vunpack.c.l.b16 %v2999
    %v3088 = vunpack.c.h.b16 %v2999
    %v3089 = vunpack.c.l.b16 %v3000
    %v3090 = vunpack.c.h.b16 %v3000
    %v3091 = vunpack.c.l.b16 %v3001
    %v3092 = vunpack.c.h.b16 %v3001
    %v3093 = vunpack.c.l.b16 %v3002
    %v3094 = vunpack.c.h.b16 %v3002
    %v3095 = vunpack.c.l.b16 %v3003
    %v3096 = vunpack.c.h.b16 %v3003
    %v3097 = vunpack.c.l.b16 %v3004
    %v3098 = vunpack.c.h.b16 %v3004
    %v3099 = vunpack.c.l.b16 %v3005
    %v3100 = vunpack.c.h.b16 %v3005
    %v3101 = vunpack.c.l.b16 %v3006
    %v3102 = vunpack.c.h.b16 %v3006
    %v3103 = vunpack.c.l.b16 %v3007
    %v3104 = vunpack.c.h.b16 %v3007
    %v3105 = vunpack.c.l.b16 %v3008
    %v3106 = vunpack.c.h.b16 %v3008
    %v3107 = vunpack.c.l.b16 %v3009
    %v3108 = vunpack.c.h.b16 %v3009
    %v3109 = vunpack.c.l.b16 %v3010
    %v3110 = vunpack.c.h.b16 %v3010
    %v3111 = vunpack.c.l.b16 %v3011
    %v3112 = vunpack.c.h.b16 %v3011
    %v3113 = vunpack.c.l.b16 %v3012
    %v3114 = vunpack.c.h.b16 %v3012
    %v3115 = vunpack.c.l.b16 %v3013
    %v3116 = vunpack.c.h.b16 %v3013
    %v3117 = vunpack.c.l.b16 %v3014
    %v3118 = vunpack.c.h.b16 %v3014
    %v3119 = vunpack.c.l.b16 %v3015
    %v3120 = vunpack.c.h.b16 %v3015
    %v3121 = vpack.c.b16 %v3061, %v3057
    %v3122 = vpack.c.b16 %v3062, %v3058
    %v3123 = vpack.c.b16 %v3063, %v3059
    %v3124 = vpack.c.b16 %v3064, %v3060
    %v3125 = vpack.c.b16 %v3069, %v3065
    %v3126 = vpack.c.b16 %v3070, %v3066
    %v3127 = vpack.c.b16 %v3071, %v3067
    %v3128 = vpack.c.b16 %v3072, %v3068
    %v3129 = vpack.c.b16 %v3077, %v3073
    %v3130 = vpack.c.b16 %v3078, %v3074
    %v3131 = vpack.c.b16 %v3079, %v3075
    %v3132 = vpack.c.b16 %v3080, %v3076
    %v3133 = vpack.c.b16 %v3085, %v3081
    %v3134 = vpack.c.b16 %v3086, %v3082
    %v3135 = vpack.c.b16 %v3087, %v3083
    %v3136 = vpack.c.b16 %v3088, %v3084
    %v3137 = vpack.c.b16 %v3093, %v3089
    %v3138 = vpack.c.b16 %v3094, %v3090
    %v3139 = vpack.c.b16 %v3095, %v3091
    %v3140 = vpack.c.b16 %v3096, %v3092
    %v3141 = vpack.c.b16 %v3101, %v3097
    %v3142 = vpack.c.b16 %v3102, %v3098
    %v3143 = vpack.c.b16 %v3103, %v3099
    %v3144 = vpack.c.b16 %v3104, %v3100
    %v3145 = vpack.c.b16 %v3109, %v3105
    %v3146 = vpack.c.b16 %v3110, %v3106
    %v3147 = vpack.c.b16 %v3111, %v3107
    %v3148 = vpack.c.b16 %v3112, %v3108
    %v3149 = vpack.c.b16 %v3117, %v3113
    %v3150 = vpack.c.b16 %v3118, %v3114
    %v3151 = vpack.c.b16 %v3119, %v3115
    %v3152 = vpack.c.b16 %v3120, %v3116
    %3185 = vmatprep.subr.bf16.mxu0 %v3122
    %3186 = vmatpush1.bf16.msra.mxu0 %v3121
    %3187 = vmatprep.subr.bf16.mxu0 %v3126
    %3188 = vmatpush1.bf16.msra.mxu0 %v3125
    %3189 = vmatprep.subr.bf16.mxu0 %v3130
    %3190 = vmatpush1.bf16.msra.mxu0 %v3129
    %3191 = vmatprep.subr.bf16.mxu0 %v3134
    %3192 = vmatpush1.bf16.msra.mxu0 %v3133
    %3193 = vmatprep.subr.bf16.mxu0 %v3138
    %3194 = vmatpush1.bf16.msra.mxu0 %v3137
    %3195 = vmatprep.subr.bf16.mxu0 %v3142
    %3196 = vmatpush1.bf16.msra.mxu0 %v3141
    %3197 = vmatprep.subr.bf16.mxu0 %v3146
    %3198 = vmatpush1.bf16.msra.mxu0 %v3145
    %3199 = vmatprep.subr.bf16.mxu0 %v3150
    %3200 = vmatpush1.bf16.msra.mxu0 %v3149
    %3201 = vmatprep.subr.bf16.mxu0 0
    %3202 = vmatpush1.bf16.msra.mxu0 0
    %3203 = vmatprep.subr.bf16.mxu0 0
    %3204 = vmatpush1.bf16.msra.mxu0 0
    %3205 = vmatprep.subr.bf16.mxu0 0
    %3206 = vmatpush1.bf16.msra.mxu0 0
    %3207 = vmatprep.subr.bf16.mxu0 0
    %3208 = vmatpush1.bf16.msra.mxu0 0
    %3209 = vmatprep.subr.bf16.mxu0 0
    %3210 = vmatpush1.bf16.msra.mxu0 0
    %3211 = vmatprep.subr.bf16.mxu0 0
    %3212 = vmatpush1.bf16.msra.mxu0 0
    %3213 = vmatprep.subr.bf16.mxu0 0
    %3214 = vmatpush1.bf16.msra.mxu0 0
    %3215 = vmatprep.subr.bf16.mxu0 0
    %3216 = vmatpush1.bf16.msra.mxu0 0
    %3217 = vmatprep.mubr.bf16.mxu0 0
    %3218 = vmatmul.mubr.bf16.gmra.mrb[0].mxu0 %v3023
    %v3219 = vpop.f32.mrb[0].mxu0
    %v3220 = vadd.f32 0.0, %v3219
    %v3221 = vpop.f32.mrb[0].mxu0
    %v3222 = vadd.f32 0.0, %v3221
    %v3223 = vpop.f32.mrb[0].mxu0
    %v3224 = vpop.f32.mrb[0].mxu0
    %3225 = vdwg.mxu0
    %3226 = vmatprep.subr.bf16.mxu0 %v3124
    %3227 = vmatpush1.bf16.msra.mxu0 %v3123
    %3228 = vmatprep.subr.bf16.mxu0 %v3128
    %3229 = vmatpush1.bf16.msra.mxu0 %v3127
    %3230 = vmatprep.subr.bf16.mxu0 %v3132
    %3231 = vmatpush1.bf16.msra.mxu0 %v3131
    %3232 = vmatprep.subr.bf16.mxu0 %v3136
    %3233 = vmatpush1.bf16.msra.mxu0 %v3135
    %3234 = vmatprep.subr.bf16.mxu0 %v3140
    %3235 = vmatpush1.bf16.msra.mxu0 %v3139
    %3236 = vmatprep.subr.bf16.mxu0 %v3144
    %3237 = vmatpush1.bf16.msra.mxu0 %v3143
    %3238 = vmatprep.subr.bf16.mxu0 %v3148
    %3239 = vmatpush1.bf16.msra.mxu0 %v3147
    %3240 = vmatprep.subr.bf16.mxu0 %v3152
    %3241 = vmatpush1.bf16.msra.mxu0 %v3151
    %3242 = vmatprep.subr.bf16.mxu0 0
    %3243 = vmatpush1.bf16.msra.mxu0 0
    %3244 = vmatprep.subr.bf16.mxu0 0
    %3245 = vmatpush1.bf16.msra.mxu0 0
    %3246 = vmatprep.subr.bf16.mxu0 0
    %3247 = vmatpush1.bf16.msra.mxu0 0
    %3248 = vmatprep.subr.bf16.mxu0 0
    %3249 = vmatpush1.bf16.msra.mxu0 0
    %3250 = vmatprep.subr.bf16.mxu0 0
    %3251 = vmatpush1.bf16.msra.mxu0 0
    %3252 = vmatprep.subr.bf16.mxu0 0
    %3253 = vmatpush1.bf16.msra.mxu0 0
    %3254 = vmatprep.subr.bf16.mxu0 0
    %3255 = vmatpush1.bf16.msra.mxu0 0
    %3256 = vmatprep.subr.bf16.mxu0 0
    %3257 = vmatpush1.bf16.msra.mxu0 0
    %3258 = vmatprep.mubr.bf16.mxu0 0
    %3259 = vmatmul.mubr.bf16.gmra.mrb[0].mxu0 %v3023
    %v3260 = vpop.f32.mrb[0].mxu0
    %v3261 = vadd.f32 0.0, %v3260
    %v3262 = vpop.f32.mrb[0].mxu0
    %v3263 = vadd.f32 0.0, %v3262
    %v3264 = vpop.f32.mrb[0].mxu0
    %v3265 = vpop.f32.mrb[0].mxu0
    %3266 = vdwg.mxu0
    %v3271 = vrot.slane %v3220, 2
    %v3272 = vrot.slane %v3222, 2
    %v3273 = vrot.slane %v3261, 2
    %v3274 = vrot.slane %v3263, 2
    %v3275 = vrot.slane %v3220, 3
    %v3276 = vrot.slane %v3222, 3
    %v3277 = vrot.slane %v3261, 3
    %v3278 = vrot.slane %v3263, 3
    %v3287 = vadd.f32 %v736, %v3271
    %v3288 = vadd.f32 %v738, %v3272
    %v3289 = vadd.f32 %v779, %v3273
    %v3290 = vadd.f32 %v781, %v3274
    %v3291 = vadd.f32 %v740, %v3275
    %v3292 = vadd.f32 %v742, %v3276
    %v3293 = vadd.f32 %v783, %v3277
    %v3294 = vadd.f32 %v785, %v3278
    %v3295 = vxor.u32 %v3287, 2147483648
    %v3296 = vxor.u32 %v3288, 2147483648
    %v3297 = vxor.u32 %v3289, 2147483648
    %v3298 = vxor.u32 %v3291, 2147483648
    %v3299 = vxor.u32 %v3292, 2147483648
    %v3300 = vxor.u32 %v3293, 2147483648
    %v3301 = vmul.f32 %v3295, 1.442695
    %v3302 = vpow.pop %v3301
    %v3303 = vmul.f32 %v3296, 1.442695
    %v3304 = vpow.pop %v3303
    %v3305 = vmul.f32 %v3297, 1.442695
    %v3306 = vpow.pop %v3305
    %v3307 = vmul.f32 %v3298, 1.442695
    %v3308 = vpow.pop %v3307
    %v3309 = vmul.f32 %v3299, 1.442695
    %v3310 = vpow.pop %v3309
    %v3311 = vmul.f32 %v3300, 1.442695
    %v3312 = vpow.pop %v3311
    %v3313 = vadd.f32 %v3302, 1.0
    %v3314 = vadd.f32 %v3304, 1.0
    %v3315 = vadd.f32 %v3306, 1.0
    %v3316 = vadd.f32 %v3308, 1.0
    %v3317 = vadd.f32 %v3310, 1.0
    %v3318 = vadd.f32 %v3312, 1.0
    %v3319 = vrcp.pop %v3313
    %v3320 = vmul.f32 1.0, %v3319
    %v3321 = vrcp.pop %v3314
    %v3322 = vmul.f32 1.0, %v3321
    %v3323 = vrcp.pop %v3315
    %v3324 = vmul.f32 1.0, %v3323
    %v3325 = vrcp.pop %v3316
    %v3326 = vmul.f32 1.0, %v3325
    %v3327 = vrcp.pop %v3317
    %v3328 = vmul.f32 1.0, %v3327
    %v3329 = vrcp.pop %v3318
    %v3330 = vmul.f32 1.0, %v3329
    %v3331 = vtanh.pop %v3290
    %v3332 = vtanh.pop %v3294
    %v3335 = vrot.slane %v2974, 7
    %v3336 = vrot.slane %v2975, 7
    %v3339 = vmul.f32 %v3322, %v3335
    %v3340 = vmul.f32 %v3328, %v3336
    %v3341 = vmul.f32 %v3320, %v3331
    %v3342 = vmul.f32 %v3326, %v3332
    %v3343 = vadd.f32 %v3339, %v3341
    %v3344 = vadd.f32 %v3340, %v3342
    %v3345 = vtanh.pop %v3343
    %v3346 = vtanh.pop %v3344
    %v3347 = vmul.f32 %v3324, %v3345
    %v3348 = vmul.f32 %v3330, %v3346
    %3349 = vst [vmem:[#allocation2] sm:$0x40] %v3347
    %3350 = vst [vmem:[#allocation2 + $0x8] sm:$0x40] %v3348
    %v3351 = vpack.c.bf16 %v3347, %v3347
    %v3352 = vpack.c.bf16 %v3348, %v3348
    %v3353 = vld [vmem:[%s7] sm:$0xff]
    %v3354 = vld [vmem:[%s7 + $0x8] sm:$0xff]
    %v3355 = vld [vmem:[%s7 + $0x10] sm:$0xff]
    %v3356 = vld [vmem:[%s7 + $0x18] sm:$0xff]
    %v3357 = vld [vmem:[%s7 + $0x20] sm:$0xff]
    %v3358 = vld [vmem:[%s7 + $0x28] sm:$0xff]
    %v3359 = vld [vmem:[%s7 + $0x30] sm:$0xff]
    %v3360 = vld [vmem:[%s7 + $0x38] sm:$0xff]
    %v3361 = vld [vmem:[%s7 + $0x40] sm:$0xff]
    %v3362 = vld [vmem:[%s7 + $0x48] sm:$0xff]
    %v3363 = vld [vmem:[%s7 + $0x50] sm:$0xff]
    %v3364 = vld [vmem:[%s7 + $0x58] sm:$0xff]
    %v3365 = vld [vmem:[%s7 + $0x60] sm:$0xff]
    %v3366 = vld [vmem:[%s7 + $0x68] sm:$0xff]
    %v3367 = vld [vmem:[%s7 + $0x70] sm:$0xff]
    %v3368 = vld [vmem:[%s7 + $0x78] sm:$0xff]
    %v3369 = vld [vmem:[%s7 + $0x80] sm:$0xff]
    %v3370 = vld [vmem:[%s7 + $0x88] sm:$0xff]
    %v3371 = vld [vmem:[%s7 + $0x90] sm:$0xff]
    %v3372 = vld [vmem:[%s7 + $0x98] sm:$0xff]
    %v3373 = vld [vmem:[%s7 + $0xa0] sm:$0xff]
    %v3374 = vld [vmem:[%s7 + $0xa8] sm:$0xff]
    %v3375 = vld [vmem:[%s7 + $0xb0] sm:$0xff]
    %v3376 = vld [vmem:[%s7 + $0xb8] sm:$0xff]
    %v3377 = vld [vmem:[%s7 + $0xc0] sm:$0xff]
    %v3378 = vld [vmem:[%s7 + $0xc8] sm:$0xff]
    %v3379 = vld [vmem:[%s7 + $0xd0] sm:$0xff]
    %v3380 = vld [vmem:[%s7 + $0xd8] sm:$0xff]
    %v3381 = vld [vmem:[%s7 + $0xe0] sm:$0xff]
    %v3382 = vld [vmem:[%s7 + $0xe8] sm:$0xff]
    %v3383 = vld [vmem:[%s7 + $0xf0] sm:$0xff]
    %v3384 = vld [vmem:[%s7 + $0xf8] sm:$0xff]
    %v3387 = vunpack.c.l.b16 %v3351
    %v3388 = vunpack.c.l.b16 %v3352
    %v3389 = vrot.slane %v3387, 6
    %v3390 = vrot.slane %v3388, 5
    %v3391 = vsel %vm1181, %v3390, %v3389
    %v3392 = vpack.c.b16 %v3391, %v3391
    %v3426 = vunpack.c.l.b16 %v3353
    %v3427 = vunpack.c.h.b16 %v3353
    %v3428 = vunpack.c.l.b16 %v3354
    %v3429 = vunpack.c.h.b16 %v3354
    %v3430 = vunpack.c.l.b16 %v3355
    %v3431 = vunpack.c.h.b16 %v3355
    %v3432 = vunpack.c.l.b16 %v3356
    %v3433 = vunpack.c.h.b16 %v3356
    %v3434 = vunpack.c.l.b16 %v3357
    %v3435 = vunpack.c.h.b16 %v3357
    %v3436 = vunpack.c.l.b16 %v3358
    %v3437 = vunpack.c.h.b16 %v3358
    %v3438 = vunpack.c.l.b16 %v3359
    %v3439 = vunpack.c.h.b16 %v3359
    %v3440 = vunpack.c.l.b16 %v3360
    %v3441 = vunpack.c.h.b16 %v3360
    %v3442 = vunpack.c.l.b16 %v3361
    %v3443 = vunpack.c.h.b16 %v3361
    %v3444 = vunpack.c.l.b16 %v3362
    %v3445 = vunpack.c.h.b16 %v3362
    %v3446 = vunpack.c.l.b16 %v3363
    %v3447 = vunpack.c.h.b16 %v3363
    %v3448 = vunpack.c.l.b16 %v3364
    %v3449 = vunpack.c.h.b16 %v3364
    %v3450 = vunpack.c.l.b16 %v3365
    %v3451 = vunpack.c.h.b16 %v3365
    %v3452 = vunpack.c.l.b16 %v3366
    %v3453 = vunpack.c.h.b16 %v3366
    %v3454 = vunpack.c.l.b16 %v3367
    %v3455 = vunpack.c.h.b16 %v3367
    %v3456 = vunpack.c.l.b16 %v3368
    %v3457 = vunpack.c.h.b16 %v3368
    %v3458 = vunpack.c.l.b16 %v3369
    %v3459 = vunpack.c.h.b16 %v3369
    %v3460 = vunpack.c.l.b16 %v3370
    %v3461 = vunpack.c.h.b16 %v3370
    %v3462 = vunpack.c.l.b16 %v3371
    %v3463 = vunpack.c.h.b16 %v3371
    %v3464 = vunpack.c.l.b16 %v3372
    %v3465 = vunpack.c.h.b16 %v3372
    %v3466 = vunpack.c.l.b16 %v3373
    %v3467 = vunpack.c.h.b16 %v3373
    %v3468 = vunpack.c.l.b16 %v3374
    %v3469 = vunpack.c.h.b16 %v3374
    %v3470 = vunpack.c.l.b16 %v3375
    %v3471 = vunpack.c.h.b16 %v3375
    %v3472 = vunpack.c.l.b16 %v3376
    %v3473 = vunpack.c.h.b16 %v3376
    %v3474 = vunpack.c.l.b16 %v3377
    %v3475 = vunpack.c.h.b16 %v3377
    %v3476 = vunpack.c.l.b16 %v3378
    %v3477 = vunpack.c.h.b16 %v3378
    %v3478 = vunpack.c.l.b16 %v3379
    %v3479 = vunpack.c.h.b16 %v3379
    %v3480 = vunpack.c.l.b16 %v3380
    %v3481 = vunpack.c.h.b16 %v3380
    %v3482 = vunpack.c.l.b16 %v3381
    %v3483 = vunpack.c.h.b16 %v3381
    %v3484 = vunpack.c.l.b16 %v3382
    %v3485 = vunpack.c.h.b16 %v3382
    %v3486 = vunpack.c.l.b16 %v3383
    %v3487 = vunpack.c.h.b16 %v3383
    %v3488 = vunpack.c.l.b16 %v3384
    %v3489 = vunpack.c.h.b16 %v3384
    %v3490 = vpack.c.b16 %v3430, %v3426
    %v3491 = vpack.c.b16 %v3431, %v3427
    %v3492 = vpack.c.b16 %v3432, %v3428
    %v3493 = vpack.c.b16 %v3433, %v3429
    %v3494 = vpack.c.b16 %v3438, %v3434
    %v3495 = vpack.c.b16 %v3439, %v3435
    %v3496 = vpack.c.b16 %v3440, %v3436
    %v3497 = vpack.c.b16 %v3441, %v3437
    %v3498 = vpack.c.b16 %v3446, %v3442
    %v3499 = vpack.c.b16 %v3447, %v3443
    %v3500 = vpack.c.b16 %v3448, %v3444
    %v3501 = vpack.c.b16 %v3449, %v3445
    %v3502 = vpack.c.b16 %v3454, %v3450
    %v3503 = vpack.c.b16 %v3455, %v3451
    %v3504 = vpack.c.b16 %v3456, %v3452
    %v3505 = vpack.c.b16 %v3457, %v3453
    %v3506 = vpack.c.b16 %v3462, %v3458
    %v3507 = vpack.c.b16 %v3463, %v3459
    %v3508 = vpack.c.b16 %v3464, %v3460
    %v3509 = vpack.c.b16 %v3465, %v3461
    %v3510 = vpack.c.b16 %v3470, %v3466
    %v3511 = vpack.c.b16 %v3471, %v3467
    %v3512 = vpack.c.b16 %v3472, %v3468
    %v3513 = vpack.c.b16 %v3473, %v3469
    %v3514 = vpack.c.b16 %v3478, %v3474
    %v3515 = vpack.c.b16 %v3479, %v3475
    %v3516 = vpack.c.b16 %v3480, %v3476
    %v3517 = vpack.c.b16 %v3481, %v3477
    %v3518 = vpack.c.b16 %v3486, %v3482
    %v3519 = vpack.c.b16 %v3487, %v3483
    %v3520 = vpack.c.b16 %v3488, %v3484
    %v3521 = vpack.c.b16 %v3489, %v3485
    %3554 = vmatprep.subr.bf16.mxu0 %v3491
    %3555 = vmatpush1.bf16.msra.mxu0 %v3490
    %3556 = vmatprep.subr.bf16.mxu0 %v3495
    %3557 = vmatpush1.bf16.msra.mxu0 %v3494
    %3558 = vmatprep.subr.bf16.mxu0 %v3499
    %3559 = vmatpush1.bf16.msra.mxu0 %v3498
    %3560 = vmatprep.subr.bf16.mxu0 %v3503
    %3561 = vmatpush1.bf16.msra.mxu0 %v3502
    %3562 = vmatprep.subr.bf16.mxu0 %v3507
    %3563 = vmatpush1.bf16.msra.mxu0 %v3506
    %3564 = vmatprep.subr.bf16.mxu0 %v3511
    %3565 = vmatpush1.bf16.msra.mxu0 %v3510
    %3566 = vmatprep.subr.bf16.mxu0 %v3515
    %3567 = vmatpush1.bf16.msra.mxu0 %v3514
    %3568 = vmatprep.subr.bf16.mxu0 %v3519
    %3569 = vmatpush1.bf16.msra.mxu0 %v3518
    %3570 = vmatprep.subr.bf16.mxu0 0
    %3571 = vmatpush1.bf16.msra.mxu0 0
    %3572 = vmatprep.subr.bf16.mxu0 0
    %3573 = vmatpush1.bf16.msra.mxu0 0
    %3574 = vmatprep.subr.bf16.mxu0 0
    %3575 = vmatpush1.bf16.msra.mxu0 0
    %3576 = vmatprep.subr.bf16.mxu0 0
    %3577 = vmatpush1.bf16.msra.mxu0 0
    %3578 = vmatprep.subr.bf16.mxu0 0
    %3579 = vmatpush1.bf16.msra.mxu0 0
    %3580 = vmatprep.subr.bf16.mxu0 0
    %3581 = vmatpush1.bf16.msra.mxu0 0
    %3582 = vmatprep.subr.bf16.mxu0 0
    %3583 = vmatpush1.bf16.msra.mxu0 0
    %3584 = vmatprep.subr.bf16.mxu0 0
    %3585 = vmatpush1.bf16.msra.mxu0 0
    %3586 = vmatprep.mubr.bf16.mxu0 0
    %3587 = vmatmul.mubr.bf16.gmra.mrb[0].mxu0 %v3392
    %v3588 = vpop.f32.mrb[0].mxu0
    %v3589 = vadd.f32 0.0, %v3588
    %v3590 = vpop.f32.mrb[0].mxu0
    %v3591 = vadd.f32 0.0, %v3590
    %v3592 = vpop.f32.mrb[0].mxu0
    %v3593 = vpop.f32.mrb[0].mxu0
    %3594 = vdwg.mxu0
    %3595 = vmatprep.subr.bf16.mxu0 %v3493
    %3596 = vmatpush1.bf16.msra.mxu0 %v3492
    %3597 = vmatprep.subr.bf16.mxu0 %v3497
    %3598 = vmatpush1.bf16.msra.mxu0 %v3496
    %3599 = vmatprep.subr.bf16.mxu0 %v3501
    %3600 = vmatpush1.bf16.msra.mxu0 %v3500
    %3601 = vmatprep.subr.bf16.mxu0 %v3505
    %3602 = vmatpush1.bf16.msra.mxu0 %v3504
    %3603 = vmatprep.subr.bf16.mxu0 %v3509
    %3604 = vmatpush1.bf16.msra.mxu0 %v3508
    %3605 = vmatprep.subr.bf16.mxu0 %v3513
    %3606 = vmatpush1.bf16.msra.mxu0 %v3512
    %3607 = vmatprep.subr.bf16.mxu0 %v3517
    %3608 = vmatpush1.bf16.msra.mxu0 %v3516
    %3609 = vmatprep.subr.bf16.mxu0 %v3521
    %3610 = vmatpush1.bf16.msra.mxu0 %v3520
    %3611 = vmatprep.subr.bf16.mxu0 0
    %3612 = vmatpush1.bf16.msra.mxu0 0
    %3613 = vmatprep.subr.bf16.mxu0 0
    %3614 = vmatpush1.bf16.msra.mxu0 0
    %3615 = vmatprep.subr.bf16.mxu0 0
    %3616 = vmatpush1.bf16.msra.mxu0 0
    %3617 = vmatprep.subr.bf16.mxu0 0
    %3618 = vmatpush1.bf16.msra.mxu0 0
    %3619 = vmatprep.subr.bf16.mxu0 0
    %3620 = vmatpush1.bf16.msra.mxu0 0
    %3621 = vmatprep.subr.bf16.mxu0 0
    %3622 = vmatpush1.bf16.msra.mxu0 0
    %3623 = vmatprep.subr.bf16.mxu0 0
    %3624 = vmatpush1.bf16.msra.mxu0 0
    %3625 = vmatprep.subr.bf16.mxu0 0
    %3626 = vmatpush1.bf16.msra.mxu0 0
    %3627 = vmatprep.mubr.bf16.mxu0 0
    %3628 = vmatmul.mubr.bf16.gmra.mrb[0].mxu0 %v3392
    %v3629 = vpop.f32.mrb[0].mxu0
    %v3630 = vadd.f32 0.0, %v3629
    %v3631 = vpop.f32.mrb[0].mxu0
    %v3632 = vadd.f32 0.0, %v3631
    %v3633 = vpop.f32.mrb[0].mxu0
    %v3634 = vpop.f32.mrb[0].mxu0
    %3635 = vdwg.mxu0
    %v3640 = vrot.slane %v3589, 1
    %v3641 = vrot.slane %v3591, 1
    %v3642 = vrot.slane %v3630, 1
    %v3643 = vrot.slane %v3632, 1
    %v3644 = vrot.slane %v3589, 2
    %v3645 = vrot.slane %v3591, 2
    %v3646 = vrot.slane %v3630, 2
    %v3647 = vrot.slane %v3632, 2
    %v3656 = vadd.f32 %v736, %v3640
    %v3657 = vadd.f32 %v738, %v3641
    %v3658 = vadd.f32 %v779, %v3642
    %v3659 = vadd.f32 %v781, %v3643
    %v3660 = vadd.f32 %v740, %v3644
    %v3661 = vadd.f32 %v742, %v3645
    %v3662 = vadd.f32 %v783, %v3646
    %v3663 = vadd.f32 %v785, %v3647
    %v3664 = vxor.u32 %v3656, 2147483648
    %v3665 = vxor.u32 %v3657, 2147483648
    %v3666 = vxor.u32 %v3658, 2147483648
    %v3667 = vxor.u32 %v3660, 2147483648
    %v3668 = vxor.u32 %v3661, 2147483648
    %v3669 = vxor.u32 %v3662, 2147483648
    %v3670 = vmul.f32 %v3664, 1.442695
    %v3671 = vpow.pop %v3670
    %v3672 = vmul.f32 %v3665, 1.442695
    %v3673 = vpow.pop %v3672
    %v3674 = vmul.f32 %v3666, 1.442695
    %v3675 = vpow.pop %v3674
    %v3676 = vmul.f32 %v3667, 1.442695
    %v3677 = vpow.pop %v3676
    %v3678 = vmul.f32 %v3668, 1.442695
    %v3679 = vpow.pop %v3678
    %v3680 = vmul.f32 %v3669, 1.442695
    %v3681 = vpow.pop %v3680
    %v3682 = vadd.f32 %v3671, 1.0
    %v3683 = vadd.f32 %v3673, 1.0
    %v3684 = vadd.f32 %v3675, 1.0
    %v3685 = vadd.f32 %v3677, 1.0
    %v3686 = vadd.f32 %v3679, 1.0
    %v3687 = vadd.f32 %v3681, 1.0
    %v3688 = vrcp.pop %v3682
    %v3689 = vmul.f32 1.0, %v3688
    %v3690 = vrcp.pop %v3683
    %v3691 = vmul.f32 1.0, %v3690
    %v3692 = vrcp.pop %v3684
    %v3693 = vmul.f32 1.0, %v3692
    %v3694 = vrcp.pop %v3685
    %v3695 = vmul.f32 1.0, %v3694
    %v3696 = vrcp.pop %v3686
    %v3697 = vmul.f32 1.0, %v3696
    %v3698 = vrcp.pop %v3687
    %v3699 = vmul.f32 1.0, %v3698
    %v3700 = vtanh.pop %v3659
    %v3701 = vtanh.pop %v3663
    %v3704 = vrot.slane %v3343, 7
    %v3705 = vrot.slane %v3344, 7
    %v3708 = vmul.f32 %v3691, %v3704
    %v3709 = vmul.f32 %v3697, %v3705
    %v3710 = vmul.f32 %v3689, %v3700
    %v3711 = vmul.f32 %v3695, %v3701
    %v3712 = vadd.f32 %v3708, %v3710
    %v3713 = vadd.f32 %v3709, %v3711
    %v3714 = vtanh.pop %v3712
    %v3715 = vtanh.pop %v3713
    %v3716 = vmul.f32 %v3693, %v3714
    %v3717 = vmul.f32 %v3699, %v3715
    %3718 = vst [vmem:[#allocation2] sm:$0x80] %v3716
    %3719 = vst [vmem:[#allocation2 + $0x8] sm:$0x80] %v3717
    %v3722 = vrot.slane %v3717, 7
    %3725 = vst [vmem:[#allocation5 - $0x7] sm:$0x80] %v3716
    %3726 = vst [vmem:[#allocation5 + $0x1] sm:$0x1] %v3722
    %v3729 = vrot.slane %v3713, 7
    %3732 = vst [vmem:[#allocation7 - $0x7] sm:$0x80] %v3712
    %3733 = vst [vmem:[#allocation7 + $0x1] sm:$0x1] %v3729
    %v3734 = vld [vmem:[#allocation2] sm:$0xff]
    %v3735 = vld [vmem:[#allocation2 + $0x8] sm:$0xff]
    %v3736 = vpack.c.bf16 %v3735, %v3734
    %v3737 = vld [vmem:[%s11] sm:$0xf]
    %v3738 = vld [vmem:[%s11 + $0x4] sm:$0xf]
    %v3739 = vld [vmem:[%s11 + $0x8] sm:$0xf]
    %v3740 = vld [vmem:[%s11 + $0xc] sm:$0xf]
    %v3741 = vld [vmem:[%s11 + $0x10] sm:$0xf]
    %v3742 = vld [vmem:[%s11 + $0x14] sm:$0xf]
    %v3743 = vld [vmem:[%s11 + $0x18] sm:$0xf]
    %v3744 = vld [vmem:[%s11 + $0x1c] sm:$0xf]
    %v3745 = vld [vmem:[%s11 + $0x20] sm:$0xf]
    %v3746 = vld [vmem:[%s11 + $0x24] sm:$0xf]
    %v3747 = vld [vmem:[%s11 + $0x28] sm:$0xf]
    %v3748 = vld [vmem:[%s11 + $0x2c] sm:$0xf]
    %v3749 = vld [vmem:[%s11 + $0x30] sm:$0xf]
    %v3750 = vld [vmem:[%s11 + $0x34] sm:$0xf]
    %v3751 = vld [vmem:[%s11 + $0x38] sm:$0xf]
    %v3752 = vld [vmem:[%s11 + $0x3c] sm:$0xf]
    %v3753 = vld [vmem:[%s12] sm:$0x1]
    %v3755 = vlaneseq
    %v3756 = vshrl.u32 %v3755, 7
    %v3757 = vsub.s32 0, %v3756
    %v3758 = vrot.slane %v3753, %v3757
    %v3776 = vunpack.c.l.b16 %v3737
    %v3777 = vunpack.c.l.b16 %v3738
    %v3778 = vunpack.c.l.b16 %v3739
    %v3779 = vunpack.c.l.b16 %v3740
    %v3780 = vunpack.c.l.b16 %v3741
    %v3781 = vunpack.c.l.b16 %v3742
    %v3782 = vunpack.c.l.b16 %v3743
    %v3783 = vunpack.c.l.b16 %v3744
    %v3784 = vunpack.c.l.b16 %v3745
    %v3785 = vunpack.c.l.b16 %v3746
    %v3786 = vunpack.c.l.b16 %v3747
    %v3787 = vunpack.c.l.b16 %v3748
    %v3788 = vunpack.c.l.b16 %v3749
    %v3789 = vunpack.c.l.b16 %v3750
    %v3790 = vunpack.c.l.b16 %v3751
    %v3791 = vunpack.c.l.b16 %v3752
    %v3792 = vpack.c.b16 %v3777, %v3776
    %v3793 = vpack.c.b16 %v3779, %v3778
    %v3794 = vpack.c.b16 %v3781, %v3780
    %v3795 = vpack.c.b16 %v3783, %v3782
    %v3796 = vpack.c.b16 %v3785, %v3784
    %v3797 = vpack.c.b16 %v3787, %v3786
    %v3798 = vpack.c.b16 %v3789, %v3788
    %v3799 = vpack.c.b16 %v3791, %v3790
    %3808 = vmatprep.subr.bf16.mxu0 0
    %3809 = vmatpush1.bf16.msra.mxu0 %v3792
    %3810 = vmatprep.subr.bf16.mxu0 0
    %3811 = vmatpush1.bf16.msra.mxu0 %v3793
    %3812 = vmatprep.subr.bf16.mxu0 0
    %3813 = vmatpush1.bf16.msra.mxu0 %v3794
    %3814 = vmatprep.subr.bf16.mxu0 0
    %3815 = vmatpush1.bf16.msra.mxu0 %v3795
    %3816 = vmatprep.subr.bf16.mxu0 0
    %3817 = vmatpush1.bf16.msra.mxu0 %v3796
    %3818 = vmatprep.subr.bf16.mxu0 0
    %3819 = vmatpush1.bf16.msra.mxu0 %v3797
    %3820 = vmatprep.subr.bf16.mxu0 0
    %3821 = vmatpush1.bf16.msra.mxu0 %v3798
    %3822 = vmatprep.subr.bf16.mxu0 0
    %3823 = vmatpush1.bf16.msra.mxu0 %v3799
    %3824 = vmatprep.subr.bf16.mxu0 0
    %3825 = vmatpush1.bf16.msra.mxu0 0
    %3826 = vmatprep.subr.bf16.mxu0 0
    %3827 = vmatpush1.bf16.msra.mxu0 0
    %3828 = vmatprep.subr.bf16.mxu0 0
    %3829 = vmatpush1.bf16.msra.mxu0 0
    %3830 = vmatprep.subr.bf16.mxu0 0
    %3831 = vmatpush1.bf16.msra.mxu0 0
    %3832 = vmatprep.subr.bf16.mxu0 0
    %3833 = vmatpush1.bf16.msra.mxu0 0
    %3834 = vmatprep.subr.bf16.mxu0 0
    %3835 = vmatpush1.bf16.msra.mxu0 0
    %3836 = vmatprep.subr.bf16.mxu0 0
    %3837 = vmatpush1.bf16.msra.mxu0 0
    %3838 = vmatprep.subr.bf16.mxu0 0
    %3839 = vmatpush1.bf16.msra.mxu0 0
    %3840 = vmatprep.mubr.bf16.mxu0 0
    %3841 = vmatmul.mubr.bf16.gmra.mrb[0].mxu0 %v3736
    %v3842 = vpop.f32.mrb[0].mxu0
    %v3843 = vadd.f32 %v3758, %v3842
    %v3844 = vpop.f32.mrb[0].mxu0
    %v3845 = vpop.f32.mrb[0].mxu0
    %v3846 = vadd.f32 %v3758, %v3845
    %v3847 = vpop.f32.mrb[0].mxu0
    %3848 = vdwg.mxu0
    %v3849 = vmul.f32 %v3843, 0.5
    %v3850 = vmul.f32 %v3846, 0.5
    %v3851 = vmul.f32 %v3843, 0.70710677
    %v3852 = vmul.f32 %v3846, 0.70710677
    %v3853 = verf.f32.pop %v3851
    %v3854 = verf.f32.pop %v3852
    %v3855 = vadd.f32 %v3853, 1.0
    %v3856 = vadd.f32 %v3854, 1.0
    %v3857 = vmul.f32 %v3849, %v3855
    %v3858 = vmul.f32 %v3850, %v3856
    %v3859 = vpack.c.bf16 %v3858, %v3857
    %v3860 = vld [vmem:[%s13] sm:$0xff]
    %v3861 = vld [vmem:[%s13 + $0x8] sm:$0xff]
    %v3862 = vld [vmem:[%s13 + $0x10] sm:$0xff]
    %v3863 = vld [vmem:[%s13 + $0x18] sm:$0xff]
    %v3864 = vld [vmem:[%s13 + $0x20] sm:$0xff]
    %v3865 = vld [vmem:[%s13 + $0x28] sm:$0xff]
    %v3866 = vld [vmem:[%s13 + $0x30] sm:$0xff]
    %v3867 = vld [vmem:[%s13 + $0x38] sm:$0xff]
    %v3868 = vld [vmem:[%s13 + $0x40] sm:$0xff]
    %v3869 = vld [vmem:[%s13 + $0x48] sm:$0xff]
    %v3870 = vld [vmem:[%s13 + $0x50] sm:$0xff]
    %v3871 = vld [vmem:[%s13 + $0x58] sm:$0xff]
    %v3872 = vld [vmem:[%s13 + $0x60] sm:$0xff]
    %v3873 = vld [vmem:[%s13 + $0x68] sm:$0xff]
    %v3874 = vld [vmem:[%s13 + $0x70] sm:$0xff]
    %v3875 = vld [vmem:[%s13 + $0x78] sm:$0xff]
    %v3876 = vld [vmem:[%s14] sm:$0x3]
    %v3878 = vlaneseq
    %v3879 = vshrl.u32 %v3878, 7
    %v3880 = vsub.s32 0, %v3879
    %v3881 = vrot.slane %v3876, %v3880
    %v3882 = vlaneseq
    %v3883 = vshrl.u32 %v3882, 7
    %v3884 = vsub.s32 1, %v3883
    %v3885 = vrot.slane %v3876, %v3884
    %v3904 = vunpack.c.l.b16 %v3860
    %v3905 = vunpack.c.h.b16 %v3860
    %v3906 = vunpack.c.l.b16 %v3861
    %v3907 = vunpack.c.h.b16 %v3861
    %v3908 = vunpack.c.l.b16 %v3862
    %v3909 = vunpack.c.h.b16 %v3862
    %v3910 = vunpack.c.l.b16 %v3863
    %v3911 = vunpack.c.h.b16 %v3863
    %v3912 = vunpack.c.l.b16 %v3864
    %v3913 = vunpack.c.h.b16 %v3864
    %v3914 = vunpack.c.l.b16 %v3865
    %v3915 = vunpack.c.h.b16 %v3865
    %v3916 = vunpack.c.l.b16 %v3866
    %v3917 = vunpack.c.h.b16 %v3866
    %v3918 = vunpack.c.l.b16 %v3867
    %v3919 = vunpack.c.h.b16 %v3867
    %v3920 = vunpack.c.l.b16 %v3868
    %v3921 = vunpack.c.h.b16 %v3868
    %v3922 = vunpack.c.l.b16 %v3869
    %v3923 = vunpack.c.h.b16 %v3869
    %v3924 = vunpack.c.l.b16 %v3870
    %v3925 = vunpack.c.h.b16 %v3870
    %v3926 = vunpack.c.l.b16 %v3871
    %v3927 = vunpack.c.h.b16 %v3871
    %v3928 = vunpack.c.l.b16 %v3872
    %v3929 = vunpack.c.h.b16 %v3872
    %v3930 = vunpack.c.l.b16 %v3873
    %v3931 = vunpack.c.h.b16 %v3873
    %v3932 = vunpack.c.l.b16 %v3874
    %v3933 = vunpack.c.h.b16 %v3874
    %v3934 = vunpack.c.l.b16 %v3875
    %v3935 = vunpack.c.h.b16 %v3875
    %v3936 = vpack.c.b16 %v3906, %v3904
    %v3937 = vpack.c.b16 %v3907, %v3905
    %v3938 = vpack.c.b16 %v3910, %v3908
    %v3939 = vpack.c.b16 %v3911, %v3909
    %v3940 = vpack.c.b16 %v3914, %v3912
    %v3941 = vpack.c.b16 %v3915, %v3913
    %v3942 = vpack.c.b16 %v3918, %v3916
    %v3943 = vpack.c.b16 %v3919, %v3917
    %v3944 = vpack.c.b16 %v3922, %v3920
    %v3945 = vpack.c.b16 %v3923, %v3921
    %v3946 = vpack.c.b16 %v3926, %v3924
    %v3947 = vpack.c.b16 %v3927, %v3925
    %v3948 = vpack.c.b16 %v3930, %v3928
    %v3949 = vpack.c.b16 %v3931, %v3929
    %v3950 = vpack.c.b16 %v3934, %v3932
    %v3951 = vpack.c.b16 %v3935, %v3933
    %3968 = vmatprep.subr.bf16.mxu0 %v3937
    %3969 = vmatpush1.bf16.msra.mxu0 %v3936
    %3970 = vmatprep.subr.bf16.mxu0 %v3939
    %3971 = vmatpush1.bf16.msra.mxu0 %v3938
    %3972 = vmatprep.subr.bf16.mxu0 %v3941
    %3973 = vmatpush1.bf16.msra.mxu0 %v3940
    %3974 = vmatprep.subr.bf16.mxu0 %v3943
    %3975 = vmatpush1.bf16.msra.mxu0 %v3942
    %3976 = vmatprep.subr.bf16.mxu0 %v3945
    %3977 = vmatpush1.bf16.msra.mxu0 %v3944
    %3978 = vmatprep.subr.bf16.mxu0 %v3947
    %3979 = vmatpush1.bf16.msra.mxu0 %v3946
    %3980 = vmatprep.subr.bf16.mxu0 %v3949
    %3981 = vmatpush1.bf16.msra.mxu0 %v3948
    %3982 = vmatprep.subr.bf16.mxu0 %v3951
    %3983 = vmatpush1.bf16.msra.mxu0 %v3950
    %3984 = vmatprep.subr.bf16.mxu0 0
    %3985 = vmatpush1.bf16.msra.mxu0 0
    %3986 = vmatprep.subr.bf16.mxu0 0
    %3987 = vmatpush1.bf16.msra.mxu0 0
    %3988 = vmatprep.subr.bf16.mxu0 0
    %3989 = vmatpush1.bf16.msra.mxu0 0
    %3990 = vmatprep.subr.bf16.mxu0 0
    %3991 = vmatpush1.bf16.msra.mxu0 0
    %3992 = vmatprep.subr.bf16.mxu0 0
    %3993 = vmatpush1.bf16.msra.mxu0 0
    %3994 = vmatprep.subr.bf16.mxu0 0
    %3995 = vmatpush1.bf16.msra.mxu0 0
    %3996 = vmatprep.subr.bf16.mxu0 0
    %3997 = vmatpush1.bf16.msra.mxu0 0
    %3998 = vmatprep.subr.bf16.mxu0 0
    %3999 = vmatpush1.bf16.msra.mxu0 0
    %4000 = vmatprep.mubr.bf16.mxu0 0
    %4001 = vmatmul.mubr.bf16.gmra.mrb[0].mxu0 %v3859
    %v4002 = vpop.f32.mrb[0].mxu0
    %v4003 = vadd.f32 %v3881, %v4002
    %v4004 = vpop.f32.mrb[0].mxu0
    %v4005 = vadd.f32 %v3885, %v4004
    %v4006 = vpop.f32.mrb[0].mxu0
    %v4007 = vadd.f32 %v3881, %v4006
    %v4008 = vpop.f32.mrb[0].mxu0
    %v4009 = vadd.f32 %v3885, %v4008
    %4010 = vdwg.mxu0
    %4011 = vst [vmem:[#allocation3] sm:$0xff] %v4003
    %4012 = vst [vmem:[#allocation3 + $0x8] sm:$0xff] %v4005
    %4013 = vst [vmem:[#allocation3 + $0x10] sm:$0xff] %v4007
    %4014 = vst [vmem:[#allocation3 + $0x18] sm:$0xff] %v4009
    // Predicated region
    $region62: #{lstm_model_beefy_forward.1} parent=1 // pred_check
      _
    $region63: #{lstm_model_beefy_forward.1} parent=1 // pred_check_branch
      %4016 = sbr.rel (0) target = $region65
    $region64: #{lstm_model_beefy_forward.1} parent=1 // pred_region
      %s4018 = ssub.s32 512, 512
      %4019 = vsyncadd [#allocation4], %s4018
      %s4020 = sshll.u32 [#allocation3], 4
      %s4021 = int_to_ptr.vmem [resolvable:$true] %s4020
      %4026 = dma.vmem_to_hbm [thread:$0]  %s4021, 512, %s15, [#allocation4], 256, 256, 16
    $region65: #{lstm_model_beefy_forward.1} parent=1 // pred_fallthru
      _
    // Predicated region
    $region66: #{lstm_model_beefy_forward.1} parent=1 // pred_check
      _
    $region67: #{lstm_model_beefy_forward.1} parent=1 // pred_check_branch
      %4028 = sbr.rel (0) target = $region69
    $region68: #{lstm_model_beefy_forward.1} parent=1 // pred_region
      %s4030 = ssub.s32 32, 32
      %4031 = vsyncadd [#allocation6], %s4030
      %s4033 = sshll.u32 [#allocation5], 4
      %s4034 = int_to_ptr.vmem [resolvable:$true] %s4033
      %4036 = dma.vmem_to_hbm [thread:$0]  %s4034, 32, %s16, [#allocation6]
    $region69: #{lstm_model_beefy_forward.1} parent=1 // pred_fallthru
      _
    // Predicated region
    $region70: #{lstm_model_beefy_forward.1} parent=1 // pred_check
      _
    $region71: #{lstm_model_beefy_forward.1} parent=1 // pred_check_branch
      %4038 = sbr.rel (0) target = $region73
    $region72: #{lstm_model_beefy_forward.1} parent=1 // pred_region
      %s4040 = ssub.s32 32, 32
      %4041 = vsyncadd [#allocation6], %s4040
      %s4043 = sshll.u32 [#allocation7], 4
      %s4044 = int_to_ptr.vmem [resolvable:$true] %s4043
      %4046 = dma.vmem_to_hbm [thread:$0]  %s4044, 32, %s17, [#allocation6]
    $region73: #{lstm_model_beefy_forward.1} parent=1 // pred_fallthru
      _
    // Predicated region
    $region74: #{lstm_model_beefy_forward.1} parent=1 // pred_check
      _
    $region75: #{lstm_model_beefy_forward.1} parent=1 // pred_check_branch
      %4048 = sbr.rel (0) target = $region77
    $region76: #{lstm_model_beefy_forward.1} parent=1 // pred_region
      %4049 = dma.done [#allocation4], 512
    $region77: #{lstm_model_beefy_forward.1} parent=1 // pred_fallthru
      _
    // Predicated region
    $region78: #{lstm_model_beefy_forward.1} parent=1 // pred_check
      _
    $region79: #{lstm_model_beefy_forward.1} parent=1 // pred_check_branch
      %4051 = sbr.rel (0) target = $region81
    $region80: #{lstm_model_beefy_forward.1} parent=1 // pred_region
      %4052 = dma.done [#allocation6], 32
    $region81: #{lstm_model_beefy_forward.1} parent=1 // pred_fallthru
      _
    // Predicated region
    $region82: #{lstm_model_beefy_forward.1} parent=1 // pred_check
      _
    $region83: #{lstm_model_beefy_forward.1} parent=1 // pred_check_branch
      %4054 = sbr.rel (0) target = $region85
    $region84: #{lstm_model_beefy_forward.1} parent=1 // pred_region
      %4055 = dma.done [#allocation6], 32
    $region85: #{lstm_model_beefy_forward.1} parent=1 // pred_fallthru
      _
    %4056 = vsyncpa [#allocation4], 1
    %4057 = vsyncpa [#allocation6], 1

</llo_original>
